<compile_context>
chip_gen: v7x
topology: tpu7x:2x2x1
jax: 0.10.0
libtpu: 0.0.40
codegen_flags: <defaults>
</compile_context>

<pallas_src>
import functools

import jax
import jax.numpy as jnp
from jax import lax
from jax.experimental import pallas as pl
from jax.experimental.pallas import tpu as pltpu


def _make_kernel(H, W, bh, We):
    """Kernel closure over static geometry. One grid step = (batch n, band b)."""
    Me = bh + 2  # extended band height (1-row halo each side for conv2)

    def kernel(xb_ref, xi_ref, w1_ref, b1_ref, w2_ref, b2_ref, ws_ref, bs_ref,
               out_ref):
        Cin = xb_ref.shape[-1]
        Cmid = w1_ref.shape[-1]
        Cout = w2_ref.shape[-1]
        b0 = pl.program_id(1) * bh          # first image row owned by this band

        xb = xb_ref[...]                    # (bh+4, We+2, Cin), zero-padded input band

        # ---- conv1 (3x3, BN1 scale folded into weights) over extended band ----
        # mid_ext(r, c) corresponds to image row (b0 - 1 + r), image col (c - 1).
        acc1 = jnp.zeros((Me * We, Cmid), jnp.float32)
        for kh in range(3):
            for kw in range(3):
                patch = xb[kh:kh + Me, kw:kw + We, :].reshape(Me * We, Cin)
                acc1 = acc1 + jnp.dot(patch, w1_ref[kh, kw],
                                      preferred_element_type=jnp.float32)
        mid = jnp.maximum(acc1 + b1_ref[...], 0.0).reshape(Me, We, Cmid)

        # Zero the halo positions that fall outside the image: they play the
        # role of conv2's zero padding (and of rows owned by other bands).
        row_id = lax.broadcasted_iota(jnp.int32, (Me, We, Cmid), 0) + (b0 - 1)
        col_id = lax.broadcasted_iota(jnp.int32, (Me, We, Cmid), 1) - 1
        valid = (row_id >= 0) & (row_id < H) & (col_id >= 0) & (col_id < W)
        mid = jnp.where(valid, mid, 0.0)

        # ---- conv2 (3x3, BN2 scale folded into weights) ----
        acc2 = jnp.zeros((bh * W, Cout), jnp.float32)
        for kh in range(3):
            for kw in range(3):
                patch = mid[kh:kh + bh, kw:kw + W, :].reshape(bh * W, Cmid)
                acc2 = acc2 + jnp.dot(patch, w2_ref[kh, kw],
                                      preferred_element_type=jnp.float32)
        res = acc2 + b2_ref[...]

        # ---- projection shortcut: 1x1 conv (BN scale folded) + bias ----
        xi = xi_ref[...].reshape(bh * W, Cin)        # aligned, unpadded band
        short = jnp.dot(xi, ws_ref[...],
                        preferred_element_type=jnp.float32) + bs_ref[...]

        # ---- add + final ReLU ----
        out_ref[...] = jnp.maximum(res + short, 0.0).reshape(bh, W, Cout)

    return kernel


def basic_block_pallas(x_nchw, params, band_h=8):
    """x_nchw: (N, Cin, H, W) float32.  Returns (N, Cout, H, W) float32."""
    w1, s1, b1, w2, s2, b2, ws, ss, bs = params
    N, Cin, H, W = x_nchw.shape
    Cmid = w1.shape[-1]
    Cout = w2.shape[-1]

    # Fold BN scales into the conv weights (exact: conv is linear). Tiny
    # weight tensors, done once in the wrapper -> not the "pre-scale inputs"
    # anti-pattern.
    w1f = (w1 * s1.reshape(1, 1, 1, Cmid)).astype(jnp.float32)
    w2f = (w2 * s2.reshape(1, 1, 1, Cout)).astype(jnp.float32)
    wsf = (ws * ss.reshape(1, Cout)).astype(jnp.float32)
    b1r = jnp.asarray(b1, jnp.float32).reshape(1, Cmid)
    b2r = jnp.asarray(b2, jnp.float32).reshape(1, Cout)
    bsr = jnp.asarray(bs, jnp.float32).reshape(1, Cout)

    # Band geometry.
    bh = band_h if H % band_h == 0 else H
    NB = H // bh
    We = ((W + 2 + 7) // 8) * 8          # extended width, multiple of 8
    PR = We - W                          # right column pad (>= 2)
    Wp = W + 2 + PR                      # padded width seen by the kernel

    x_nhwc = jnp.transpose(x_nchw, (0, 2, 3, 1))
    # 2-row / 2..PR-col zero halo so every band can compute its conv2 halo.
    xp = jnp.pad(x_nhwc, ((0, 0), (2, 2), (2, PR), (0, 0)))
    # Overlapping H-bands with a 2-row halo on each side (built once, in XLA).
    x_bands = jnp.stack(
        [xp[:, b * bh: b * bh + bh + 4, :, :] for b in range(NB)], axis=1)
    # x_bands: (N, NB, bh+4, Wp, Cin)

    kernel = _make_kernel(H, W, bh, We)
    const4 = lambda n, b: (0, 0, 0, 0)
    const2 = lambda n, b: (0, 0)

    out = pl.pallas_call(
        kernel,
        out_shape=jax.ShapeDtypeStruct((N, NB, bh, W, Cout), jnp.float32),
        grid=(N, NB),
        in_specs=[
            # padded input band (row halo included)
            pl.BlockSpec((None, None, bh + 4, Wp, Cin),
                         lambda n, b: (n, b, 0, 0, 0)),
            # unpadded input band for the 1x1 shortcut (aligned view)
            pl.BlockSpec((None, bh, W, Cin), lambda n, b: (n, b, 0, 0)),
            # weights / biases: constant index maps -> stay VMEM-resident
            pl.BlockSpec((3, 3, Cin, Cmid), const4),
            pl.BlockSpec((1, Cmid), const2),
            pl.BlockSpec((3, 3, Cmid, Cout), const4),
            pl.BlockSpec((1, Cout), const2),
            pl.BlockSpec((Cin, Cout), const2),
            pl.BlockSpec((1, Cout), const2),
        ],
        out_specs=pl.BlockSpec((None, None, bh, W, Cout),
                               lambda n, b: (n, b, 0, 0, 0)),
        compiler_params=pltpu.CompilerParams(
            dimension_semantics=("parallel", "parallel"),
            vmem_limit_bytes=32 * 1024 * 1024,
        ),
    )(x_bands, x_nhwc, w1f, b1r, w2f, b2r, wsf, bsr)

    out = out.reshape(N, H, W, Cout)
    return jnp.transpose(out, (0, 3, 1, 2))


def _fold_bn(gamma, beta, mean, var, eps=1e-5):
    scale = gamma / jnp.sqrt(var + eps)
    bias = beta - mean * scale
    return scale.reshape(1, -1), bias.reshape(1, -1)


def make_params(key, cin, cout):
    ks = jax.random.split(key, 16)
    # conv weights in HWIO layout (3,3,Cin,Cout); 1x1 shortcut as (Cin,Cout)
    w1 = jax.random.normal(ks[0], (3, 3, cin, cout), jnp.float32) * 0.1
    w2 = jax.random.normal(ks[1], (3, 3, cout, cout), jnp.float32) * 0.1
    ws = jax.random.normal(ks[2], (cin, cout), jnp.float32) * 0.1

    def bn(i):
        g = jax.random.uniform(ks[3 + 4 * i], (cout,), minval=0.5, maxval=1.5)
        b = jax.random.normal(ks[4 + 4 * i], (cout,)) * 0.1
        m = jax.random.normal(ks[5 + 4 * i], (cout,)) * 0.1
        v = jax.random.uniform(ks[6 + 4 * i], (cout,), minval=0.5, maxval=1.5)
        return _fold_bn(g, b, m, v)

    s1, b1 = bn(0)
    s2, b2 = bn(1)
    ss, bs = bn(2)
    return (w1, s1, b1, w2, s2, b2, ws, ss, bs)


def reference_forward(x_nchw, params):
    """Pure-JAX reference (NHWC / HWIO convs) for correctness checking."""
    w1, s1, b1, w2, s2, b2, ws, ss, bs = params
    x = jnp.transpose(x_nchw, (0, 2, 3, 1))
    dn = ('NHWC', 'HWIO', 'NHWC')
    y = lax.conv_general_dilated(x, w1, (1, 1), 'SAME', dimension_numbers=dn)
    y = jnp.maximum(y * s1.reshape(1, 1, 1, -1) + b1.reshape(1, 1, 1, -1), 0.0)
    y = lax.conv_general_dilated(y, w2, (1, 1), 'SAME', dimension_numbers=dn)
    y = y * s2.reshape(1, 1, 1, -1) + b2.reshape(1, 1, 1, -1)
    sc = lax.conv_general_dilated(x, ws.reshape(1, 1, *ws.shape), (1, 1), 'SAME',
                                  dimension_numbers=dn)
    sc = sc * ss.reshape(1, 1, 1, -1) + bs.reshape(1, 1, 1, -1)
    out = jnp.maximum(y + sc, 0.0)
    return jnp.transpose(out, (0, 3, 1, 2))


if __name__ == "__main__":
    key = jax.random.PRNGKey(0)
    kx, kp = jax.random.split(key)

    N, CIN, COUT, H, W = 2, 4, 8, 16, 16   # stride=1, Cin!=Cout -> proj shortcut
    x = jax.random.normal(kx, (N, CIN, H, W), jnp.float32)
    params = make_params(kp, CIN, COUT)

    out = basic_block_pallas(x, params)
    out = jax.block_until_ready(out)

    ref = jax.block_until_ready(reference_forward(x, params))
    assert out.shape == (N, COUT, H, W)
    assert jnp.allclose(out, ref, atol=1e-4, rtol=1e-4), "mismatch vs reference"

    print("KERNEL_OK")
</pallas_src>

<mosaic_0001>
module attributes {stable_mosaic.version = 11 : i64} {
  func.func @kernel(%arg0: i32, %arg1: i32, %arg2: memref<1x1x12x26x4xf32, #tpu.memory_space<vmem>>, %arg3: memref<1x8x16x4xf32, #tpu.memory_space<vmem>>, %arg4: memref<3x3x4x8xf32, #tpu.memory_space<vmem>>, %arg5: memref<1x8xf32, #tpu.memory_space<vmem>>, %arg6: memref<3x3x8x8xf32, #tpu.memory_space<vmem>>, %arg7: memref<1x8xf32, #tpu.memory_space<vmem>>, %arg8: memref<4x8xf32, #tpu.memory_space<vmem>>, %arg9: memref<1x8xf32, #tpu.memory_space<vmem>>, %arg10: memref<1x1x8x16x8xf32, #tpu.memory_space<vmem>>) attributes {dimension_semantics = [#tpu.dimension_semantics<parallel>, #tpu.dimension_semantics<parallel>], iteration_bounds = array<i64: 2, 2>, scalar_prefetch = 0 : i64, scratch_operands = 0 : i64, tpu.core_type = #tpu.core_type<tc>, window_params = [{transform_indices = @transform_0, window_bounds = array<i64: 1, 1, 12, 26, 4>}, {transform_indices = @transform_1, window_bounds = array<i64: 1, 8, 16, 4>}, {pipeline_mode = #tpu.pipeline_mode<synchronous>, transform_indices = @transform_2, window_bounds = array<i64: 3, 3, 4, 8>}, {pipeline_mode = #tpu.pipeline_mode<synchronous>, transform_indices = @transform_3, window_bounds = array<i64: 1, 8>}, {pipeline_mode = #tpu.pipeline_mode<synchronous>, transform_indices = @transform_4, window_bounds = array<i64: 3, 3, 8, 8>}, {pipeline_mode = #tpu.pipeline_mode<synchronous>, transform_indices = @transform_5, window_bounds = array<i64: 1, 8>}, {pipeline_mode = #tpu.pipeline_mode<synchronous>, transform_indices = @transform_6, window_bounds = array<i64: 4, 8>}, {pipeline_mode = #tpu.pipeline_mode<synchronous>, transform_indices = @transform_7, window_bounds = array<i64: 1, 8>}, {transform_indices = @transform_8, window_bounds = array<i64: 1, 1, 8, 16, 8>}]} {
    %c8_i32 = arith.constant 8 : i32
    %0 = arith.muli %arg1, %c8_i32 : i32
    %c0 = arith.constant 0 : index
    %c0_0 = arith.constant 0 : index
    %c0_1 = arith.constant 0 : index
    %c0_2 = arith.constant 0 : index
    %c0_3 = arith.constant 0 : index
    %1 = vector.load %arg2[%c0, %c0_0, %c0_1, %c0_2, %c0_3] : memref<1x1x12x26x4xf32, #tpu.memory_space<vmem>>, vector<1x1x12x26x4xf32>
    %2 = vector.shape_cast %1 : vector<1x1x12x26x4xf32> to vector<12x26x4xf32>
    %cst = arith.constant 0.000000e+00 : f32
    %3 = vector.broadcast %cst : f32 to vector<240x8xf32>
    %4 = vector.extract_strided_slice %2 {offsets = [0, 0, 0], sizes = [10, 24, 4], strides = [1, 1, 1]} : vector<12x26x4xf32> to vector<10x24x4xf32>
    %5 = vector.shape_cast %4 : vector<10x24x4xf32> to vector<240x4xf32>
    %c0_4 = arith.constant 0 : index
    %c0_5 = arith.constant 0 : index
    %c0_6 = arith.constant 0 : index
    %c0_7 = arith.constant 0 : index
    %6 = vector.load %arg4[%c0_4, %c0_5, %c0_6, %c0_7] : memref<3x3x4x8xf32, #tpu.memory_space<vmem>>, vector<1x1x4x8xf32>
    %7 = vector.shape_cast %6 : vector<1x1x4x8xf32> to vector<4x8xf32>
    %cst_8 = arith.constant dense<0.000000e+00> : vector<240x8xf32>
    %8 = tpu.matmul %5, %7, %cst_8 {dimension_numbers = #tpu.dot_dimension_numbers<[1], [0], [0], [1], [0, 0, 1, 1], [], []>} : vector<240x4xf32>, vector<4x8xf32>, vector<240x8xf32> -> vector<240x8xf32>
    %9 = arith.addf %3, %8 : vector<240x8xf32>
    %10 = vector.extract_strided_slice %2 {offsets = [0, 1, 0], sizes = [10, 24, 4], strides = [1, 1, 1]} : vector<12x26x4xf32> to vector<10x24x4xf32>
    %11 = vector.shape_cast %10 : vector<10x24x4xf32> to vector<240x4xf32>
    %c0_9 = arith.constant 0 : index
    %c1 = arith.constant 1 : index
    %c0_10 = arith.constant 0 : index
    %c0_11 = arith.constant 0 : index
    %12 = vector.load %arg4[%c0_9, %c1, %c0_10, %c0_11] : memref<3x3x4x8xf32, #tpu.memory_space<vmem>>, vector<1x1x4x8xf32>
    %13 = vector.shape_cast %12 : vector<1x1x4x8xf32> to vector<4x8xf32>
    %cst_12 = arith.constant dense<0.000000e+00> : vector<240x8xf32>
    %14 = tpu.matmul %11, %13, %cst_12 {dimension_numbers = #tpu.dot_dimension_numbers<[1], [0], [0], [1], [0, 0, 1, 1], [], []>} : vector<240x4xf32>, vector<4x8xf32>, vector<240x8xf32> -> vector<240x8xf32>
    %15 = arith.addf %9, %14 : vector<240x8xf32>
    %16 = vector.extract_strided_slice %2 {offsets = [0, 2, 0], sizes = [10, 24, 4], strides = [1, 1, 1]} : vector<12x26x4xf32> to vector<10x24x4xf32>
    %17 = vector.shape_cast %16 : vector<10x24x4xf32> to vector<240x4xf32>
    %c0_13 = arith.constant 0 : index
    %c2 = arith.constant 2 : index
    %c0_14 = arith.constant 0 : index
    %c0_15 = arith.constant 0 : index
    %18 = vector.load %arg4[%c0_13, %c2, %c0_14, %c0_15] : memref<3x3x4x8xf32, #tpu.memory_space<vmem>>, vector<1x1x4x8xf32>
    %19 = vector.shape_cast %18 : vector<1x1x4x8xf32> to vector<4x8xf32>
    %cst_16 = arith.constant dense<0.000000e+00> : vector<240x8xf32>
    %20 = tpu.matmul %17, %19, %cst_16 {dimension_numbers = #tpu.dot_dimension_numbers<[1], [0], [0], [1], [0, 0, 1, 1], [], []>} : vector<240x4xf32>, vector<4x8xf32>, vector<240x8xf32> -> vector<240x8xf32>
    %21 = arith.addf %15, %20 : vector<240x8xf32>
    %22 = vector.extract_strided_slice %2 {offsets = [1, 0, 0], sizes = [10, 24, 4], strides = [1, 1, 1]} : vector<12x26x4xf32> to vector<10x24x4xf32>
    %23 = vector.shape_cast %22 : vector<10x24x4xf32> to vector<240x4xf32>
    %c1_17 = arith.constant 1 : index
    %c0_18 = arith.constant 0 : index
    %c0_19 = arith.constant 0 : index
    %c0_20 = arith.constant 0 : index
    %24 = vector.load %arg4[%c1_17, %c0_18, %c0_19, %c0_20] : memref<3x3x4x8xf32, #tpu.memory_space<vmem>>, vector<1x1x4x8xf32>
    %25 = vector.shape_cast %24 : vector<1x1x4x8xf32> to vector<4x8xf32>
    %cst_21 = arith.constant dense<0.000000e+00> : vector<240x8xf32>
    %26 = tpu.matmul %23, %25, %cst_21 {dimension_numbers = #tpu.dot_dimension_numbers<[1], [0], [0], [1], [0, 0, 1, 1], [], []>} : vector<240x4xf32>, vector<4x8xf32>, vector<240x8xf32> -> vector<240x8xf32>
    %27 = arith.addf %21, %26 : vector<240x8xf32>
    %28 = vector.extract_strided_slice %2 {offsets = [1, 1, 0], sizes = [10, 24, 4], strides = [1, 1, 1]} : vector<12x26x4xf32> to vector<10x24x4xf32>
    %29 = vector.shape_cast %28 : vector<10x24x4xf32> to vector<240x4xf32>
    %c1_22 = arith.constant 1 : index
    %c1_23 = arith.constant 1 : index
    %c0_24 = arith.constant 0 : index
    %c0_25 = arith.constant 0 : index
    %30 = vector.load %arg4[%c1_22, %c1_23, %c0_24, %c0_25] : memref<3x3x4x8xf32, #tpu.memory_space<vmem>>, vector<1x1x4x8xf32>
    %31 = vector.shape_cast %30 : vector<1x1x4x8xf32> to vector<4x8xf32>
    %cst_26 = arith.constant dense<0.000000e+00> : vector<240x8xf32>
    %32 = tpu.matmul %29, %31, %cst_26 {dimension_numbers = #tpu.dot_dimension_numbers<[1], [0], [0], [1], [0, 0, 1, 1], [], []>} : vector<240x4xf32>, vector<4x8xf32>, vector<240x8xf32> -> vector<240x8xf32>
    %33 = arith.addf %27, %32 : vector<240x8xf32>
    %34 = vector.extract_strided_slice %2 {offsets = [1, 2, 0], sizes = [10, 24, 4], strides = [1, 1, 1]} : vector<12x26x4xf32> to vector<10x24x4xf32>
    %35 = vector.shape_cast %34 : vector<10x24x4xf32> to vector<240x4xf32>
    %c1_27 = arith.constant 1 : index
    %c2_28 = arith.constant 2 : index
    %c0_29 = arith.constant 0 : index
    %c0_30 = arith.constant 0 : index
    %36 = vector.load %arg4[%c1_27, %c2_28, %c0_29, %c0_30] : memref<3x3x4x8xf32, #tpu.memory_space<vmem>>, vector<1x1x4x8xf32>
    %37 = vector.shape_cast %36 : vector<1x1x4x8xf32> to vector<4x8xf32>
    %cst_31 = arith.constant dense<0.000000e+00> : vector<240x8xf32>
    %38 = tpu.matmul %35, %37, %cst_31 {dimension_numbers = #tpu.dot_dimension_numbers<[1], [0], [0], [1], [0, 0, 1, 1], [], []>} : vector<240x4xf32>, vector<4x8xf32>, vector<240x8xf32> -> vector<240x8xf32>
    %39 = arith.addf %33, %38 : vector<240x8xf32>
    %40 = vector.extract_strided_slice %2 {offsets = [2, 0, 0], sizes = [10, 24, 4], strides = [1, 1, 1]} : vector<12x26x4xf32> to vector<10x24x4xf32>
    %41 = vector.shape_cast %40 : vector<10x24x4xf32> to vector<240x4xf32>
    %c2_32 = arith.constant 2 : index
    %c0_33 = arith.constant 0 : index
    %c0_34 = arith.constant 0 : index
    %c0_35 = arith.constant 0 : index
    %42 = vector.load %arg4[%c2_32, %c0_33, %c0_34, %c0_35] : memref<3x3x4x8xf32, #tpu.memory_space<vmem>>, vector<1x1x4x8xf32>
    %43 = vector.shape_cast %42 : vector<1x1x4x8xf32> to vector<4x8xf32>
    %cst_36 = arith.constant dense<0.000000e+00> : vector<240x8xf32>
    %44 = tpu.matmul %41, %43, %cst_36 {dimension_numbers = #tpu.dot_dimension_numbers<[1], [0], [0], [1], [0, 0, 1, 1], [], []>} : vector<240x4xf32>, vector<4x8xf32>, vector<240x8xf32> -> vector<240x8xf32>
    %45 = arith.addf %39, %44 : vector<240x8xf32>
    %46 = vector.extract_strided_slice %2 {offsets = [2, 1, 0], sizes = [10, 24, 4], strides = [1, 1, 1]} : vector<12x26x4xf32> to vector<10x24x4xf32>
    %47 = vector.shape_cast %46 : vector<10x24x4xf32> to vector<240x4xf32>
    %c2_37 = arith.constant 2 : index
    %c1_38 = arith.constant 1 : index
    %c0_39 = arith.constant 0 : index
    %c0_40 = arith.constant 0 : index
    %48 = vector.load %arg4[%c2_37, %c1_38, %c0_39, %c0_40] : memref<3x3x4x8xf32, #tpu.memory_space<vmem>>, vector<1x1x4x8xf32>
    %49 = vector.shape_cast %48 : vector<1x1x4x8xf32> to vector<4x8xf32>
    %cst_41 = arith.constant dense<0.000000e+00> : vector<240x8xf32>
    %50 = tpu.matmul %47, %49, %cst_41 {dimension_numbers = #tpu.dot_dimension_numbers<[1], [0], [0], [1], [0, 0, 1, 1], [], []>} : vector<240x4xf32>, vector<4x8xf32>, vector<240x8xf32> -> vector<240x8xf32>
    %51 = arith.addf %45, %50 : vector<240x8xf32>
    %52 = vector.extract_strided_slice %2 {offsets = [2, 2, 0], sizes = [10, 24, 4], strides = [1, 1, 1]} : vector<12x26x4xf32> to vector<10x24x4xf32>
    %53 = vector.shape_cast %52 : vector<10x24x4xf32> to vector<240x4xf32>
    %c2_42 = arith.constant 2 : index
    %c2_43 = arith.constant 2 : index
    %c0_44 = arith.constant 0 : index
    %c0_45 = arith.constant 0 : index
    %54 = vector.load %arg4[%c2_42, %c2_43, %c0_44, %c0_45] : memref<3x3x4x8xf32, #tpu.memory_space<vmem>>, vector<1x1x4x8xf32>
    %55 = vector.shape_cast %54 : vector<1x1x4x8xf32> to vector<4x8xf32>
    %cst_46 = arith.constant dense<0.000000e+00> : vector<240x8xf32>
    %56 = tpu.matmul %53, %55, %cst_46 {dimension_numbers = #tpu.dot_dimension_numbers<[1], [0], [0], [1], [0, 0, 1, 1], [], []>} : vector<240x4xf32>, vector<4x8xf32>, vector<240x8xf32> -> vector<240x8xf32>
    %57 = arith.addf %51, %56 : vector<240x8xf32>
    %c0_47 = arith.constant 0 : index
    %c0_48 = arith.constant 0 : index
    %58 = vector.load %arg5[%c0_47, %c0_48] : memref<1x8xf32, #tpu.memory_space<vmem>>, vector<1x8xf32>
    %59 = vector.broadcast %58 : vector<1x8xf32> to vector<240x8xf32>
    %60 = arith.addf %57, %59 : vector<240x8xf32>
    %cst_49 = arith.constant 0.000000e+00 : f32
    %61 = vector.broadcast %cst_49 : f32 to vector<240x8xf32>
    %62 = arith.maximumf %60, %61 : vector<240x8xf32>
    %63 = vector.shape_cast %62 : vector<240x8xf32> to vector<10x24x8xf32>
    %64 = tpu.iota {dimensions = array<i32: 0>} : vector<10x24x8xi32>
    %c1_i32 = arith.constant 1 : i32
    %65 = arith.subi %0, %c1_i32 : i32
    %66 = vector.broadcast %65 : i32 to vector<10x24x8xi32>
    %67 = arith.addi %64, %66 : vector<10x24x8xi32>
    %68 = tpu.iota {dimensions = array<i32: 1>} : vector<10x24x8xi32>
    %c1_i32_50 = arith.constant 1 : i32
    %69 = vector.broadcast %c1_i32_50 : i32 to vector<10x24x8xi32>
    %70 = arith.subi %68, %69 : vector<10x24x8xi32>
    %c0_i32 = arith.constant 0 : i32
    %71 = vector.broadcast %c0_i32 : i32 to vector<10x24x8xi32>
    %72 = arith.cmpi sge, %67, %71 : vector<10x24x8xi32>
    %c16_i32 = arith.constant 16 : i32
    %73 = vector.broadcast %c16_i32 : i32 to vector<10x24x8xi32>
    %74 = arith.cmpi slt, %67, %73 : vector<10x24x8xi32>
    %75 = arith.andi %72, %74 : vector<10x24x8xi1>
    %c0_i32_51 = arith.constant 0 : i32
    %76 = vector.broadcast %c0_i32_51 : i32 to vector<10x24x8xi32>
    %77 = arith.cmpi sge, %70, %76 : vector<10x24x8xi32>
    %78 = arith.andi %75, %77 : vector<10x24x8xi1>
    %c16_i32_52 = arith.constant 16 : i32
    %79 = vector.broadcast %c16_i32_52 : i32 to vector<10x24x8xi32>
    %80 = arith.cmpi slt, %70, %79 : vector<10x24x8xi32>
    %81 = arith.andi %78, %80 : vector<10x24x8xi1>
    %cst_53 = arith.constant 0.000000e+00 : f32
    %82 = vector.broadcast %cst_53 : f32 to vector<10x24x8xf32>
    %83 = arith.select %81, %63, %82 : vector<10x24x8xi1>, vector<10x24x8xf32>
    %cst_54 = arith.constant 0.000000e+00 : f32
    %84 = vector.broadcast %cst_54 : f32 to vector<128x8xf32>
    %85 = vector.extract_strided_slice %83 {offsets = [0, 0, 0], sizes = [8, 16, 8], strides = [1, 1, 1]} : vector<10x24x8xf32> to vector<8x16x8xf32>
    %86 = vector.shape_cast %85 : vector<8x16x8xf32> to vector<128x8xf32>
    %c0_55 = arith.constant 0 : index
    %c0_56 = arith.constant 0 : index
    %c0_57 = arith.constant 0 : index
    %c0_58 = arith.constant 0 : index
    %87 = vector.load %arg6[%c0_55, %c0_56, %c0_57, %c0_58] : memref<3x3x8x8xf32, #tpu.memory_space<vmem>>, vector<1x1x8x8xf32>
    %88 = vector.shape_cast %87 : vector<1x1x8x8xf32> to vector<8x8xf32>
    %cst_59 = arith.constant dense<0.000000e+00> : vector<128x8xf32>
    %89 = tpu.matmul %86, %88, %cst_59 {dimension_numbers = #tpu.dot_dimension_numbers<[1], [0], [0], [1], [0, 0, 1, 1], [], []>} : vector<128x8xf32>, vector<8x8xf32>, vector<128x8xf32> -> vector<128x8xf32>
    %90 = arith.addf %84, %89 : vector<128x8xf32>
    %91 = vector.extract_strided_slice %83 {offsets = [0, 1, 0], sizes = [8, 16, 8], strides = [1, 1, 1]} : vector<10x24x8xf32> to vector<8x16x8xf32>
    %92 = vector.shape_cast %91 : vector<8x16x8xf32> to vector<128x8xf32>
    %c0_60 = arith.constant 0 : index
    %c1_61 = arith.constant 1 : index
    %c0_62 = arith.constant 0 : index
    %c0_63 = arith.constant 0 : index
    %93 = vector.load %arg6[%c0_60, %c1_61, %c0_62, %c0_63] : memref<3x3x8x8xf32, #tpu.memory_space<vmem>>, vector<1x1x8x8xf32>
    %94 = vector.shape_cast %93 : vector<1x1x8x8xf32> to vector<8x8xf32>
    %cst_64 = arith.constant dense<0.000000e+00> : vector<128x8xf32>
    %95 = tpu.matmul %92, %94, %cst_64 {dimension_numbers = #tpu.dot_dimension_numbers<[1], [0], [0], [1], [0, 0, 1, 1], [], []>} : vector<128x8xf32>, vector<8x8xf32>, vector<128x8xf32> -> vector<128x8xf32>
    %96 = arith.addf %90, %95 : vector<128x8xf32>
    %97 = vector.extract_strided_slice %83 {offsets = [0, 2, 0], sizes = [8, 16, 8], strides = [1, 1, 1]} : vector<10x24x8xf32> to vector<8x16x8xf32>
    %98 = vector.shape_cast %97 : vector<8x16x8xf32> to vector<128x8xf32>
    %c0_65 = arith.constant 0 : index
    %c2_66 = arith.constant 2 : index
    %c0_67 = arith.constant 0 : index
    %c0_68 = arith.constant 0 : index
    %99 = vector.load %arg6[%c0_65, %c2_66, %c0_67, %c0_68] : memref<3x3x8x8xf32, #tpu.memory_space<vmem>>, vector<1x1x8x8xf32>
    %100 = vector.shape_cast %99 : vector<1x1x8x8xf32> to vector<8x8xf32>
    %cst_69 = arith.constant dense<0.000000e+00> : vector<128x8xf32>
    %101 = tpu.matmul %98, %100, %cst_69 {dimension_numbers = #tpu.dot_dimension_numbers<[1], [0], [0], [1], [0, 0, 1, 1], [], []>} : vector<128x8xf32>, vector<8x8xf32>, vector<128x8xf32> -> vector<128x8xf32>
    %102 = arith.addf %96, %101 : vector<128x8xf32>
    %103 = vector.extract_strided_slice %83 {offsets = [1, 0, 0], sizes = [8, 16, 8], strides = [1, 1, 1]} : vector<10x24x8xf32> to vector<8x16x8xf32>
    %104 = vector.shape_cast %103 : vector<8x16x8xf32> to vector<128x8xf32>
    %c1_70 = arith.constant 1 : index
    %c0_71 = arith.constant 0 : index
    %c0_72 = arith.constant 0 : index
    %c0_73 = arith.constant 0 : index
    %105 = vector.load %arg6[%c1_70, %c0_71, %c0_72, %c0_73] : memref<3x3x8x8xf32, #tpu.memory_space<vmem>>, vector<1x1x8x8xf32>
    %106 = vector.shape_cast %105 : vector<1x1x8x8xf32> to vector<8x8xf32>
    %cst_74 = arith.constant dense<0.000000e+00> : vector<128x8xf32>
    %107 = tpu.matmul %104, %106, %cst_74 {dimension_numbers = #tpu.dot_dimension_numbers<[1], [0], [0], [1], [0, 0, 1, 1], [], []>} : vector<128x8xf32>, vector<8x8xf32>, vector<128x8xf32> -> vector<128x8xf32>
    %108 = arith.addf %102, %107 : vector<128x8xf32>
    %109 = vector.extract_strided_slice %83 {offsets = [1, 1, 0], sizes = [8, 16, 8], strides = [1, 1, 1]} : vector<10x24x8xf32> to vector<8x16x8xf32>
    %110 = vector.shape_cast %109 : vector<8x16x8xf32> to vector<128x8xf32>
    %c1_75 = arith.constant 1 : index
    %c1_76 = arith.constant 1 : index
    %c0_77 = arith.constant 0 : index
    %c0_78 = arith.constant 0 : index
    %111 = vector.load %arg6[%c1_75, %c1_76, %c0_77, %c0_78] : memref<3x3x8x8xf32, #tpu.memory_space<vmem>>, vector<1x1x8x8xf32>
    %112 = vector.shape_cast %111 : vector<1x1x8x8xf32> to vector<8x8xf32>
    %cst_79 = arith.constant dense<0.000000e+00> : vector<128x8xf32>
    %113 = tpu.matmul %110, %112, %cst_79 {dimension_numbers = #tpu.dot_dimension_numbers<[1], [0], [0], [1], [0, 0, 1, 1], [], []>} : vector<128x8xf32>, vector<8x8xf32>, vector<128x8xf32> -> vector<128x8xf32>
    %114 = arith.addf %108, %113 : vector<128x8xf32>
    %115 = vector.extract_strided_slice %83 {offsets = [1, 2, 0], sizes = [8, 16, 8], strides = [1, 1, 1]} : vector<10x24x8xf32> to vector<8x16x8xf32>
    %116 = vector.shape_cast %115 : vector<8x16x8xf32> to vector<128x8xf32>
    %c1_80 = arith.constant 1 : index
    %c2_81 = arith.constant 2 : index
    %c0_82 = arith.constant 0 : index
    %c0_83 = arith.constant 0 : index
    %117 = vector.load %arg6[%c1_80, %c2_81, %c0_82, %c0_83] : memref<3x3x8x8xf32, #tpu.memory_space<vmem>>, vector<1x1x8x8xf32>
    %118 = vector.shape_cast %117 : vector<1x1x8x8xf32> to vector<8x8xf32>
    %cst_84 = arith.constant dense<0.000000e+00> : vector<128x8xf32>
    %119 = tpu.matmul %116, %118, %cst_84 {dimension_numbers = #tpu.dot_dimension_numbers<[1], [0], [0], [1], [0, 0, 1, 1], [], []>} : vector<128x8xf32>, vector<8x8xf32>, vector<128x8xf32> -> vector<128x8xf32>
    %120 = arith.addf %114, %119 : vector<128x8xf32>
    %121 = vector.extract_strided_slice %83 {offsets = [2, 0, 0], sizes = [8, 16, 8], strides = [1, 1, 1]} : vector<10x24x8xf32> to vector<8x16x8xf32>
    %122 = vector.shape_cast %121 : vector<8x16x8xf32> to vector<128x8xf32>
    %c2_85 = arith.constant 2 : index
    %c0_86 = arith.constant 0 : index
    %c0_87 = arith.constant 0 : index
    %c0_88 = arith.constant 0 : index
    %123 = vector.load %arg6[%c2_85, %c0_86, %c0_87, %c0_88] : memref<3x3x8x8xf32, #tpu.memory_space<vmem>>, vector<1x1x8x8xf32>
    %124 = vector.shape_cast %123 : vector<1x1x8x8xf32> to vector<8x8xf32>
    %cst_89 = arith.constant dense<0.000000e+00> : vector<128x8xf32>
    %125 = tpu.matmul %122, %124, %cst_89 {dimension_numbers = #tpu.dot_dimension_numbers<[1], [0], [0], [1], [0, 0, 1, 1], [], []>} : vector<128x8xf32>, vector<8x8xf32>, vector<128x8xf32> -> vector<128x8xf32>
    %126 = arith.addf %120, %125 : vector<128x8xf32>
    %127 = vector.extract_strided_slice %83 {offsets = [2, 1, 0], sizes = [8, 16, 8], strides = [1, 1, 1]} : vector<10x24x8xf32> to vector<8x16x8xf32>
    %128 = vector.shape_cast %127 : vector<8x16x8xf32> to vector<128x8xf32>
    %c2_90 = arith.constant 2 : index
    %c1_91 = arith.constant 1 : index
    %c0_92 = arith.constant 0 : index
    %c0_93 = arith.constant 0 : index
    %129 = vector.load %arg6[%c2_90, %c1_91, %c0_92, %c0_93] : memref<3x3x8x8xf32, #tpu.memory_space<vmem>>, vector<1x1x8x8xf32>
    %130 = vector.shape_cast %129 : vector<1x1x8x8xf32> to vector<8x8xf32>
    %cst_94 = arith.constant dense<0.000000e+00> : vector<128x8xf32>
    %131 = tpu.matmul %128, %130, %cst_94 {dimension_numbers = #tpu.dot_dimension_numbers<[1], [0], [0], [1], [0, 0, 1, 1], [], []>} : vector<128x8xf32>, vector<8x8xf32>, vector<128x8xf32> -> vector<128x8xf32>
    %132 = arith.addf %126, %131 : vector<128x8xf32>
    %133 = vector.extract_strided_slice %83 {offsets = [2, 2, 0], sizes = [8, 16, 8], strides = [1, 1, 1]} : vector<10x24x8xf32> to vector<8x16x8xf32>
    %134 = vector.shape_cast %133 : vector<8x16x8xf32> to vector<128x8xf32>
    %c2_95 = arith.constant 2 : index
    %c2_96 = arith.constant 2 : index
    %c0_97 = arith.constant 0 : index
    %c0_98 = arith.constant 0 : index
    %135 = vector.load %arg6[%c2_95, %c2_96, %c0_97, %c0_98] : memref<3x3x8x8xf32, #tpu.memory_space<vmem>>, vector<1x1x8x8xf32>
    %136 = vector.shape_cast %135 : vector<1x1x8x8xf32> to vector<8x8xf32>
    %cst_99 = arith.constant dense<0.000000e+00> : vector<128x8xf32>
    %137 = tpu.matmul %134, %136, %cst_99 {dimension_numbers = #tpu.dot_dimension_numbers<[1], [0], [0], [1], [0, 0, 1, 1], [], []>} : vector<128x8xf32>, vector<8x8xf32>, vector<128x8xf32> -> vector<128x8xf32>
    %138 = arith.addf %132, %137 : vector<128x8xf32>
    %c0_100 = arith.constant 0 : index
    %c0_101 = arith.constant 0 : index
    %139 = vector.load %arg7[%c0_100, %c0_101] : memref<1x8xf32, #tpu.memory_space<vmem>>, vector<1x8xf32>
    %140 = vector.broadcast %139 : vector<1x8xf32> to vector<128x8xf32>
    %141 = arith.addf %138, %140 : vector<128x8xf32>
    %c0_102 = arith.constant 0 : index
    %c0_103 = arith.constant 0 : index
    %c0_104 = arith.constant 0 : index
    %c0_105 = arith.constant 0 : index
    %142 = vector.load %arg3[%c0_102, %c0_103, %c0_104, %c0_105] : memref<1x8x16x4xf32, #tpu.memory_space<vmem>>, vector<1x8x16x4xf32>
    %143 = vector.shape_cast %142 : vector<1x8x16x4xf32> to vector<8x16x4xf32>
    %144 = vector.shape_cast %143 : vector<8x16x4xf32> to vector<128x4xf32>
    %c0_106 = arith.constant 0 : index
    %c0_107 = arith.constant 0 : index
    %145 = vector.load %arg8[%c0_106, %c0_107] : memref<4x8xf32, #tpu.memory_space<vmem>>, vector<4x8xf32>
    %cst_108 = arith.constant dense<0.000000e+00> : vector<128x8xf32>
    %146 = tpu.matmul %144, %145, %cst_108 {dimension_numbers = #tpu.dot_dimension_numbers<[1], [0], [0], [1], [0, 0, 1, 1], [], []>} : vector<128x4xf32>, vector<4x8xf32>, vector<128x8xf32> -> vector<128x8xf32>
    %c0_109 = arith.constant 0 : index
    %c0_110 = arith.constant 0 : index
    %147 = vector.load %arg9[%c0_109, %c0_110] : memref<1x8xf32, #tpu.memory_space<vmem>>, vector<1x8xf32>
    %148 = vector.broadcast %147 : vector<1x8xf32> to vector<128x8xf32>
    %149 = arith.addf %146, %148 : vector<128x8xf32>
    %150 = arith.addf %141, %149 : vector<128x8xf32>
    %cst_111 = arith.constant 0.000000e+00 : f32
    %151 = vector.broadcast %cst_111 : f32 to vector<128x8xf32>
    %152 = arith.maximumf %150, %151 : vector<128x8xf32>
    %153 = vector.shape_cast %152 : vector<128x8xf32> to vector<8x16x8xf32>
    %c0_112 = arith.constant 0 : index
    %c0_113 = arith.constant 0 : index
    %c0_114 = arith.constant 0 : index
    %c0_115 = arith.constant 0 : index
    %c0_116 = arith.constant 0 : index
    %154 = vector.load %arg10[%c0_112, %c0_113, %c0_114, %c0_115, %c0_116] : memref<1x1x8x16x8xf32, #tpu.memory_space<vmem>>, vector<1x1x8x16x8xf32>
    %155 = vector.shape_cast %154 : vector<1x1x8x16x8xf32> to vector<8x16x8xf32>
    %156 = vector.shape_cast %153 : vector<8x16x8xf32> to vector<1x1x8x16x8xf32>
    tpu.vector_store %arg10[%c0_112, %c0_113, %c0_114, %c0_115, %c0_116], %156 {strides = array<i32>} : memref<1x1x8x16x8xf32, #tpu.memory_space<vmem>>, vector<1x1x8x16x8xf32>,
    return
  }
  func.func @transform_0(%arg0: i32, %arg1: i32) -> (i32, i32, i32, i32, i32) {
    %c0_i32 = arith.constant 0 : i32
    %c0_i32_0 = arith.constant 0 : i32
    %c0_i32_1 = arith.constant 0 : i32
    %c0_i32_2 = arith.constant 0 : i32
    return %arg0, %arg1, %c0_i32, %c0_i32_0, %c0_i32_1 : i32, i32, i32, i32, i32
  }
  func.func @transform_1(%arg0: i32, %arg1: i32) -> (i32, i32, i32, i32) {
    %c0_i32 = arith.constant 0 : i32
    %c0_i32_0 = arith.constant 0 : i32
    %c0_i32_1 = arith.constant 0 : i32
    return %arg0, %arg1, %c0_i32, %c0_i32_0 : i32, i32, i32, i32
  }
  func.func @transform_2(%arg0: i32, %arg1: i32) -> (i32, i32, i32, i32) {
    %c0_i32 = arith.constant 0 : i32
    %c0_i32_0 = arith.constant 0 : i32
    %c0_i32_1 = arith.constant 0 : i32
    %c0_i32_2 = arith.constant 0 : i32
    %c0_i32_3 = arith.constant 0 : i32
    return %c0_i32, %c0_i32_0, %c0_i32_1, %c0_i32_2 : i32, i32, i32, i32
  }
  func.func @transform_3(%arg0: i32, %arg1: i32) -> (i32, i32) {
    %c0_i32 = arith.constant 0 : i32
    %c0_i32_0 = arith.constant 0 : i32
    %c0_i32_1 = arith.constant 0 : i32
    return %c0_i32, %c0_i32_0 : i32, i32
  }
  func.func @transform_4(%arg0: i32, %arg1: i32) -> (i32, i32, i32, i32) {
    %c0_i32 = arith.constant 0 : i32
    %c0_i32_0 = arith.constant 0 : i32
    %c0_i32_1 = arith.constant 0 : i32
    %c0_i32_2 = arith.constant 0 : i32
    %c0_i32_3 = arith.constant 0 : i32
    return %c0_i32, %c0_i32_0, %c0_i32_1, %c0_i32_2 : i32, i32, i32, i32
  }
  func.func @transform_5(%arg0: i32, %arg1: i32) -> (i32, i32) {
    %c0_i32 = arith.constant 0 : i32
    %c0_i32_0 = arith.constant 0 : i32
    %c0_i32_1 = arith.constant 0 : i32
    return %c0_i32, %c0_i32_0 : i32, i32
  }
  func.func @transform_6(%arg0: i32, %arg1: i32) -> (i32, i32) {
    %c0_i32 = arith.constant 0 : i32
    %c0_i32_0 = arith.constant 0 : i32
    %c0_i32_1 = arith.constant 0 : i32
    return %c0_i32, %c0_i32_0 : i32, i32
  }
  func.func @transform_7(%arg0: i32, %arg1: i32) -> (i32, i32) {
    %c0_i32 = arith.constant 0 : i32
    %c0_i32_0 = arith.constant 0 : i32
    %c0_i32_1 = arith.constant 0 : i32
    return %c0_i32, %c0_i32_0 : i32, i32
  }
  func.func @transform_8(%arg0: i32, %arg1: i32) -> (i32, i32, i32, i32, i32) {
    %c0_i32 = arith.constant 0 : i32
    %c0_i32_0 = arith.constant 0 : i32
    %c0_i32_1 = arith.constant 0 : i32
    %c0_i32_2 = arith.constant 0 : i32
    return %arg0, %arg1, %c0_i32, %c0_i32_0, %c0_i32_1 : i32, i32, i32, i32, i32
  }
}

</mosaic_0001>

<llo_original>
// kernel: tpu_custom_call.1
$region0: #{tpu_custom_call.1}
  #allocation0 [shape = 'u32[]', space=smem, size = 0x4, offset = 0x4, fixed_abs, tag = 'smem constant byte address 0x4 - core index']
  #allocation1 [shape = 'u32[144,128]{1,0:T(1,128)}', space=vmem, size = 0x12000, scoped, tag = 'internal scratch']
  %s0 = inlined_call_operand.vmem [shape: f32[2,2,12,26,4], index: 0, kind: input, shape index: {}]
  %s1 = inlined_call_operand.vmem [shape: f32[2,16,16,4], index: 1, kind: input, shape index: {}]
  %s2 = inlined_call_operand.vmem [shape: f32[3,3,4,8], index: 2, kind: input, shape index: {}]
  %s3 = inlined_call_operand.vmem [shape: f32[1,8], index: 3, kind: input, shape index: {}]
  %s4 = inlined_call_operand.vmem [shape: f32[3,3,8,8], index: 4, kind: input, shape index: {}]
  %s5 = inlined_call_operand.vmem [shape: f32[1,8], index: 5, kind: input, shape index: {}]
  %s6 = inlined_call_operand.vmem [shape: f32[4,8], index: 6, kind: input, shape index: {}]
  %s7 = inlined_call_operand.vmem [shape: f32[1,8], index: 7, kind: input, shape index: {}]
  %s8 = inlined_call_operand.vmem [shape: f32[2,2,8,16,8], index: 8, kind: output, shape index: {}]
  %s9 = sld [smem:[#allocation0]]
  $region65: #{tpu_custom_call.1} parent=0
    _
  %s11 = ssub.s32 1, %s9
  %s12 = scalar_select 0, %s11, %s9
  loop: start=0, step=1, limit=6
  $region2: #{tpu_custom_call.1} parent=0 // loop_pre_header
    _
  $region3: #{tpu_custom_call.1} parent=0 // loop_header
    %s14 = sphi 0, %s18
    %p15 = scmp.ge.s32.totalorder %s14, 6
    %s21 = sphi 0, %s33
    %s22 = sphi 0, %s29
    %s23 = sphi 0, %s21
    %s24 = sphi 0, %s22
    %s25 = sphi 0, %s23
    %s26 = sphi 0, %s24
    %s38 = sphi 0, %s40
    %s41 = sphi 0, %s38
    %s42 = sphi 0, %s41
    %s58 = sphi 0, %s42
    %s66 = sphi 0, %s68
    %s69 = sphi 0, %s66
    %s70 = sphi 0, %s69
    %s86 = sphi 0, %s70
    %s90 = sphi 0, %s90
    %s92 = sphi 0, %s90
    %s93 = sphi 0, %s92
    %s107 = sphi 0, %s93
    %s111 = sphi 0, %s111
    %s113 = sphi 0, %s111
    %s114 = sphi 0, %s113
    %s128 = sphi 0, %s114
    %s132 = sphi 0, %s132
    %s134 = sphi 0, %s132
    %s135 = sphi 0, %s134
    %s149 = sphi 0, %s135
    %s153 = sphi 0, %s153
    %s155 = sphi 0, %s153
    %s156 = sphi 0, %s155
    %s170 = sphi 0, %s156
    %s174 = sphi 0, %s174
    %s176 = sphi 0, %s174
    %s177 = sphi 0, %s176
    %s191 = sphi 0, %s177
    %s195 = sphi 0, %s195
    %s197 = sphi 0, %s195
    %s198 = sphi 0, %s197
    %s212 = sphi 0, %s198
    %s220 = sphi 0, %s222
    %s223 = sphi 0, %s220
    %s224 = sphi 0, %s223
    %s240 = sphi 0, %s224
  $region4: #{tpu_custom_call.1} parent=0 // loop_header_branch
    %17 = sbr.rel (%p15) target = $region8
  $region5: #{tpu_custom_call.1} parent=0 // loop_body
    %s19 = ssub.s32 %s14, 1
    %s20 = ssub.s32 %s14, 2
    %s27 = sadd.s32 1, %s22
    %p28 = scmp.ge.s32.totalorder %s27, 2
    %s29 = scalar_select %p28, 0, %s27
    %s30 = sadd.s32 1, %s21
    %s31 = scalar_select %p28, %s30, %s21
    %p32 = scmp.ge.s32.totalorder %s31, 2
    %s33 = scalar_select %p32, 0, %s31
    %s34 = ssub.s32 %s21, %s33
    %s35 = ssub.s32 %s22, %s29
    %s36 = sor.u32 %s34, %s35
    %p37 = scmp.eq.s32.totalorder %s36, 0
    %s39 = sadd.s32 %s38, 1
    %s40 = scalar_select %p37, %s38, %s39
    %p43 = pneg %p37
    %p44 = scmp.eq.s32.totalorder %s14, 3
    %p45 = por %p43, %p44
    %p46 = scmp.ne.s32.totalorder %s38, %s41
    %p47 = scmp.eq.s32.totalorder %s14, 0
    %p48 = por %p46, %p47
    %p49 = scmp.ne.s32.totalorder %s38, %s41
    %p50 = scmp.eq.s32.totalorder %s19, 3
    %p51 = por %p49, %p50
    %p52 = scmp.ne.s32.totalorder %s41, %s42
    %p53 = scmp.eq.s32.totalorder %s19, 0
    %p54 = por %p52, %p53
    %p55 = scmp.ne.s32.totalorder %s41, %s42
    %p56 = scmp.eq.s32.totalorder %s20, 3
    %p57 = por %p55, %p56
    %p59 = scmp.ne.s32.totalorder %s42, %s58
    %p60 = scmp.eq.s32.totalorder %s20, 0
    %p61 = por %p59, %p60
    %s62 = ssub.s32 %s21, %s33
    %s63 = ssub.s32 %s22, %s29
    %s64 = sor.u32 %s62, %s63
    %p65 = scmp.eq.s32.totalorder %s64, 0
    %s67 = sadd.s32 %s66, 1
    %s68 = scalar_select %p65, %s66, %s67
    %p71 = pneg %p65
    %p72 = scmp.eq.s32.totalorder %s14, 3
    %p73 = por %p71, %p72
    %p74 = scmp.ne.s32.totalorder %s66, %s69
    %p75 = scmp.eq.s32.totalorder %s14, 0
    %p76 = por %p74, %p75
    %p77 = scmp.ne.s32.totalorder %s66, %s69
    %p78 = scmp.eq.s32.totalorder %s19, 3
    %p79 = por %p77, %p78
    %p80 = scmp.ne.s32.totalorder %s69, %s70
    %p81 = scmp.eq.s32.totalorder %s19, 0
    %p82 = por %p80, %p81
    %p83 = scmp.ne.s32.totalorder %s69, %s70
    %p84 = scmp.eq.s32.totalorder %s20, 3
    %p85 = por %p83, %p84
    %p87 = scmp.ne.s32.totalorder %s70, %s86
    %p88 = scmp.eq.s32.totalorder %s20, 0
    %p89 = por %p87, %p88
    %s91 = sadd.s32 %s90, 1
    %p94 = scmp.eq.s32.totalorder %s14, 3
    %p95 = scmp.ne.s32.totalorder %s90, %s92
    %p96 = scmp.eq.s32.totalorder %s14, 0
    %p97 = por %p95, %p96
    %p98 = scmp.ne.s32.totalorder %s90, %s92
    %p99 = scmp.eq.s32.totalorder %s19, 3
    %p100 = por %p98, %p99
    %p101 = scmp.ne.s32.totalorder %s92, %s93
    %p102 = scmp.eq.s32.totalorder %s19, 0
    %p103 = por %p101, %p102
    %p104 = scmp.ne.s32.totalorder %s92, %s93
    %p105 = scmp.eq.s32.totalorder %s20, 3
    %p106 = por %p104, %p105
    %p108 = scmp.ne.s32.totalorder %s93, %s107
    %p109 = scmp.eq.s32.totalorder %s20, 0
    %p110 = por %p108, %p109
    %s112 = sadd.s32 %s111, 1
    %p115 = scmp.eq.s32.totalorder %s14, 3
    %p116 = scmp.ne.s32.totalorder %s111, %s113
    %p117 = scmp.eq.s32.totalorder %s14, 0
    %p118 = por %p116, %p117
    %p119 = scmp.ne.s32.totalorder %s111, %s113
    %p120 = scmp.eq.s32.totalorder %s19, 3
    %p121 = por %p119, %p120
    %p122 = scmp.ne.s32.totalorder %s113, %s114
    %p123 = scmp.eq.s32.totalorder %s19, 0
    %p124 = por %p122, %p123
    %p125 = scmp.ne.s32.totalorder %s113, %s114
    %p126 = scmp.eq.s32.totalorder %s20, 3
    %p127 = por %p125, %p126
    %p129 = scmp.ne.s32.totalorder %s114, %s128
    %p130 = scmp.eq.s32.totalorder %s20, 0
    %p131 = por %p129, %p130
    %s133 = sadd.s32 %s132, 1
    %p136 = scmp.eq.s32.totalorder %s14, 3
    %p137 = scmp.ne.s32.totalorder %s132, %s134
    %p138 = scmp.eq.s32.totalorder %s14, 0
    %p139 = por %p137, %p138
    %p140 = scmp.ne.s32.totalorder %s132, %s134
    %p141 = scmp.eq.s32.totalorder %s19, 3
    %p142 = por %p140, %p141
    %p143 = scmp.ne.s32.totalorder %s134, %s135
    %p144 = scmp.eq.s32.totalorder %s19, 0
    %p145 = por %p143, %p144
    %p146 = scmp.ne.s32.totalorder %s134, %s135
    %p147 = scmp.eq.s32.totalorder %s20, 3
    %p148 = por %p146, %p147
    %p150 = scmp.ne.s32.totalorder %s135, %s149
    %p151 = scmp.eq.s32.totalorder %s20, 0
    %p152 = por %p150, %p151
    %s154 = sadd.s32 %s153, 1
    %p157 = scmp.eq.s32.totalorder %s14, 3
    %p158 = scmp.ne.s32.totalorder %s153, %s155
    %p159 = scmp.eq.s32.totalorder %s14, 0
    %p160 = por %p158, %p159
    %p161 = scmp.ne.s32.totalorder %s153, %s155
    %p162 = scmp.eq.s32.totalorder %s19, 3
    %p163 = por %p161, %p162
    %p164 = scmp.ne.s32.totalorder %s155, %s156
    %p165 = scmp.eq.s32.totalorder %s19, 0
    %p166 = por %p164, %p165
    %p167 = scmp.ne.s32.totalorder %s155, %s156
    %p168 = scmp.eq.s32.totalorder %s20, 3
    %p169 = por %p167, %p168
    %p171 = scmp.ne.s32.totalorder %s156, %s170
    %p172 = scmp.eq.s32.totalorder %s20, 0
    %p173 = por %p171, %p172
    %s175 = sadd.s32 %s174, 1
    %p178 = scmp.eq.s32.totalorder %s14, 3
    %p179 = scmp.ne.s32.totalorder %s174, %s176
    %p180 = scmp.eq.s32.totalorder %s14, 0
    %p181 = por %p179, %p180
    %p182 = scmp.ne.s32.totalorder %s174, %s176
    %p183 = scmp.eq.s32.totalorder %s19, 3
    %p184 = por %p182, %p183
    %p185 = scmp.ne.s32.totalorder %s176, %s177
    %p186 = scmp.eq.s32.totalorder %s19, 0
    %p187 = por %p185, %p186
    %p188 = scmp.ne.s32.totalorder %s176, %s177
    %p189 = scmp.eq.s32.totalorder %s20, 3
    %p190 = por %p188, %p189
    %p192 = scmp.ne.s32.totalorder %s177, %s191
    %p193 = scmp.eq.s32.totalorder %s20, 0
    %p194 = por %p192, %p193
    %s196 = sadd.s32 %s195, 1
    %p199 = scmp.eq.s32.totalorder %s14, 3
    %p200 = scmp.ne.s32.totalorder %s195, %s197
    %p201 = scmp.eq.s32.totalorder %s14, 0
    %p202 = por %p200, %p201
    %p203 = scmp.ne.s32.totalorder %s195, %s197
    %p204 = scmp.eq.s32.totalorder %s19, 3
    %p205 = por %p203, %p204
    %p206 = scmp.ne.s32.totalorder %s197, %s198
    %p207 = scmp.eq.s32.totalorder %s19, 0
    %p208 = por %p206, %p207
    %p209 = scmp.ne.s32.totalorder %s197, %s198
    %p210 = scmp.eq.s32.totalorder %s20, 3
    %p211 = por %p209, %p210
    %p213 = scmp.ne.s32.totalorder %s198, %s212
    %p214 = scmp.eq.s32.totalorder %s20, 0
    %p215 = por %p213, %p214
    %s216 = ssub.s32 %s21, %s33
    %s217 = ssub.s32 %s22, %s29
    %s218 = sor.u32 %s216, %s217
    %p219 = scmp.eq.s32.totalorder %s218, 0
    %s221 = sadd.s32 %s220, 1
    %s222 = scalar_select %p219, %s220, %s221
    %p225 = pneg %p219
    %p226 = scmp.eq.s32.totalorder %s14, 3
    %p227 = por %p225, %p226
    %p228 = scmp.ne.s32.totalorder %s220, %s223
    %p229 = scmp.eq.s32.totalorder %s14, 0
    %p230 = por %p228, %p229
    %p231 = scmp.ne.s32.totalorder %s220, %s223
    %p232 = scmp.eq.s32.totalorder %s19, 3
    %p233 = por %p231, %p232
    %p234 = scmp.ne.s32.totalorder %s223, %s224
    %p235 = scmp.eq.s32.totalorder %s19, 0
    %p236 = por %p234, %p235
    %p237 = scmp.ne.s32.totalorder %s223, %s224
    %p238 = scmp.eq.s32.totalorder %s20, 3
    %p239 = por %p237, %p238
    %p241 = scmp.ne.s32.totalorder %s224, %s240
    %p242 = scmp.eq.s32.totalorder %s20, 0
    %p243 = por %p241, %p242
    %p244 = scmp.le.s32.totalorder 1, %s14
    %p245 = scmp.lt.s32.totalorder %s14, 5
    %p246 = pnand %p244, %p245
    %p247 = pneg %p246
    // Predicated region
    $region9: #{tpu_custom_call.1} parent=5 // pred_check
      _
    $region10: #{tpu_custom_call.1} parent=5 // pred_check_branch
      %249 = sbr.rel (%p246) target = $region12
    $region11: #{tpu_custom_call.1} parent=5 // pred_region
      %s250 = ssub.s32 %s14, 1
      // Predicated region
      $region13: #{tpu_custom_call.1} parent=11 // pred_check
        %p251 = pneg %p103
      $region14: #{tpu_custom_call.1} parent=11 // pred_check_branch
        %253 = sbr.rel (%p251) target = $region16
      $region15: #{tpu_custom_call.1} parent=11 // pred_region
        _
      $region16: #{tpu_custom_call.1} parent=11 // pred_fallthru
        _
      // Predicated region
      $region17: #{tpu_custom_call.1} parent=11 // pred_check
        %p254 = pneg %p124
      $region18: #{tpu_custom_call.1} parent=11 // pred_check_branch
        %256 = sbr.rel (%p254) target = $region20
      $region19: #{tpu_custom_call.1} parent=11 // pred_region
        _
      $region20: #{tpu_custom_call.1} parent=11 // pred_fallthru
        _
      // Predicated region
      $region21: #{tpu_custom_call.1} parent=11 // pred_check
        %p257 = pneg %p145
      $region22: #{tpu_custom_call.1} parent=11 // pred_check_branch
        %259 = sbr.rel (%p257) target = $region24
      $region23: #{tpu_custom_call.1} parent=11 // pred_region
        _
      $region24: #{tpu_custom_call.1} parent=11 // pred_fallthru
        _
      // Predicated region
      $region25: #{tpu_custom_call.1} parent=11 // pred_check
        %p260 = pneg %p166
      $region26: #{tpu_custom_call.1} parent=11 // pred_check_branch
        %262 = sbr.rel (%p260) target = $region28
      $region27: #{tpu_custom_call.1} parent=11 // pred_region
        _
      $region28: #{tpu_custom_call.1} parent=11 // pred_fallthru
        _
      // Predicated region
      $region29: #{tpu_custom_call.1} parent=11 // pred_check
        %p263 = pneg %p187
      $region30: #{tpu_custom_call.1} parent=11 // pred_check_branch
        %265 = sbr.rel (%p263) target = $region32
      $region31: #{tpu_custom_call.1} parent=11 // pred_region
        _
      $region32: #{tpu_custom_call.1} parent=11 // pred_fallthru
        _
      // Predicated region
      $region33: #{tpu_custom_call.1} parent=11 // pred_check
        %p266 = pneg %p208
      $region34: #{tpu_custom_call.1} parent=11 // pred_check_branch
        %268 = sbr.rel (%p266) target = $region36
      $region35: #{tpu_custom_call.1} parent=11 // pred_region
        _
      $region36: #{tpu_custom_call.1} parent=11 // pred_fallthru
        _
    $region12: #{tpu_custom_call.1} parent=5 // pred_fallthru
      _
    %p269 = scmp.lt.s32.totalorder %s14, 4
    // Predicated region
    $region37: #{tpu_custom_call.1} parent=5 // pred_check
      %p270 = pneg %p269
    $region38: #{tpu_custom_call.1} parent=5 // pred_check_branch
      %272 = sbr.rel (%p270) target = $region40
    $region39: #{tpu_custom_call.1} parent=5 // pred_region
      // Predicated region
      $region41: #{tpu_custom_call.1} parent=39 // pred_check
        %p273 = pneg %p48
      $region42: #{tpu_custom_call.1} parent=39 // pred_check_branch
        %275 = sbr.rel (%p273) target = $region44
      $region43: #{tpu_custom_call.1} parent=39 // pred_region
        %p276 = scmp.lt.s32.totalorder %s21, 1
        %s277 = scalar_select %p276, %s21, 1
        %p278 = scmp.lt.s32.totalorder %s22, 1
        %s279 = scalar_select %p278, %s22, 1
        %s280 = smul.addr %s279, 48
        %s281 = smul.addr %s277, 96
        %s282 = sadd.s32 %s280, %s281
        %s283 = smul.addr %s282, 8
        %s284 = scalar_lea.vmem %s0, %s283
      $region44: #{tpu_custom_call.1} parent=39 // pred_fallthru
        _
      // Predicated region
      $region45: #{tpu_custom_call.1} parent=39 // pred_check
        %p285 = pneg %p76
      $region46: #{tpu_custom_call.1} parent=39 // pred_check_branch
        %287 = sbr.rel (%p285) target = $region48
      $region47: #{tpu_custom_call.1} parent=39 // pred_region
        %s288 = smul.u32 8, %s22
        %p289 = scmp.lt.s32.totalorder %s21, 1
        %s290 = scalar_select %p289, %s21, 1
        %p291 = scmp.lt.s32.totalorder %s288, 15
        %s292 = scalar_select %p291, %s288, 15
        %s293 = smul.addr %s292, 2
        %s294 = smul.addr %s290, 32
        %s295 = sadd.s32 %s293, %s294
        %s296 = smul.addr %s295, 8
        %s297 = scalar_lea.vmem %s1, %s296
        %s298 = smul.u32 8, %s22
      $region48: #{tpu_custom_call.1} parent=39 // pred_fallthru
        _
    $region40: #{tpu_custom_call.1} parent=5 // pred_fallthru
      _
    %p299 = scmp.le.s32.totalorder 1, %s14
    %p300 = scmp.lt.s32.totalorder %s14, 5
    %p301 = pnand %p299, %p300
    %p302 = pneg %p301
    // Predicated region
    $region49: #{tpu_custom_call.1} parent=5 // pred_check
      _
    $region50: #{tpu_custom_call.1} parent=5 // pred_check_branch
      %304 = sbr.rel (%p301) target = $region52
    $region51: #{tpu_custom_call.1} parent=5 // pred_region
      %s305 = ssub.s32 %s14, 1
      %p306 = scmp.lt.s32.totalorder %s23, 1
      %s307 = scalar_select %p306, %s23, 1
      %p308 = scmp.lt.s32.totalorder %s24, 1
      %s309 = scalar_select %p308, %s24, 1
      %s310 = smul.addr %s309, 48
      %s311 = smul.addr %s307, 96
      %s312 = sadd.s32 %s310, %s311
      %s313 = smul.addr %s312, 8
      %s314 = scalar_lea.vmem %s0, %s313
      %p315 = pneg %p54
      %p316 = pneg %p51
      %s317 = smul.u32 8, %s24
      %p318 = scmp.lt.s32.totalorder %s23, 1
      %s319 = scalar_select %p318, %s23, 1
      %p320 = scmp.lt.s32.totalorder %s317, 15
      %s321 = scalar_select %p320, %s317, 15
      %s322 = smul.addr %s321, 2
      %s323 = smul.addr %s319, 32
      %s324 = sadd.s32 %s322, %s323
      %s325 = smul.addr %s324, 8
      %s326 = scalar_lea.vmem %s1, %s325
      %p327 = pneg %p82
      %p328 = pneg %p79
      %p329 = pneg %p103
      %p330 = pneg %p100
      %p331 = pneg %p124
      %p332 = pneg %p121
      %p333 = pneg %p145
      %p334 = pneg %p142
      %p335 = pneg %p166
      %p336 = pneg %p163
      %p337 = pneg %p187
      %p338 = pneg %p184
      %p339 = pneg %p208
      %p340 = pneg %p205
      %p341 = pneg %p236
      %p342 = pneg %p233
      %p343 = scmp.lt.s32.totalorder %s23, 1
      %s344 = scalar_select %p343, %s23, 1
      %p345 = scmp.lt.s32.totalorder %s24, 1
      %s346 = scalar_select %p345, %s24, 1
      %s347 = smul.addr %s346, 16
      %s348 = smul.addr %s344, 32
      %s349 = sadd.s32 %s347, %s348
      %s350 = smul.addr %s349, 8
      %s351 = scalar_lea.vmem %s8, %s350
      %p352 = scmp.lt.s32.totalorder %s23, 1
      %s353 = scalar_select %p352, %s23, 1
      %p354 = scmp.lt.s32.totalorder %s24, 1
      %s355 = scalar_select %p354, %s24, 1
      %s356 = smul.addr %s355, 48
      %s357 = smul.addr %s353, 96
      %s358 = sadd.s32 %s356, %s357
      %s359 = smul.addr %s358, 8
      %s360 = scalar_lea.vmem %s0, %s359
      %s361 = smul.u32 8, %s24
      %p362 = scmp.lt.s32.totalorder %s23, 1
      %s363 = scalar_select %p362, %s23, 1
      %p364 = scmp.lt.s32.totalorder %s361, 15
      %s365 = scalar_select %p364, %s361, 15
      %s366 = smul.addr %s365, 2
      %s367 = smul.addr %s363, 32
      %s368 = sadd.s32 %s366, %s367
      %s369 = smul.addr %s368, 8
      %s370 = scalar_lea.vmem %s1, %s369
      %s371 = smul.u32 8, %s24
      %p372 = scmp.lt.s32.totalorder %s23, 1
      %s373 = scalar_select %p372, %s23, 1
      %p374 = scmp.lt.s32.totalorder %s24, 1
      %s375 = scalar_select %p374, %s24, 1
      %s376 = smul.addr %s375, 16
      %s377 = smul.addr %s373, 32
      %s378 = sadd.s32 %s376, %s377
      %s379 = smul.addr %s378, 8
      %s380 = scalar_lea.vmem %s8, %s379
      %s381 = smul.u32 %s24, 8
      %v382 = vld [vmem:[%s360] sm:$0xff]
      %v383 = vld [vmem:[%s360 + $0x8] sm:$0xff]
      %v384 = vld [vmem:[%s360 + $0x10] sm:$0xff]
      %v385 = vld [vmem:[%s360 + $0x18] sm:$0x3]
      %v386 = vld [vmem:[%s360 + $0x20] sm:$0xff]
      %v387 = vld [vmem:[%s360 + $0x28] sm:$0xff]
      %v388 = vld [vmem:[%s360 + $0x30] sm:$0xff]
      %v389 = vld [vmem:[%s360 + $0x38] sm:$0x3]
      %v390 = vld [vmem:[%s360 + $0x40] sm:$0xff]
      %v391 = vld [vmem:[%s360 + $0x48] sm:$0xff]
      %v392 = vld [vmem:[%s360 + $0x50] sm:$0xff]
      %v393 = vld [vmem:[%s360 + $0x58] sm:$0x3]
      %v394 = vld [vmem:[%s360 + $0x60] sm:$0xff]
      %v395 = vld [vmem:[%s360 + $0x68] sm:$0xff]
      %v396 = vld [vmem:[%s360 + $0x70] sm:$0xff]
      %v397 = vld [vmem:[%s360 + $0x78] sm:$0x3]
      %v398 = vld [vmem:[%s360 + $0x80] sm:$0xff]
      %v399 = vld [vmem:[%s360 + $0x88] sm:$0xff]
      %v400 = vld [vmem:[%s360 + $0x90] sm:$0xff]
      %v401 = vld [vmem:[%s360 + $0x98] sm:$0x3]
      %v402 = vld [vmem:[%s360 + $0xa0] sm:$0xff]
      %v403 = vld [vmem:[%s360 + $0xa8] sm:$0xff]
      %v404 = vld [vmem:[%s360 + $0xb0] sm:$0xff]
      %v405 = vld [vmem:[%s360 + $0xb8] sm:$0x3]
      %v406 = vld [vmem:[%s360 + $0xc0] sm:$0xff]
      %v407 = vld [vmem:[%s360 + $0xc8] sm:$0xff]
      %v408 = vld [vmem:[%s360 + $0xd0] sm:$0xff]
      %v409 = vld [vmem:[%s360 + $0xd8] sm:$0x3]
      %v410 = vld [vmem:[%s360 + $0xe0] sm:$0xff]
      %v411 = vld [vmem:[%s360 + $0xe8] sm:$0xff]
      %v412 = vld [vmem:[%s360 + $0xf0] sm:$0xff]
      %v413 = vld [vmem:[%s360 + $0xf8] sm:$0x3]
      %v414 = vld [vmem:[%s360 + $0x100] sm:$0xff]
      %v415 = vld [vmem:[%s360 + $0x108] sm:$0xff]
      %v416 = vld [vmem:[%s360 + $0x110] sm:$0xff]
      %v417 = vld [vmem:[%s360 + $0x118] sm:$0x3]
      %v418 = vld [vmem:[%s360 + $0x120] sm:$0xff]
      %v419 = vld [vmem:[%s360 + $0x128] sm:$0xff]
      %v420 = vld [vmem:[%s360 + $0x130] sm:$0xff]
      %v421 = vld [vmem:[%s360 + $0x138] sm:$0x3]
      %v422 = vld [vmem:[%s360 + $0x140] sm:$0xff]
      %v423 = vld [vmem:[%s360 + $0x148] sm:$0xff]
      %v424 = vld [vmem:[%s360 + $0x150] sm:$0xff]
      %v425 = vld [vmem:[%s360 + $0x158] sm:$0x3]
      %v426 = vld [vmem:[%s360 + $0x160] sm:$0xff]
      %v427 = vld [vmem:[%s360 + $0x168] sm:$0xff]
      %v428 = vld [vmem:[%s360 + $0x170] sm:$0xff]
      %v429 = vld [vmem:[%s360 + $0x178] sm:$0x3]
      %v430 = vld [vmem:[%s2] sm:$0xf]
      %vm471 = vcmask 1046528
      %v472 = vrot.slane %v382, 1
      %v473 = vrot.slane %v383, 1
      %v474 = vsel %vm471, %v472, %v473
      %v475 = vrot.slane %v384, 1
      %v476 = vsel %vm471, %v473, %v475
      %v477 = vrot.slane %v385, 1
      %v478 = vsel %vm471, %v475, %v477
      %v479 = vrot.slane %v386, 1
      %v480 = vrot.slane %v387, 1
      %v481 = vsel %vm471, %v479, %v480
      %v482 = vrot.slane %v388, 1
      %v483 = vsel %vm471, %v480, %v482
      %v484 = vrot.slane %v389, 1
      %v485 = vsel %vm471, %v482, %v484
      %v486 = vrot.slane %v390, 1
      %v487 = vrot.slane %v391, 1
      %v488 = vsel %vm471, %v486, %v487
      %v489 = vrot.slane %v392, 1
      %v490 = vsel %vm471, %v487, %v489
      %v491 = vrot.slane %v393, 1
      %v492 = vsel %vm471, %v489, %v491
      %v493 = vrot.slane %v394, 1
      %v494 = vrot.slane %v395, 1
      %v495 = vsel %vm471, %v493, %v494
      %v496 = vrot.slane %v396, 1
      %v497 = vsel %vm471, %v494, %v496
      %v498 = vrot.slane %v397, 1
      %v499 = vsel %vm471, %v496, %v498
      %v500 = vrot.slane %v398, 1
      %v501 = vrot.slane %v399, 1
      %v502 = vsel %vm471, %v500, %v501
      %v503 = vrot.slane %v400, 1
      %v504 = vsel %vm471, %v501, %v503
      %v505 = vrot.slane %v401, 1
      %v506 = vsel %vm471, %v503, %v505
      %v507 = vrot.slane %v402, 1
      %v508 = vrot.slane %v403, 1
      %v509 = vsel %vm471, %v507, %v508
      %v510 = vrot.slane %v404, 1
      %v511 = vsel %vm471, %v508, %v510
      %v512 = vrot.slane %v405, 1
      %v513 = vsel %vm471, %v510, %v512
      %v514 = vrot.slane %v406, 1
      %v515 = vrot.slane %v407, 1
      %v516 = vsel %vm471, %v514, %v515
      %v517 = vrot.slane %v408, 1
      %v518 = vsel %vm471, %v515, %v517
      %v519 = vrot.slane %v409, 1
      %v520 = vsel %vm471, %v517, %v519
      %v521 = vrot.slane %v410, 1
      %v522 = vrot.slane %v411, 1
      %v523 = vsel %vm471, %v521, %v522
      %v524 = vrot.slane %v412, 1
      %v525 = vsel %vm471, %v522, %v524
      %v526 = vrot.slane %v413, 1
      %v527 = vsel %vm471, %v524, %v526
      %v528 = vrot.slane %v414, 1
      %v529 = vrot.slane %v415, 1
      %v530 = vsel %vm471, %v528, %v529
      %v531 = vrot.slane %v416, 1
      %v532 = vsel %vm471, %v529, %v531
      %v533 = vrot.slane %v417, 1
      %v534 = vsel %vm471, %v531, %v533
      %v535 = vrot.slane %v418, 1
      %v536 = vrot.slane %v419, 1
      %v537 = vsel %vm471, %v535, %v536
      %v538 = vrot.slane %v420, 1
      %v539 = vsel %vm471, %v536, %v538
      %v540 = vrot.slane %v421, 1
      %v541 = vsel %vm471, %v538, %v540
      %s542 = scalar_lea.vmem %s2, 4
      %v543 = vld [vmem:[%s542] sm:$0xf]
      %vm544 = vcmask 31744
      %v545 = vsel %vm544, %v474, 0
      %v547 = vsel %vm544, %v476, 0
      %v549 = vsel %vm544, %v478, 0
      %v551 = vsel %vm544, %v481, 0
      %v553 = vsel %vm544, %v483, 0
      %v555 = vsel %vm544, %v485, 0
      %v557 = vsel %vm544, %v488, 0
      %v559 = vsel %vm544, %v490, 0
      %v561 = vsel %vm544, %v492, 0
      %v563 = vsel %vm544, %v495, 0
      %v565 = vsel %vm544, %v497, 0
      %v567 = vsel %vm544, %v499, 0
      %v569 = vsel %vm544, %v502, 0
      %v571 = vsel %vm544, %v504, 0
      %v573 = vsel %vm544, %v506, 0
      %v575 = vsel %vm544, %v509, 0
      %v577 = vsel %vm544, %v511, 0
      %v579 = vsel %vm544, %v513, 0
      %v581 = vsel %vm544, %v516, 0
      %v583 = vsel %vm544, %v518, 0
      %v585 = vsel %vm544, %v520, 0
      %v587 = vsel %vm544, %v523, 0
      %v589 = vsel %vm544, %v525, 0
      %v591 = vsel %vm544, %v527, 0
      %v593 = vsel %vm544, %v530, 0
      %v595 = vsel %vm544, %v532, 0
      %v597 = vsel %vm544, %v534, 0
      %v599 = vsel %vm544, %v537, 0
      %v601 = vsel %vm544, %v539, 0
      %v603 = vsel %vm544, %v541, 0
      %vm605 = vcmask 1043456
      %v607 = vsel %vm605, %v543, 0
      %609 = vmatprep.subr.mxu0 0.0
      %610 = vmatpush1.msra.mxu0 %v607
      %611 = vmatprep.subr.mxu0 0.0
      %612 = vmatpush1.msra.mxu0 0.0
      %613 = vmatprep.subr.mxu0 0.0
      %614 = vmatpush1.msra.mxu0 0.0
      %615 = vmatprep.subr.mxu0 0.0
      %616 = vmatpush1.msra.mxu0 0.0
      %617 = vmatprep.subr.mxu0 0.0
      %618 = vmatpush1.msra.mxu0 0.0
      %619 = vmatprep.subr.mxu0 0.0
      %620 = vmatpush1.msra.mxu0 0.0
      %621 = vmatprep.subr.mxu0 0.0
      %622 = vmatpush1.msra.mxu0 0.0
      %623 = vmatprep.subr.mxu0 0.0
      %624 = vmatpush1.msra.mxu0 0.0
      %625 = vmatprep.subr.mxu0 0.0
      %626 = vmatpush1.msra.mxu0 0.0
      %627 = vmatprep.subr.mxu0 0.0
      %628 = vmatpush1.msra.mxu0 0.0
      %629 = vmatprep.subr.mxu0 0.0
      %630 = vmatpush1.msra.mxu0 0.0
      %631 = vmatprep.subr.mxu0 0.0
      %632 = vmatpush1.msra.mxu0 0.0
      %633 = vmatprep.subr.mxu0 0.0
      %634 = vmatpush1.msra.mxu0 0.0
      %635 = vmatprep.subr.mxu0 0.0
      %636 = vmatpush1.msra.mxu0 0.0
      %637 = vmatprep.subr.mxu0 0.0
      %638 = vmatpush1.msra.mxu0 0.0
      %639 = vmatprep.subr.mxu0 0.0
      %640 = vmatpush1.msra.mxu0 0.0
      %641 = vmatprep.subr.mxu0 0.0
      %642 = vmatpush1.msra.mxu0 0.0
      %643 = vmatprep.subr.mxu0 0.0
      %644 = vmatpush1.msra.mxu0 0.0
      %645 = vmatprep.subr.mxu0 0.0
      %646 = vmatpush1.msra.mxu0 0.0
      %647 = vmatprep.subr.mxu0 0.0
      %648 = vmatpush1.msra.mxu0 0.0
      %649 = vmatprep.subr.mxu0 0.0
      %650 = vmatpush1.msra.mxu0 0.0
      %651 = vmatprep.subr.mxu0 0.0
      %652 = vmatpush1.msra.mxu0 0.0
      %653 = vmatprep.subr.mxu0 0.0
      %654 = vmatpush1.msra.mxu0 0.0
      %655 = vmatprep.subr.mxu0 0.0
      %656 = vmatpush1.msra.mxu0 0.0
      %657 = vmatprep.subr.mxu0 0.0
      %658 = vmatpush1.msra.mxu0 0.0
      %659 = vmatprep.subr.mxu0 0.0
      %660 = vmatpush1.msra.mxu0 0.0
      %661 = vmatprep.subr.mxu0 0.0
      %662 = vmatpush1.msra.mxu0 0.0
      %663 = vmatprep.subr.mxu0 0.0
      %664 = vmatpush1.msra.mxu0 0.0
      %665 = vmatprep.subr.mxu0 0.0
      %666 = vmatpush1.msra.mxu0 0.0
      %667 = vmatprep.subr.mxu0 0.0
      %668 = vmatpush1.msra.mxu0 0.0
      %669 = vmatprep.subr.mxu0 0.0
      %670 = vmatpush1.msra.mxu0 0.0
      %671 = vmatprep.subr.mxu0 0.0
      %672 = vmatpush1.msra.mxu0 0.0
      %673 = vmatprep.mubr.f32.mxu0 0.0
      %674 = vmatmul.mubr.f32.gmra.mrb[0].mxu0 %v545
      %v675 = vpop.f32.mrb[0].mxu0
      %v676 = vadd.f32 0.0, %v675
      %v677 = vpop.f32.mrb[0].mxu0
      %678 = vmatprep.mubr.f32.mxu0 0.0
      %679 = vmatmul.mubr.f32.gmra.mrb[0].mxu0 %v547
      %v680 = vpop.f32.mrb[0].mxu0
      %v681 = vadd.f32 0.0, %v680
      %v682 = vpop.f32.mrb[0].mxu0
      %683 = vmatprep.mubr.f32.mxu0 0.0
      %684 = vmatmul.mubr.f32.gmra.mrb[0].mxu0 %v549
      %v685 = vpop.f32.mrb[0].mxu0
      %v686 = vadd.f32 0.0, %v685
      %v687 = vpop.f32.mrb[0].mxu0
      %688 = vmatprep.mubr.f32.mxu0 0.0
      %689 = vmatmul.mubr.f32.gmra.mrb[0].mxu0 %v551
      %v690 = vpop.f32.mrb[0].mxu0
      %v691 = vadd.f32 0.0, %v690
      %v692 = vpop.f32.mrb[0].mxu0
      %693 = vmatprep.mubr.f32.mxu0 0.0
      %694 = vmatmul.mubr.f32.gmra.mrb[0].mxu0 %v553
      %v695 = vpop.f32.mrb[0].mxu0
      %v696 = vadd.f32 0.0, %v695
      %v697 = vpop.f32.mrb[0].mxu0
      %698 = vmatprep.mubr.f32.mxu0 0.0
      %699 = vmatmul.mubr.f32.gmra.mrb[0].mxu0 %v555
      %v700 = vpop.f32.mrb[0].mxu0
      %v701 = vadd.f32 0.0, %v700
      %v702 = vpop.f32.mrb[0].mxu0
      %703 = vmatprep.mubr.f32.mxu0 0.0
      %704 = vmatmul.mubr.f32.gmra.mrb[0].mxu0 %v557
      %v705 = vpop.f32.mrb[0].mxu0
      %v706 = vadd.f32 0.0, %v705
      %v707 = vpop.f32.mrb[0].mxu0
      %708 = vmatprep.mubr.f32.mxu0 0.0
      %709 = vmatmul.mubr.f32.gmra.mrb[0].mxu0 %v559
      %v710 = vpop.f32.mrb[0].mxu0
      %v711 = vadd.f32 0.0, %v710
      %v712 = vpop.f32.mrb[0].mxu0
      %713 = vmatprep.mubr.f32.mxu0 0.0
      %714 = vmatmul.mubr.f32.gmra.mrb[0].mxu0 %v561
      %v715 = vpop.f32.mrb[0].mxu0
      %v716 = vadd.f32 0.0, %v715
      %v717 = vpop.f32.mrb[0].mxu0
      %718 = vmatprep.mubr.f32.mxu0 0.0
      %719 = vmatmul.mubr.f32.gmra.mrb[0].mxu0 %v563
      %v720 = vpop.f32.mrb[0].mxu0
      %v721 = vadd.f32 0.0, %v720
      %v722 = vpop.f32.mrb[0].mxu0
      %723 = vmatprep.mubr.f32.mxu0 0.0
      %724 = vmatmul.mubr.f32.gmra.mrb[0].mxu0 %v565
      %v725 = vpop.f32.mrb[0].mxu0
      %v726 = vadd.f32 0.0, %v725
      %v727 = vpop.f32.mrb[0].mxu0
      %728 = vmatprep.mubr.f32.mxu0 0.0
      %729 = vmatmul.mubr.f32.gmra.mrb[0].mxu0 %v567
      %v730 = vpop.f32.mrb[0].mxu0
      %v731 = vadd.f32 0.0, %v730
      %v732 = vpop.f32.mrb[0].mxu0
      %733 = vmatprep.mubr.f32.mxu0 0.0
      %734 = vmatmul.mubr.f32.gmra.mrb[0].mxu0 %v569
      %v735 = vpop.f32.mrb[0].mxu0
      %v736 = vadd.f32 0.0, %v735
      %v737 = vpop.f32.mrb[0].mxu0
      %738 = vmatprep.mubr.f32.mxu0 0.0
      %739 = vmatmul.mubr.f32.gmra.mrb[0].mxu0 %v571
      %v740 = vpop.f32.mrb[0].mxu0
      %v741 = vadd.f32 0.0, %v740
      %v742 = vpop.f32.mrb[0].mxu0
      %743 = vmatprep.mubr.f32.mxu0 0.0
      %744 = vmatmul.mubr.f32.gmra.mrb[0].mxu0 %v573
      %v745 = vpop.f32.mrb[0].mxu0
      %v746 = vadd.f32 0.0, %v745
      %v747 = vpop.f32.mrb[0].mxu0
      %748 = vmatprep.mubr.f32.mxu0 0.0
      %749 = vmatmul.mubr.f32.gmra.mrb[0].mxu0 %v575
      %v750 = vpop.f32.mrb[0].mxu0
      %v751 = vadd.f32 0.0, %v750
      %v752 = vpop.f32.mrb[0].mxu0
      %753 = vmatprep.mubr.f32.mxu0 0.0
      %754 = vmatmul.mubr.f32.gmra.mrb[0].mxu0 %v577
      %v755 = vpop.f32.mrb[0].mxu0
      %v756 = vadd.f32 0.0, %v755
      %v757 = vpop.f32.mrb[0].mxu0
      %758 = vmatprep.mubr.f32.mxu0 0.0
      %759 = vmatmul.mubr.f32.gmra.mrb[0].mxu0 %v579
      %v760 = vpop.f32.mrb[0].mxu0
      %v761 = vadd.f32 0.0, %v760
      %v762 = vpop.f32.mrb[0].mxu0
      %763 = vmatprep.mubr.f32.mxu0 0.0
      %764 = vmatmul.mubr.f32.gmra.mrb[0].mxu0 %v581
      %v765 = vpop.f32.mrb[0].mxu0
      %v766 = vadd.f32 0.0, %v765
      %v767 = vpop.f32.mrb[0].mxu0
      %768 = vmatprep.mubr.f32.mxu0 0.0
      %769 = vmatmul.mubr.f32.gmra.mrb[0].mxu0 %v583
      %v770 = vpop.f32.mrb[0].mxu0
      %v771 = vadd.f32 0.0, %v770
      %v772 = vpop.f32.mrb[0].mxu0
      %773 = vmatprep.mubr.f32.mxu0 0.0
      %774 = vmatmul.mubr.f32.gmra.mrb[0].mxu0 %v585
      %v775 = vpop.f32.mrb[0].mxu0
      %v776 = vadd.f32 0.0, %v775
      %v777 = vpop.f32.mrb[0].mxu0
      %778 = vmatprep.mubr.f32.mxu0 0.0
      %779 = vmatmul.mubr.f32.gmra.mrb[0].mxu0 %v587
      %v780 = vpop.f32.mrb[0].mxu0
      %v781 = vadd.f32 0.0, %v780
      %v782 = vpop.f32.mrb[0].mxu0
      %783 = vmatprep.mubr.f32.mxu0 0.0
      %784 = vmatmul.mubr.f32.gmra.mrb[0].mxu0 %v589
      %v785 = vpop.f32.mrb[0].mxu0
      %v786 = vadd.f32 0.0, %v785
      %v787 = vpop.f32.mrb[0].mxu0
      %788 = vmatprep.mubr.f32.mxu0 0.0
      %789 = vmatmul.mubr.f32.gmra.mrb[0].mxu0 %v591
      %v790 = vpop.f32.mrb[0].mxu0
      %v791 = vadd.f32 0.0, %v790
      %v792 = vpop.f32.mrb[0].mxu0
      %793 = vmatprep.mubr.f32.mxu0 0.0
      %794 = vmatmul.mubr.f32.gmra.mrb[0].mxu0 %v593
      %v795 = vpop.f32.mrb[0].mxu0
      %v796 = vadd.f32 0.0, %v795
      %v797 = vpop.f32.mrb[0].mxu0
      %798 = vmatprep.mubr.f32.mxu0 0.0
      %799 = vmatmul.mubr.f32.gmra.mrb[0].mxu0 %v595
      %v800 = vpop.f32.mrb[0].mxu0
      %v801 = vadd.f32 0.0, %v800
      %v802 = vpop.f32.mrb[0].mxu0
      %803 = vmatprep.mubr.f32.mxu0 0.0
      %804 = vmatmul.mubr.f32.gmra.mrb[0].mxu0 %v597
      %v805 = vpop.f32.mrb[0].mxu0
      %v806 = vadd.f32 0.0, %v805
      %v807 = vpop.f32.mrb[0].mxu0
      %808 = vmatprep.mubr.f32.mxu0 0.0
      %809 = vmatmul.mubr.f32.gmra.mrb[0].mxu0 %v599
      %v810 = vpop.f32.mrb[0].mxu0
      %v811 = vadd.f32 0.0, %v810
      %v812 = vpop.f32.mrb[0].mxu0
      %813 = vmatprep.mubr.f32.mxu0 0.0
      %814 = vmatmul.mubr.f32.gmra.mrb[0].mxu0 %v601
      %v815 = vpop.f32.mrb[0].mxu0
      %v816 = vadd.f32 0.0, %v815
      %v817 = vpop.f32.mrb[0].mxu0
      %818 = vmatprep.mubr.f32.mxu0 0.0
      %819 = vmatmul.mubr.f32.gmra.mrb[0].mxu0 %v603
      %v820 = vpop.f32.mrb[0].mxu0
      %v821 = vadd.f32 0.0, %v820
      %v822 = vpop.f32.mrb[0].mxu0
      %823 = vdwg.mxu0
      %v824 = vsel %vm544, %v382, 0
      %v826 = vsel %vm544, %v383, 0
      %v828 = vsel %vm544, %v384, 0
      %v830 = vsel %vm544, %v386, 0
      %v832 = vsel %vm544, %v387, 0
      %v834 = vsel %vm544, %v388, 0
      %v836 = vsel %vm544, %v390, 0
      %v838 = vsel %vm544, %v391, 0
      %v840 = vsel %vm544, %v392, 0
      %v842 = vsel %vm544, %v394, 0
      %v844 = vsel %vm544, %v395, 0
      %v846 = vsel %vm544, %v396, 0
      %v848 = vsel %vm544, %v398, 0
      %v850 = vsel %vm544, %v399, 0
      %v852 = vsel %vm544, %v400, 0
      %v854 = vsel %vm544, %v402, 0
      %v856 = vsel %vm544, %v403, 0
      %v858 = vsel %vm544, %v404, 0
      %v860 = vsel %vm544, %v406, 0
      %v862 = vsel %vm544, %v407, 0
      %v864 = vsel %vm544, %v408, 0
      %v866 = vsel %vm544, %v410, 0
      %v868 = vsel %vm544, %v411, 0
      %v870 = vsel %vm544, %v412, 0
      %v872 = vsel %vm544, %v414, 0
      %v874 = vsel %vm544, %v415, 0
      %v876 = vsel %vm544, %v416, 0
      %v878 = vsel %vm544, %v418, 0
      %v880 = vsel %vm544, %v419, 0
      %v882 = vsel %vm544, %v420, 0
      %v885 = vsel %vm605, %v430, 0
      %887 = vmatprep.subr.mxu0 0.0
      %888 = vmatpush1.msra.mxu0 %v885
      %889 = vmatprep.subr.mxu0 0.0
      %890 = vmatpush1.msra.mxu0 0.0
      %891 = vmatprep.subr.mxu0 0.0
      %892 = vmatpush1.msra.mxu0 0.0
      %893 = vmatprep.subr.mxu0 0.0
      %894 = vmatpush1.msra.mxu0 0.0
      %895 = vmatprep.subr.mxu0 0.0
      %896 = vmatpush1.msra.mxu0 0.0
      %897 = vmatprep.subr.mxu0 0.0
      %898 = vmatpush1.msra.mxu0 0.0
      %899 = vmatprep.subr.mxu0 0.0
      %900 = vmatpush1.msra.mxu0 0.0
      %901 = vmatprep.subr.mxu0 0.0
      %902 = vmatpush1.msra.mxu0 0.0
      %903 = vmatprep.subr.mxu0 0.0
      %904 = vmatpush1.msra.mxu0 0.0
      %905 = vmatprep.subr.mxu0 0.0
      %906 = vmatpush1.msra.mxu0 0.0
      %907 = vmatprep.subr.mxu0 0.0
      %908 = vmatpush1.msra.mxu0 0.0
      %909 = vmatprep.subr.mxu0 0.0
      %910 = vmatpush1.msra.mxu0 0.0
      %911 = vmatprep.subr.mxu0 0.0
      %912 = vmatpush1.msra.mxu0 0.0
      %913 = vmatprep.subr.mxu0 0.0
      %914 = vmatpush1.msra.mxu0 0.0
      %915 = vmatprep.subr.mxu0 0.0
      %916 = vmatpush1.msra.mxu0 0.0
      %917 = vmatprep.subr.mxu0 0.0
      %918 = vmatpush1.msra.mxu0 0.0
      %919 = vmatprep.subr.mxu0 0.0
      %920 = vmatpush1.msra.mxu0 0.0
      %921 = vmatprep.subr.mxu0 0.0
      %922 = vmatpush1.msra.mxu0 0.0
      %923 = vmatprep.subr.mxu0 0.0
      %924 = vmatpush1.msra.mxu0 0.0
      %925 = vmatprep.subr.mxu0 0.0
      %926 = vmatpush1.msra.mxu0 0.0
      %927 = vmatprep.subr.mxu0 0.0
      %928 = vmatpush1.msra.mxu0 0.0
      %929 = vmatprep.subr.mxu0 0.0
      %930 = vmatpush1.msra.mxu0 0.0
      %931 = vmatprep.subr.mxu0 0.0
      %932 = vmatpush1.msra.mxu0 0.0
      %933 = vmatprep.subr.mxu0 0.0
      %934 = vmatpush1.msra.mxu0 0.0
      %935 = vmatprep.subr.mxu0 0.0
      %936 = vmatpush1.msra.mxu0 0.0
      %937 = vmatprep.subr.mxu0 0.0
      %938 = vmatpush1.msra.mxu0 0.0
      %939 = vmatprep.subr.mxu0 0.0
      %940 = vmatpush1.msra.mxu0 0.0
      %941 = vmatprep.subr.mxu0 0.0
      %942 = vmatpush1.msra.mxu0 0.0
      %943 = vmatprep.subr.mxu0 0.0
      %944 = vmatpush1.msra.mxu0 0.0
      %945 = vmatprep.subr.mxu0 0.0
      %946 = vmatpush1.msra.mxu0 0.0
      %947 = vmatprep.subr.mxu0 0.0
      %948 = vmatpush1.msra.mxu0 0.0
      %949 = vmatprep.subr.mxu0 0.0
      %950 = vmatpush1.msra.mxu0 0.0
      %951 = vmatprep.mubr.f32.mxu0 0.0
      %952 = vmatmul.mubr.f32.gmra.mrb[0].mxu0 %v824
      %v953 = vpop.f32.mrb[0].mxu0
      %v954 = vadd.f32 %v676, %v953
      %v955 = vpop.f32.mrb[0].mxu0
      %956 = vmatprep.mubr.f32.mxu0 0.0
      %957 = vmatmul.mubr.f32.gmra.mrb[0].mxu0 %v826
      %v958 = vpop.f32.mrb[0].mxu0
      %v959 = vadd.f32 %v681, %v958
      %v960 = vpop.f32.mrb[0].mxu0
      %961 = vmatprep.mubr.f32.mxu0 0.0
      %962 = vmatmul.mubr.f32.gmra.mrb[0].mxu0 %v828
      %v963 = vpop.f32.mrb[0].mxu0
      %v964 = vadd.f32 %v686, %v963
      %v965 = vpop.f32.mrb[0].mxu0
      %966 = vmatprep.mubr.f32.mxu0 0.0
      %967 = vmatmul.mubr.f32.gmra.mrb[0].mxu0 %v830
      %v968 = vpop.f32.mrb[0].mxu0
      %v969 = vadd.f32 %v691, %v968
      %v970 = vpop.f32.mrb[0].mxu0
      %971 = vmatprep.mubr.f32.mxu0 0.0
      %972 = vmatmul.mubr.f32.gmra.mrb[0].mxu0 %v832
      %v973 = vpop.f32.mrb[0].mxu0
      %v974 = vadd.f32 %v696, %v973
      %v975 = vpop.f32.mrb[0].mxu0
      %976 = vmatprep.mubr.f32.mxu0 0.0
      %977 = vmatmul.mubr.f32.gmra.mrb[0].mxu0 %v834
      %v978 = vpop.f32.mrb[0].mxu0
      %v979 = vadd.f32 %v701, %v978
      %v980 = vpop.f32.mrb[0].mxu0
      %981 = vmatprep.mubr.f32.mxu0 0.0
      %982 = vmatmul.mubr.f32.gmra.mrb[0].mxu0 %v836
      %v983 = vpop.f32.mrb[0].mxu0
      %v984 = vadd.f32 %v706, %v983
      %v985 = vpop.f32.mrb[0].mxu0
      %986 = vmatprep.mubr.f32.mxu0 0.0
      %987 = vmatmul.mubr.f32.gmra.mrb[0].mxu0 %v838
      %v988 = vpop.f32.mrb[0].mxu0
      %v989 = vadd.f32 %v711, %v988
      %v990 = vpop.f32.mrb[0].mxu0
      %991 = vmatprep.mubr.f32.mxu0 0.0
      %992 = vmatmul.mubr.f32.gmra.mrb[0].mxu0 %v840
      %v993 = vpop.f32.mrb[0].mxu0
      %v994 = vadd.f32 %v716, %v993
      %v995 = vpop.f32.mrb[0].mxu0
      %996 = vmatprep.mubr.f32.mxu0 0.0
      %997 = vmatmul.mubr.f32.gmra.mrb[0].mxu0 %v842
      %v998 = vpop.f32.mrb[0].mxu0
      %v999 = vadd.f32 %v721, %v998
      %v1000 = vpop.f32.mrb[0].mxu0
      %1001 = vmatprep.mubr.f32.mxu0 0.0
      %1002 = vmatmul.mubr.f32.gmra.mrb[0].mxu0 %v844
      %v1003 = vpop.f32.mrb[0].mxu0
      %v1004 = vadd.f32 %v726, %v1003
      %v1005 = vpop.f32.mrb[0].mxu0
      %1006 = vmatprep.mubr.f32.mxu0 0.0
      %1007 = vmatmul.mubr.f32.gmra.mrb[0].mxu0 %v846
      %v1008 = vpop.f32.mrb[0].mxu0
      %v1009 = vadd.f32 %v731, %v1008
      %v1010 = vpop.f32.mrb[0].mxu0
      %1011 = vmatprep.mubr.f32.mxu0 0.0
      %1012 = vmatmul.mubr.f32.gmra.mrb[0].mxu0 %v848
      %v1013 = vpop.f32.mrb[0].mxu0
      %v1014 = vadd.f32 %v736, %v1013
      %v1015 = vpop.f32.mrb[0].mxu0
      %1016 = vmatprep.mubr.f32.mxu0 0.0
      %1017 = vmatmul.mubr.f32.gmra.mrb[0].mxu0 %v850
      %v1018 = vpop.f32.mrb[0].mxu0
      %v1019 = vadd.f32 %v741, %v1018
      %v1020 = vpop.f32.mrb[0].mxu0
      %1021 = vmatprep.mubr.f32.mxu0 0.0
      %1022 = vmatmul.mubr.f32.gmra.mrb[0].mxu0 %v852
      %v1023 = vpop.f32.mrb[0].mxu0
      %v1024 = vadd.f32 %v746, %v1023
      %v1025 = vpop.f32.mrb[0].mxu0
      %1026 = vmatprep.mubr.f32.mxu0 0.0
      %1027 = vmatmul.mubr.f32.gmra.mrb[0].mxu0 %v854
      %v1028 = vpop.f32.mrb[0].mxu0
      %v1029 = vadd.f32 %v751, %v1028
      %v1030 = vpop.f32.mrb[0].mxu0
      %1031 = vmatprep.mubr.f32.mxu0 0.0
      %1032 = vmatmul.mubr.f32.gmra.mrb[0].mxu0 %v856
      %v1033 = vpop.f32.mrb[0].mxu0
      %v1034 = vadd.f32 %v756, %v1033
      %v1035 = vpop.f32.mrb[0].mxu0
      %1036 = vmatprep.mubr.f32.mxu0 0.0
      %1037 = vmatmul.mubr.f32.gmra.mrb[0].mxu0 %v858
      %v1038 = vpop.f32.mrb[0].mxu0
      %v1039 = vadd.f32 %v761, %v1038
      %v1040 = vpop.f32.mrb[0].mxu0
      %1041 = vmatprep.mubr.f32.mxu0 0.0
      %1042 = vmatmul.mubr.f32.gmra.mrb[0].mxu0 %v860
      %v1043 = vpop.f32.mrb[0].mxu0
      %v1044 = vadd.f32 %v766, %v1043
      %v1045 = vpop.f32.mrb[0].mxu0
      %1046 = vmatprep.mubr.f32.mxu0 0.0
      %1047 = vmatmul.mubr.f32.gmra.mrb[0].mxu0 %v862
      %v1048 = vpop.f32.mrb[0].mxu0
      %v1049 = vadd.f32 %v771, %v1048
      %v1050 = vpop.f32.mrb[0].mxu0
      %1051 = vmatprep.mubr.f32.mxu0 0.0
      %1052 = vmatmul.mubr.f32.gmra.mrb[0].mxu0 %v864
      %v1053 = vpop.f32.mrb[0].mxu0
      %v1054 = vadd.f32 %v776, %v1053
      %v1055 = vpop.f32.mrb[0].mxu0
      %1056 = vmatprep.mubr.f32.mxu0 0.0
      %1057 = vmatmul.mubr.f32.gmra.mrb[0].mxu0 %v866
      %v1058 = vpop.f32.mrb[0].mxu0
      %v1059 = vadd.f32 %v781, %v1058
      %v1060 = vpop.f32.mrb[0].mxu0
      %1061 = vmatprep.mubr.f32.mxu0 0.0
      %1062 = vmatmul.mubr.f32.gmra.mrb[0].mxu0 %v868
      %v1063 = vpop.f32.mrb[0].mxu0
      %v1064 = vadd.f32 %v786, %v1063
      %v1065 = vpop.f32.mrb[0].mxu0
      %1066 = vmatprep.mubr.f32.mxu0 0.0
      %1067 = vmatmul.mubr.f32.gmra.mrb[0].mxu0 %v870
      %v1068 = vpop.f32.mrb[0].mxu0
      %v1069 = vadd.f32 %v791, %v1068
      %v1070 = vpop.f32.mrb[0].mxu0
      %1071 = vmatprep.mubr.f32.mxu0 0.0
      %1072 = vmatmul.mubr.f32.gmra.mrb[0].mxu0 %v872
      %v1073 = vpop.f32.mrb[0].mxu0
      %v1074 = vadd.f32 %v796, %v1073
      %v1075 = vpop.f32.mrb[0].mxu0
      %1076 = vmatprep.mubr.f32.mxu0 0.0
      %1077 = vmatmul.mubr.f32.gmra.mrb[0].mxu0 %v874
      %v1078 = vpop.f32.mrb[0].mxu0
      %v1079 = vadd.f32 %v801, %v1078
      %v1080 = vpop.f32.mrb[0].mxu0
      %1081 = vmatprep.mubr.f32.mxu0 0.0
      %1082 = vmatmul.mubr.f32.gmra.mrb[0].mxu0 %v876
      %v1083 = vpop.f32.mrb[0].mxu0
      %v1084 = vadd.f32 %v806, %v1083
      %v1085 = vpop.f32.mrb[0].mxu0
      %1086 = vmatprep.mubr.f32.mxu0 0.0
      %1087 = vmatmul.mubr.f32.gmra.mrb[0].mxu0 %v878
      %v1088 = vpop.f32.mrb[0].mxu0
      %v1089 = vadd.f32 %v811, %v1088
      %v1090 = vpop.f32.mrb[0].mxu0
      %1091 = vmatprep.mubr.f32.mxu0 0.0
      %1092 = vmatmul.mubr.f32.gmra.mrb[0].mxu0 %v880
      %v1093 = vpop.f32.mrb[0].mxu0
      %v1094 = vadd.f32 %v816, %v1093
      %v1095 = vpop.f32.mrb[0].mxu0
      %1096 = vmatprep.mubr.f32.mxu0 0.0
      %1097 = vmatmul.mubr.f32.gmra.mrb[0].mxu0 %v882
      %v1098 = vpop.f32.mrb[0].mxu0
      %v1099 = vadd.f32 %v821, %v1098
      %v1100 = vpop.f32.mrb[0].mxu0
      %1101 = vdwg.mxu0
      %vm1102 = vcmask 1045504
      %v1103 = vrot.slane %v382, 2
      %v1104 = vrot.slane %v383, 2
      %v1105 = vsel %vm1102, %v1103, %v1104
      %v1106 = vrot.slane %v384, 2
      %v1107 = vsel %vm1102, %v1104, %v1106
      %v1108 = vrot.slane %v385, 2
      %v1109 = vsel %vm1102, %v1106, %v1108
      %v1110 = vrot.slane %v386, 2
      %v1111 = vrot.slane %v387, 2
      %v1112 = vsel %vm1102, %v1110, %v1111
      %v1113 = vrot.slane %v388, 2
      %v1114 = vsel %vm1102, %v1111, %v1113
      %v1115 = vrot.slane %v389, 2
      %v1116 = vsel %vm1102, %v1113, %v1115
      %v1117 = vrot.slane %v390, 2
      %v1118 = vrot.slane %v391, 2
      %v1119 = vsel %vm1102, %v1117, %v1118
      %v1120 = vrot.slane %v392, 2
      %v1121 = vsel %vm1102, %v1118, %v1120
      %v1122 = vrot.slane %v393, 2
      %v1123 = vsel %vm1102, %v1120, %v1122
      %v1124 = vrot.slane %v394, 2
      %v1125 = vrot.slane %v395, 2
      %v1126 = vsel %vm1102, %v1124, %v1125
      %v1127 = vrot.slane %v396, 2
      %v1128 = vsel %vm1102, %v1125, %v1127
      %v1129 = vrot.slane %v397, 2
      %v1130 = vsel %vm1102, %v1127, %v1129
      %v1131 = vrot.slane %v398, 2
      %v1132 = vrot.slane %v399, 2
      %v1133 = vsel %vm1102, %v1131, %v1132
      %v1134 = vrot.slane %v400, 2
      %v1135 = vsel %vm1102, %v1132, %v1134
      %v1136 = vrot.slane %v401, 2
      %v1137 = vsel %vm1102, %v1134, %v1136
      %v1138 = vrot.slane %v402, 2
      %v1139 = vrot.slane %v403, 2
      %v1140 = vsel %vm1102, %v1138, %v1139
      %v1141 = vrot.slane %v404, 2
      %v1142 = vsel %vm1102, %v1139, %v1141
      %v1143 = vrot.slane %v405, 2
      %v1144 = vsel %vm1102, %v1141, %v1143
      %v1145 = vrot.slane %v406, 2
      %v1146 = vrot.slane %v407, 2
      %v1147 = vsel %vm1102, %v1145, %v1146
      %v1148 = vrot.slane %v408, 2
      %v1149 = vsel %vm1102, %v1146, %v1148
      %v1150 = vrot.slane %v409, 2
      %v1151 = vsel %vm1102, %v1148, %v1150
      %v1152 = vrot.slane %v410, 2
      %v1153 = vrot.slane %v411, 2
      %v1154 = vsel %vm1102, %v1152, %v1153
      %v1155 = vrot.slane %v412, 2
      %v1156 = vsel %vm1102, %v1153, %v1155
      %v1157 = vrot.slane %v413, 2
      %v1158 = vsel %vm1102, %v1155, %v1157
      %v1159 = vrot.slane %v414, 2
      %v1160 = vrot.slane %v415, 2
      %v1161 = vsel %vm1102, %v1159, %v1160
      %v1162 = vrot.slane %v416, 2
      %v1163 = vsel %vm1102, %v1160, %v1162
      %v1164 = vrot.slane %v417, 2
      %v1165 = vsel %vm1102, %v1162, %v1164
      %v1166 = vrot.slane %v418, 2
      %v1167 = vrot.slane %v419, 2
      %v1168 = vsel %vm1102, %v1166, %v1167
      %v1169 = vrot.slane %v420, 2
      %v1170 = vsel %vm1102, %v1167, %v1169
      %v1171 = vrot.slane %v421, 2
      %v1172 = vsel %vm1102, %v1169, %v1171
      %s1173 = scalar_lea.vmem %s2, 8
      %v1174 = vld [vmem:[%s1173] sm:$0xf]
      %v1175 = vsel %vm544, %v1105, 0
      %v1177 = vsel %vm544, %v1107, 0
      %v1179 = vsel %vm544, %v1109, 0
      %v1181 = vsel %vm544, %v1112, 0
      %v1183 = vsel %vm544, %v1114, 0
      %v1185 = vsel %vm544, %v1116, 0
      %v1187 = vsel %vm544, %v1119, 0
      %v1189 = vsel %vm544, %v1121, 0
      %v1191 = vsel %vm544, %v1123, 0
      %v1193 = vsel %vm544, %v1126, 0
      %v1195 = vsel %vm544, %v1128, 0
      %v1197 = vsel %vm544, %v1130, 0
      %v1199 = vsel %vm544, %v1133, 0
      %v1201 = vsel %vm544, %v1135, 0
      %v1203 = vsel %vm544, %v1137, 0
      %v1205 = vsel %vm544, %v1140, 0
      %v1207 = vsel %vm544, %v1142, 0
      %v1209 = vsel %vm544, %v1144, 0
      %v1211 = vsel %vm544, %v1147, 0
      %v1213 = vsel %vm544, %v1149, 0
      %v1215 = vsel %vm544, %v1151, 0
      %v1217 = vsel %vm544, %v1154, 0
      %v1219 = vsel %vm544, %v1156, 0
      %v1221 = vsel %vm544, %v1158, 0
      %v1223 = vsel %vm544, %v1161, 0
      %v1225 = vsel %vm544, %v1163, 0
      %v1227 = vsel %vm544, %v1165, 0
      %v1229 = vsel %vm544, %v1168, 0
      %v1231 = vsel %vm544, %v1170, 0
      %v1233 = vsel %vm544, %v1172, 0
      %v1236 = vsel %vm605, %v1174, 0
      %1238 = vmatprep.subr.mxu0 0.0
      %1239 = vmatpush1.msra.mxu0 %v1236
      %1240 = vmatprep.subr.mxu0 0.0
      %1241 = vmatpush1.msra.mxu0 0.0
      %1242 = vmatprep.subr.mxu0 0.0
      %1243 = vmatpush1.msra.mxu0 0.0
      %1244 = vmatprep.subr.mxu0 0.0
      %1245 = vmatpush1.msra.mxu0 0.0
      %1246 = vmatprep.subr.mxu0 0.0
      %1247 = vmatpush1.msra.mxu0 0.0
      %1248 = vmatprep.subr.mxu0 0.0
      %1249 = vmatpush1.msra.mxu0 0.0
      %1250 = vmatprep.subr.mxu0 0.0
      %1251 = vmatpush1.msra.mxu0 0.0
      %1252 = vmatprep.subr.mxu0 0.0
      %1253 = vmatpush1.msra.mxu0 0.0
      %1254 = vmatprep.subr.mxu0 0.0
      %1255 = vmatpush1.msra.mxu0 0.0
      %1256 = vmatprep.subr.mxu0 0.0
      %1257 = vmatpush1.msra.mxu0 0.0
      %1258 = vmatprep.subr.mxu0 0.0
      %1259 = vmatpush1.msra.mxu0 0.0
      %1260 = vmatprep.subr.mxu0 0.0
      %1261 = vmatpush1.msra.mxu0 0.0
      %1262 = vmatprep.subr.mxu0 0.0
      %1263 = vmatpush1.msra.mxu0 0.0
      %1264 = vmatprep.subr.mxu0 0.0
      %1265 = vmatpush1.msra.mxu0 0.0
      %1266 = vmatprep.subr.mxu0 0.0
      %1267 = vmatpush1.msra.mxu0 0.0
      %1268 = vmatprep.subr.mxu0 0.0
      %1269 = vmatpush1.msra.mxu0 0.0
      %1270 = vmatprep.subr.mxu0 0.0
      %1271 = vmatpush1.msra.mxu0 0.0
      %1272 = vmatprep.subr.mxu0 0.0
      %1273 = vmatpush1.msra.mxu0 0.0
      %1274 = vmatprep.subr.mxu0 0.0
      %1275 = vmatpush1.msra.mxu0 0.0
      %1276 = vmatprep.subr.mxu0 0.0
      %1277 = vmatpush1.msra.mxu0 0.0
      %1278 = vmatprep.subr.mxu0 0.0
      %1279 = vmatpush1.msra.mxu0 0.0
      %1280 = vmatprep.subr.mxu0 0.0
      %1281 = vmatpush1.msra.mxu0 0.0
      %1282 = vmatprep.subr.mxu0 0.0
      %1283 = vmatpush1.msra.mxu0 0.0
      %1284 = vmatprep.subr.mxu0 0.0
      %1285 = vmatpush1.msra.mxu0 0.0
      %1286 = vmatprep.subr.mxu0 0.0
      %1287 = vmatpush1.msra.mxu0 0.0
      %1288 = vmatprep.subr.mxu0 0.0
      %1289 = vmatpush1.msra.mxu0 0.0
      %1290 = vmatprep.subr.mxu0 0.0
      %1291 = vmatpush1.msra.mxu0 0.0
      %1292 = vmatprep.subr.mxu0 0.0
      %1293 = vmatpush1.msra.mxu0 0.0
      %1294 = vmatprep.subr.mxu0 0.0
      %1295 = vmatpush1.msra.mxu0 0.0
      %1296 = vmatprep.subr.mxu0 0.0
      %1297 = vmatpush1.msra.mxu0 0.0
      %1298 = vmatprep.subr.mxu0 0.0
      %1299 = vmatpush1.msra.mxu0 0.0
      %1300 = vmatprep.subr.mxu0 0.0
      %1301 = vmatpush1.msra.mxu0 0.0
      %1302 = vmatprep.mubr.f32.mxu0 0.0
      %1303 = vmatmul.mubr.f32.gmra.mrb[0].mxu0 %v1175
      %v1304 = vpop.f32.mrb[0].mxu0
      %v1305 = vadd.f32 0.0, %v1304
      %v1306 = vpop.f32.mrb[0].mxu0
      %1307 = vmatprep.mubr.f32.mxu0 0.0
      %1308 = vmatmul.mubr.f32.gmra.mrb[0].mxu0 %v1177
      %v1309 = vpop.f32.mrb[0].mxu0
      %v1310 = vadd.f32 0.0, %v1309
      %v1311 = vpop.f32.mrb[0].mxu0
      %1312 = vmatprep.mubr.f32.mxu0 0.0
      %1313 = vmatmul.mubr.f32.gmra.mrb[0].mxu0 %v1179
      %v1314 = vpop.f32.mrb[0].mxu0
      %v1315 = vadd.f32 0.0, %v1314
      %v1316 = vpop.f32.mrb[0].mxu0
      %1317 = vmatprep.mubr.f32.mxu0 0.0
      %1318 = vmatmul.mubr.f32.gmra.mrb[0].mxu0 %v1181
      %v1319 = vpop.f32.mrb[0].mxu0
      %v1320 = vadd.f32 0.0, %v1319
      %v1321 = vpop.f32.mrb[0].mxu0
      %1322 = vmatprep.mubr.f32.mxu0 0.0
      %1323 = vmatmul.mubr.f32.gmra.mrb[0].mxu0 %v1183
      %v1324 = vpop.f32.mrb[0].mxu0
      %v1325 = vadd.f32 0.0, %v1324
      %v1326 = vpop.f32.mrb[0].mxu0
      %1327 = vmatprep.mubr.f32.mxu0 0.0
      %1328 = vmatmul.mubr.f32.gmra.mrb[0].mxu0 %v1185
      %v1329 = vpop.f32.mrb[0].mxu0
      %v1330 = vadd.f32 0.0, %v1329
      %v1331 = vpop.f32.mrb[0].mxu0
      %1332 = vmatprep.mubr.f32.mxu0 0.0
      %1333 = vmatmul.mubr.f32.gmra.mrb[0].mxu0 %v1187
      %v1334 = vpop.f32.mrb[0].mxu0
      %v1335 = vadd.f32 0.0, %v1334
      %v1336 = vpop.f32.mrb[0].mxu0
      %1337 = vmatprep.mubr.f32.mxu0 0.0
      %1338 = vmatmul.mubr.f32.gmra.mrb[0].mxu0 %v1189
      %v1339 = vpop.f32.mrb[0].mxu0
      %v1340 = vadd.f32 0.0, %v1339
      %v1341 = vpop.f32.mrb[0].mxu0
      %1342 = vmatprep.mubr.f32.mxu0 0.0
      %1343 = vmatmul.mubr.f32.gmra.mrb[0].mxu0 %v1191
      %v1344 = vpop.f32.mrb[0].mxu0
      %v1345 = vadd.f32 0.0, %v1344
      %v1346 = vpop.f32.mrb[0].mxu0
      %1347 = vmatprep.mubr.f32.mxu0 0.0
      %1348 = vmatmul.mubr.f32.gmra.mrb[0].mxu0 %v1193
      %v1349 = vpop.f32.mrb[0].mxu0
      %v1350 = vadd.f32 0.0, %v1349
      %v1351 = vpop.f32.mrb[0].mxu0
      %1352 = vmatprep.mubr.f32.mxu0 0.0
      %1353 = vmatmul.mubr.f32.gmra.mrb[0].mxu0 %v1195
      %v1354 = vpop.f32.mrb[0].mxu0
      %v1355 = vadd.f32 0.0, %v1354
      %v1356 = vpop.f32.mrb[0].mxu0
      %1357 = vmatprep.mubr.f32.mxu0 0.0
      %1358 = vmatmul.mubr.f32.gmra.mrb[0].mxu0 %v1197
      %v1359 = vpop.f32.mrb[0].mxu0
      %v1360 = vadd.f32 0.0, %v1359
      %v1361 = vpop.f32.mrb[0].mxu0
      %1362 = vmatprep.mubr.f32.mxu0 0.0
      %1363 = vmatmul.mubr.f32.gmra.mrb[0].mxu0 %v1199
      %v1364 = vpop.f32.mrb[0].mxu0
      %v1365 = vadd.f32 0.0, %v1364
      %v1366 = vpop.f32.mrb[0].mxu0
      %1367 = vmatprep.mubr.f32.mxu0 0.0
      %1368 = vmatmul.mubr.f32.gmra.mrb[0].mxu0 %v1201
      %v1369 = vpop.f32.mrb[0].mxu0
      %v1370 = vadd.f32 0.0, %v1369
      %v1371 = vpop.f32.mrb[0].mxu0
      %1372 = vmatprep.mubr.f32.mxu0 0.0
      %1373 = vmatmul.mubr.f32.gmra.mrb[0].mxu0 %v1203
      %v1374 = vpop.f32.mrb[0].mxu0
      %v1375 = vadd.f32 0.0, %v1374
      %v1376 = vpop.f32.mrb[0].mxu0
      %1377 = vmatprep.mubr.f32.mxu0 0.0
      %1378 = vmatmul.mubr.f32.gmra.mrb[0].mxu0 %v1205
      %v1379 = vpop.f32.mrb[0].mxu0
      %v1380 = vadd.f32 0.0, %v1379
      %v1381 = vpop.f32.mrb[0].mxu0
      %1382 = vmatprep.mubr.f32.mxu0 0.0
      %1383 = vmatmul.mubr.f32.gmra.mrb[0].mxu0 %v1207
      %v1384 = vpop.f32.mrb[0].mxu0
      %v1385 = vadd.f32 0.0, %v1384
      %v1386 = vpop.f32.mrb[0].mxu0
      %1387 = vmatprep.mubr.f32.mxu0 0.0
      %1388 = vmatmul.mubr.f32.gmra.mrb[0].mxu0 %v1209
      %v1389 = vpop.f32.mrb[0].mxu0
      %v1390 = vadd.f32 0.0, %v1389
      %v1391 = vpop.f32.mrb[0].mxu0
      %1392 = vmatprep.mubr.f32.mxu0 0.0
      %1393 = vmatmul.mubr.f32.gmra.mrb[0].mxu0 %v1211
      %v1394 = vpop.f32.mrb[0].mxu0
      %v1395 = vadd.f32 0.0, %v1394
      %v1396 = vpop.f32.mrb[0].mxu0
      %1397 = vmatprep.mubr.f32.mxu0 0.0
      %1398 = vmatmul.mubr.f32.gmra.mrb[0].mxu0 %v1213
      %v1399 = vpop.f32.mrb[0].mxu0
      %v1400 = vadd.f32 0.0, %v1399
      %v1401 = vpop.f32.mrb[0].mxu0
      %1402 = vmatprep.mubr.f32.mxu0 0.0
      %1403 = vmatmul.mubr.f32.gmra.mrb[0].mxu0 %v1215
      %v1404 = vpop.f32.mrb[0].mxu0
      %v1405 = vadd.f32 0.0, %v1404
      %v1406 = vpop.f32.mrb[0].mxu0
      %1407 = vmatprep.mubr.f32.mxu0 0.0
      %1408 = vmatmul.mubr.f32.gmra.mrb[0].mxu0 %v1217
      %v1409 = vpop.f32.mrb[0].mxu0
      %v1410 = vadd.f32 0.0, %v1409
      %v1411 = vpop.f32.mrb[0].mxu0
      %1412 = vmatprep.mubr.f32.mxu0 0.0
      %1413 = vmatmul.mubr.f32.gmra.mrb[0].mxu0 %v1219
      %v1414 = vpop.f32.mrb[0].mxu0
      %v1415 = vadd.f32 0.0, %v1414
      %v1416 = vpop.f32.mrb[0].mxu0
      %1417 = vmatprep.mubr.f32.mxu0 0.0
      %1418 = vmatmul.mubr.f32.gmra.mrb[0].mxu0 %v1221
      %v1419 = vpop.f32.mrb[0].mxu0
      %v1420 = vadd.f32 0.0, %v1419
      %v1421 = vpop.f32.mrb[0].mxu0
      %1422 = vmatprep.mubr.f32.mxu0 0.0
      %1423 = vmatmul.mubr.f32.gmra.mrb[0].mxu0 %v1223
      %v1424 = vpop.f32.mrb[0].mxu0
      %v1425 = vadd.f32 0.0, %v1424
      %v1426 = vpop.f32.mrb[0].mxu0
      %1427 = vmatprep.mubr.f32.mxu0 0.0
      %1428 = vmatmul.mubr.f32.gmra.mrb[0].mxu0 %v1225
      %v1429 = vpop.f32.mrb[0].mxu0
      %v1430 = vadd.f32 0.0, %v1429
      %v1431 = vpop.f32.mrb[0].mxu0
      %1432 = vmatprep.mubr.f32.mxu0 0.0
      %1433 = vmatmul.mubr.f32.gmra.mrb[0].mxu0 %v1227
      %v1434 = vpop.f32.mrb[0].mxu0
      %v1435 = vadd.f32 0.0, %v1434
      %v1436 = vpop.f32.mrb[0].mxu0
      %1437 = vmatprep.mubr.f32.mxu0 0.0
      %1438 = vmatmul.mubr.f32.gmra.mrb[0].mxu0 %v1229
      %v1439 = vpop.f32.mrb[0].mxu0
      %v1440 = vadd.f32 0.0, %v1439
      %v1441 = vpop.f32.mrb[0].mxu0
      %1442 = vmatprep.mubr.f32.mxu0 0.0
      %1443 = vmatmul.mubr.f32.gmra.mrb[0].mxu0 %v1231
      %v1444 = vpop.f32.mrb[0].mxu0
      %v1445 = vadd.f32 0.0, %v1444
      %v1446 = vpop.f32.mrb[0].mxu0
      %1447 = vmatprep.mubr.f32.mxu0 0.0
      %1448 = vmatmul.mubr.f32.gmra.mrb[0].mxu0 %v1233
      %v1449 = vpop.f32.mrb[0].mxu0
      %v1450 = vadd.f32 0.0, %v1449
      %v1451 = vpop.f32.mrb[0].mxu0
      %1452 = vdwg.mxu0
      %v1453 = vadd.f32 %v954, %v1305
      %v1454 = vadd.f32 %v959, %v1310
      %v1455 = vadd.f32 %v964, %v1315
      %v1456 = vadd.f32 %v969, %v1320
      %v1457 = vadd.f32 %v974, %v1325
      %v1458 = vadd.f32 %v979, %v1330
      %v1459 = vadd.f32 %v984, %v1335
      %v1460 = vadd.f32 %v989, %v1340
      %v1461 = vadd.f32 %v994, %v1345
      %v1462 = vadd.f32 %v999, %v1350
      %v1463 = vadd.f32 %v1004, %v1355
      %v1464 = vadd.f32 %v1009, %v1360
      %v1465 = vadd.f32 %v1014, %v1365
      %v1466 = vadd.f32 %v1019, %v1370
      %v1467 = vadd.f32 %v1024, %v1375
      %v1468 = vadd.f32 %v1029, %v1380
      %v1469 = vadd.f32 %v1034, %v1385
      %v1470 = vadd.f32 %v1039, %v1390
      %v1471 = vadd.f32 %v1044, %v1395
      %v1472 = vadd.f32 %v1049, %v1400
      %v1473 = vadd.f32 %v1054, %v1405
      %v1474 = vadd.f32 %v1059, %v1410
      %v1475 = vadd.f32 %v1064, %v1415
      %v1476 = vadd.f32 %v1069, %v1420
      %v1477 = vadd.f32 %v1074, %v1425
      %v1478 = vadd.f32 %v1079, %v1430
      %v1479 = vadd.f32 %v1084, %v1435
      %v1480 = vadd.f32 %v1089, %v1440
      %v1481 = vadd.f32 %v1094, %v1445
      %v1482 = vadd.f32 %v1099, %v1450
      %s1483 = scalar_lea.vmem %s2, 12
      %v1484 = vld [vmem:[%s1483] sm:$0xf]
      %v1486 = vsel %vm544, %v422, 0
      %v1489 = vsel %vm544, %v423, 0
      %v1492 = vsel %vm544, %v424, 0
      %v1495 = vsel %vm605, %v1484, 0
      %1497 = vmatprep.subr.mxu0 0.0
      %1498 = vmatpush1.msra.mxu0 %v1495
      %1499 = vmatprep.subr.mxu0 0.0
      %1500 = vmatpush1.msra.mxu0 0.0
      %1501 = vmatprep.subr.mxu0 0.0
      %1502 = vmatpush1.msra.mxu0 0.0
      %1503 = vmatprep.subr.mxu0 0.0
      %1504 = vmatpush1.msra.mxu0 0.0
      %1505 = vmatprep.subr.mxu0 0.0
      %1506 = vmatpush1.msra.mxu0 0.0
      %1507 = vmatprep.subr.mxu0 0.0
      %1508 = vmatpush1.msra.mxu0 0.0
      %1509 = vmatprep.subr.mxu0 0.0
      %1510 = vmatpush1.msra.mxu0 0.0
      %1511 = vmatprep.subr.mxu0 0.0
      %1512 = vmatpush1.msra.mxu0 0.0
      %1513 = vmatprep.subr.mxu0 0.0
      %1514 = vmatpush1.msra.mxu0 0.0
      %1515 = vmatprep.subr.mxu0 0.0
      %1516 = vmatpush1.msra.mxu0 0.0
      %1517 = vmatprep.subr.mxu0 0.0
      %1518 = vmatpush1.msra.mxu0 0.0
      %1519 = vmatprep.subr.mxu0 0.0
      %1520 = vmatpush1.msra.mxu0 0.0
      %1521 = vmatprep.subr.mxu0 0.0
      %1522 = vmatpush1.msra.mxu0 0.0
      %1523 = vmatprep.subr.mxu0 0.0
      %1524 = vmatpush1.msra.mxu0 0.0
      %1525 = vmatprep.subr.mxu0 0.0
      %1526 = vmatpush1.msra.mxu0 0.0
      %1527 = vmatprep.subr.mxu0 0.0
      %1528 = vmatpush1.msra.mxu0 0.0
      %1529 = vmatprep.subr.mxu0 0.0
      %1530 = vmatpush1.msra.mxu0 0.0
      %1531 = vmatprep.subr.mxu0 0.0
      %1532 = vmatpush1.msra.mxu0 0.0
      %1533 = vmatprep.subr.mxu0 0.0
      %1534 = vmatpush1.msra.mxu0 0.0
      %1535 = vmatprep.subr.mxu0 0.0
      %1536 = vmatpush1.msra.mxu0 0.0
      %1537 = vmatprep.subr.mxu0 0.0
      %1538 = vmatpush1.msra.mxu0 0.0
      %1539 = vmatprep.subr.mxu0 0.0
      %1540 = vmatpush1.msra.mxu0 0.0
      %1541 = vmatprep.subr.mxu0 0.0
      %1542 = vmatpush1.msra.mxu0 0.0
      %1543 = vmatprep.subr.mxu0 0.0
      %1544 = vmatpush1.msra.mxu0 0.0
      %1545 = vmatprep.subr.mxu0 0.0
      %1546 = vmatpush1.msra.mxu0 0.0
      %1547 = vmatprep.subr.mxu0 0.0
      %1548 = vmatpush1.msra.mxu0 0.0
      %1549 = vmatprep.subr.mxu0 0.0
      %1550 = vmatpush1.msra.mxu0 0.0
      %1551 = vmatprep.subr.mxu0 0.0
      %1552 = vmatpush1.msra.mxu0 0.0
      %1553 = vmatprep.subr.mxu0 0.0
      %1554 = vmatpush1.msra.mxu0 0.0
      %1555 = vmatprep.subr.mxu0 0.0
      %1556 = vmatpush1.msra.mxu0 0.0
      %1557 = vmatprep.subr.mxu0 0.0
      %1558 = vmatpush1.msra.mxu0 0.0
      %1559 = vmatprep.subr.mxu0 0.0
      %1560 = vmatpush1.msra.mxu0 0.0
      %1561 = vmatprep.mubr.f32.mxu0 0.0
      %1562 = vmatmul.mubr.f32.gmra.mrb[0].mxu0 %v830
      %v1563 = vpop.f32.mrb[0].mxu0
      %v1564 = vadd.f32 0.0, %v1563
      %v1565 = vpop.f32.mrb[0].mxu0
      %1566 = vmatprep.mubr.f32.mxu0 0.0
      %1567 = vmatmul.mubr.f32.gmra.mrb[0].mxu0 %v832
      %v1568 = vpop.f32.mrb[0].mxu0
      %v1569 = vadd.f32 0.0, %v1568
      %v1570 = vpop.f32.mrb[0].mxu0
      %1571 = vmatprep.mubr.f32.mxu0 0.0
      %1572 = vmatmul.mubr.f32.gmra.mrb[0].mxu0 %v834
      %v1573 = vpop.f32.mrb[0].mxu0
      %v1574 = vadd.f32 0.0, %v1573
      %v1575 = vpop.f32.mrb[0].mxu0
      %1576 = vmatprep.mubr.f32.mxu0 0.0
      %1577 = vmatmul.mubr.f32.gmra.mrb[0].mxu0 %v836
      %v1578 = vpop.f32.mrb[0].mxu0
      %v1579 = vadd.f32 0.0, %v1578
      %v1580 = vpop.f32.mrb[0].mxu0
      %1581 = vmatprep.mubr.f32.mxu0 0.0
      %1582 = vmatmul.mubr.f32.gmra.mrb[0].mxu0 %v838
      %v1583 = vpop.f32.mrb[0].mxu0
      %v1584 = vadd.f32 0.0, %v1583
      %v1585 = vpop.f32.mrb[0].mxu0
      %1586 = vmatprep.mubr.f32.mxu0 0.0
      %1587 = vmatmul.mubr.f32.gmra.mrb[0].mxu0 %v840
      %v1588 = vpop.f32.mrb[0].mxu0
      %v1589 = vadd.f32 0.0, %v1588
      %v1590 = vpop.f32.mrb[0].mxu0
      %1591 = vmatprep.mubr.f32.mxu0 0.0
      %1592 = vmatmul.mubr.f32.gmra.mrb[0].mxu0 %v842
      %v1593 = vpop.f32.mrb[0].mxu0
      %v1594 = vadd.f32 0.0, %v1593
      %v1595 = vpop.f32.mrb[0].mxu0
      %1596 = vmatprep.mubr.f32.mxu0 0.0
      %1597 = vmatmul.mubr.f32.gmra.mrb[0].mxu0 %v844
      %v1598 = vpop.f32.mrb[0].mxu0
      %v1599 = vadd.f32 0.0, %v1598
      %v1600 = vpop.f32.mrb[0].mxu0
      %1601 = vmatprep.mubr.f32.mxu0 0.0
      %1602 = vmatmul.mubr.f32.gmra.mrb[0].mxu0 %v846
      %v1603 = vpop.f32.mrb[0].mxu0
      %v1604 = vadd.f32 0.0, %v1603
      %v1605 = vpop.f32.mrb[0].mxu0
      %1606 = vmatprep.mubr.f32.mxu0 0.0
      %1607 = vmatmul.mubr.f32.gmra.mrb[0].mxu0 %v848
      %v1608 = vpop.f32.mrb[0].mxu0
      %v1609 = vadd.f32 0.0, %v1608
      %v1610 = vpop.f32.mrb[0].mxu0
      %1611 = vmatprep.mubr.f32.mxu0 0.0
      %1612 = vmatmul.mubr.f32.gmra.mrb[0].mxu0 %v850
      %v1613 = vpop.f32.mrb[0].mxu0
      %v1614 = vadd.f32 0.0, %v1613
      %v1615 = vpop.f32.mrb[0].mxu0
      %1616 = vmatprep.mubr.f32.mxu0 0.0
      %1617 = vmatmul.mubr.f32.gmra.mrb[0].mxu0 %v852
      %v1618 = vpop.f32.mrb[0].mxu0
      %v1619 = vadd.f32 0.0, %v1618
      %v1620 = vpop.f32.mrb[0].mxu0
      %1621 = vmatprep.mubr.f32.mxu0 0.0
      %1622 = vmatmul.mubr.f32.gmra.mrb[0].mxu0 %v854
      %v1623 = vpop.f32.mrb[0].mxu0
      %v1624 = vadd.f32 0.0, %v1623
      %v1625 = vpop.f32.mrb[0].mxu0
      %1626 = vmatprep.mubr.f32.mxu0 0.0
      %1627 = vmatmul.mubr.f32.gmra.mrb[0].mxu0 %v856
      %v1628 = vpop.f32.mrb[0].mxu0
      %v1629 = vadd.f32 0.0, %v1628
      %v1630 = vpop.f32.mrb[0].mxu0
      %1631 = vmatprep.mubr.f32.mxu0 0.0
      %1632 = vmatmul.mubr.f32.gmra.mrb[0].mxu0 %v858
      %v1633 = vpop.f32.mrb[0].mxu0
      %v1634 = vadd.f32 0.0, %v1633
      %v1635 = vpop.f32.mrb[0].mxu0
      %1636 = vmatprep.mubr.f32.mxu0 0.0
      %1637 = vmatmul.mubr.f32.gmra.mrb[0].mxu0 %v860
      %v1638 = vpop.f32.mrb[0].mxu0
      %v1639 = vadd.f32 0.0, %v1638
      %v1640 = vpop.f32.mrb[0].mxu0
      %1641 = vmatprep.mubr.f32.mxu0 0.0
      %1642 = vmatmul.mubr.f32.gmra.mrb[0].mxu0 %v862
      %v1643 = vpop.f32.mrb[0].mxu0
      %v1644 = vadd.f32 0.0, %v1643
      %v1645 = vpop.f32.mrb[0].mxu0
      %1646 = vmatprep.mubr.f32.mxu0 0.0
      %1647 = vmatmul.mubr.f32.gmra.mrb[0].mxu0 %v864
      %v1648 = vpop.f32.mrb[0].mxu0
      %v1649 = vadd.f32 0.0, %v1648
      %v1650 = vpop.f32.mrb[0].mxu0
      %1651 = vmatprep.mubr.f32.mxu0 0.0
      %1652 = vmatmul.mubr.f32.gmra.mrb[0].mxu0 %v866
      %v1653 = vpop.f32.mrb[0].mxu0
      %v1654 = vadd.f32 0.0, %v1653
      %v1655 = vpop.f32.mrb[0].mxu0
      %1656 = vmatprep.mubr.f32.mxu0 0.0
      %1657 = vmatmul.mubr.f32.gmra.mrb[0].mxu0 %v868
      %v1658 = vpop.f32.mrb[0].mxu0
      %v1659 = vadd.f32 0.0, %v1658
      %v1660 = vpop.f32.mrb[0].mxu0
      %1661 = vmatprep.mubr.f32.mxu0 0.0
      %1662 = vmatmul.mubr.f32.gmra.mrb[0].mxu0 %v870
      %v1663 = vpop.f32.mrb[0].mxu0
      %v1664 = vadd.f32 0.0, %v1663
      %v1665 = vpop.f32.mrb[0].mxu0
      %1666 = vmatprep.mubr.f32.mxu0 0.0
      %1667 = vmatmul.mubr.f32.gmra.mrb[0].mxu0 %v872
      %v1668 = vpop.f32.mrb[0].mxu0
      %v1669 = vadd.f32 0.0, %v1668
      %v1670 = vpop.f32.mrb[0].mxu0
      %1671 = vmatprep.mubr.f32.mxu0 0.0
      %1672 = vmatmul.mubr.f32.gmra.mrb[0].mxu0 %v874
      %v1673 = vpop.f32.mrb[0].mxu0
      %v1674 = vadd.f32 0.0, %v1673
      %v1675 = vpop.f32.mrb[0].mxu0
      %1676 = vmatprep.mubr.f32.mxu0 0.0
      %1677 = vmatmul.mubr.f32.gmra.mrb[0].mxu0 %v876
      %v1678 = vpop.f32.mrb[0].mxu0
      %v1679 = vadd.f32 0.0, %v1678
      %v1680 = vpop.f32.mrb[0].mxu0
      %1681 = vmatprep.mubr.f32.mxu0 0.0
      %1682 = vmatmul.mubr.f32.gmra.mrb[0].mxu0 %v878
      %v1683 = vpop.f32.mrb[0].mxu0
      %v1684 = vadd.f32 0.0, %v1683
      %v1685 = vpop.f32.mrb[0].mxu0
      %1686 = vmatprep.mubr.f32.mxu0 0.0
      %1687 = vmatmul.mubr.f32.gmra.mrb[0].mxu0 %v880
      %v1688 = vpop.f32.mrb[0].mxu0
      %v1689 = vadd.f32 0.0, %v1688
      %v1690 = vpop.f32.mrb[0].mxu0
      %1691 = vmatprep.mubr.f32.mxu0 0.0
      %1692 = vmatmul.mubr.f32.gmra.mrb[0].mxu0 %v882
      %v1693 = vpop.f32.mrb[0].mxu0
      %v1694 = vadd.f32 0.0, %v1693
      %v1695 = vpop.f32.mrb[0].mxu0
      %1696 = vmatprep.mubr.f32.mxu0 0.0
      %1697 = vmatmul.mubr.f32.gmra.mrb[0].mxu0 %v1486
      %v1698 = vpop.f32.mrb[0].mxu0
      %v1699 = vadd.f32 0.0, %v1698
      %v1700 = vpop.f32.mrb[0].mxu0
      %1701 = vmatprep.mubr.f32.mxu0 0.0
      %1702 = vmatmul.mubr.f32.gmra.mrb[0].mxu0 %v1489
      %v1703 = vpop.f32.mrb[0].mxu0
      %v1704 = vadd.f32 0.0, %v1703
      %v1705 = vpop.f32.mrb[0].mxu0
      %1706 = vmatprep.mubr.f32.mxu0 0.0
      %1707 = vmatmul.mubr.f32.gmra.mrb[0].mxu0 %v1492
      %v1708 = vpop.f32.mrb[0].mxu0
      %v1709 = vadd.f32 0.0, %v1708
      %v1710 = vpop.f32.mrb[0].mxu0
      %1711 = vdwg.mxu0
      %v1712 = vadd.f32 %v1453, %v1564
      %v1713 = vadd.f32 %v1454, %v1569
      %v1714 = vadd.f32 %v1455, %v1574
      %v1715 = vadd.f32 %v1456, %v1579
      %v1716 = vadd.f32 %v1457, %v1584
      %v1717 = vadd.f32 %v1458, %v1589
      %v1718 = vadd.f32 %v1459, %v1594
      %v1719 = vadd.f32 %v1460, %v1599
      %v1720 = vadd.f32 %v1461, %v1604
      %v1721 = vadd.f32 %v1462, %v1609
      %v1722 = vadd.f32 %v1463, %v1614
      %v1723 = vadd.f32 %v1464, %v1619
      %v1724 = vadd.f32 %v1465, %v1624
      %v1725 = vadd.f32 %v1466, %v1629
      %v1726 = vadd.f32 %v1467, %v1634
      %v1727 = vadd.f32 %v1468, %v1639
      %v1728 = vadd.f32 %v1469, %v1644
      %v1729 = vadd.f32 %v1470, %v1649
      %v1730 = vadd.f32 %v1471, %v1654
      %v1731 = vadd.f32 %v1472, %v1659
      %v1732 = vadd.f32 %v1473, %v1664
      %v1733 = vadd.f32 %v1474, %v1669
      %v1734 = vadd.f32 %v1475, %v1674
      %v1735 = vadd.f32 %v1476, %v1679
      %v1736 = vadd.f32 %v1477, %v1684
      %v1737 = vadd.f32 %v1478, %v1689
      %v1738 = vadd.f32 %v1479, %v1694
      %v1739 = vadd.f32 %v1480, %v1699
      %v1740 = vadd.f32 %v1481, %v1704
      %v1741 = vadd.f32 %v1482, %v1709
      %v1743 = vrot.slane %v422, 1
      %v1744 = vrot.slane %v423, 1
      %v1745 = vsel %vm471, %v1743, %v1744
      %v1746 = vrot.slane %v424, 1
      %v1747 = vsel %vm471, %v1744, %v1746
      %v1748 = vrot.slane %v425, 1
      %v1749 = vsel %vm471, %v1746, %v1748
      %s1750 = scalar_lea.vmem %s2, 16
      %v1751 = vld [vmem:[%s1750] sm:$0xf]
      %v1752 = vsel %vm544, %v1745, 0
      %v1754 = vsel %vm544, %v1747, 0
      %v1756 = vsel %vm544, %v1749, 0
      %v1759 = vsel %vm605, %v1751, 0
      %1761 = vmatprep.subr.mxu0 0.0
      %1762 = vmatpush1.msra.mxu0 %v1759
      %1763 = vmatprep.subr.mxu0 0.0
      %1764 = vmatpush1.msra.mxu0 0.0
      %1765 = vmatprep.subr.mxu0 0.0
      %1766 = vmatpush1.msra.mxu0 0.0
      %1767 = vmatprep.subr.mxu0 0.0
      %1768 = vmatpush1.msra.mxu0 0.0
      %1769 = vmatprep.subr.mxu0 0.0
      %1770 = vmatpush1.msra.mxu0 0.0
      %1771 = vmatprep.subr.mxu0 0.0
      %1772 = vmatpush1.msra.mxu0 0.0
      %1773 = vmatprep.subr.mxu0 0.0
      %1774 = vmatpush1.msra.mxu0 0.0
      %1775 = vmatprep.subr.mxu0 0.0
      %1776 = vmatpush1.msra.mxu0 0.0
      %1777 = vmatprep.subr.mxu0 0.0
      %1778 = vmatpush1.msra.mxu0 0.0
      %1779 = vmatprep.subr.mxu0 0.0
      %1780 = vmatpush1.msra.mxu0 0.0
      %1781 = vmatprep.subr.mxu0 0.0
      %1782 = vmatpush1.msra.mxu0 0.0
      %1783 = vmatprep.subr.mxu0 0.0
      %1784 = vmatpush1.msra.mxu0 0.0
      %1785 = vmatprep.subr.mxu0 0.0
      %1786 = vmatpush1.msra.mxu0 0.0
      %1787 = vmatprep.subr.mxu0 0.0
      %1788 = vmatpush1.msra.mxu0 0.0
      %1789 = vmatprep.subr.mxu0 0.0
      %1790 = vmatpush1.msra.mxu0 0.0
      %1791 = vmatprep.subr.mxu0 0.0
      %1792 = vmatpush1.msra.mxu0 0.0
      %1793 = vmatprep.subr.mxu0 0.0
      %1794 = vmatpush1.msra.mxu0 0.0
      %1795 = vmatprep.subr.mxu0 0.0
      %1796 = vmatpush1.msra.mxu0 0.0
      %1797 = vmatprep.subr.mxu0 0.0
      %1798 = vmatpush1.msra.mxu0 0.0
      %1799 = vmatprep.subr.mxu0 0.0
      %1800 = vmatpush1.msra.mxu0 0.0
      %1801 = vmatprep.subr.mxu0 0.0
      %1802 = vmatpush1.msra.mxu0 0.0
      %1803 = vmatprep.subr.mxu0 0.0
      %1804 = vmatpush1.msra.mxu0 0.0
      %1805 = vmatprep.subr.mxu0 0.0
      %1806 = vmatpush1.msra.mxu0 0.0
      %1807 = vmatprep.subr.mxu0 0.0
      %1808 = vmatpush1.msra.mxu0 0.0
      %1809 = vmatprep.subr.mxu0 0.0
      %1810 = vmatpush1.msra.mxu0 0.0
      %1811 = vmatprep.subr.mxu0 0.0
      %1812 = vmatpush1.msra.mxu0 0.0
      %1813 = vmatprep.subr.mxu0 0.0
      %1814 = vmatpush1.msra.mxu0 0.0
      %1815 = vmatprep.subr.mxu0 0.0
      %1816 = vmatpush1.msra.mxu0 0.0
      %1817 = vmatprep.subr.mxu0 0.0
      %1818 = vmatpush1.msra.mxu0 0.0
      %1819 = vmatprep.subr.mxu0 0.0
      %1820 = vmatpush1.msra.mxu0 0.0
      %1821 = vmatprep.subr.mxu0 0.0
      %1822 = vmatpush1.msra.mxu0 0.0
      %1823 = vmatprep.subr.mxu0 0.0
      %1824 = vmatpush1.msra.mxu0 0.0
      %1825 = vmatprep.mubr.f32.mxu0 0.0
      %1826 = vmatmul.mubr.f32.gmra.mrb[0].mxu0 %v551
      %v1827 = vpop.f32.mrb[0].mxu0
      %v1828 = vadd.f32 0.0, %v1827
      %v1829 = vpop.f32.mrb[0].mxu0
      %1830 = vmatprep.mubr.f32.mxu0 0.0
      %1831 = vmatmul.mubr.f32.gmra.mrb[0].mxu0 %v553
      %v1832 = vpop.f32.mrb[0].mxu0
      %v1833 = vadd.f32 0.0, %v1832
      %v1834 = vpop.f32.mrb[0].mxu0
      %1835 = vmatprep.mubr.f32.mxu0 0.0
      %1836 = vmatmul.mubr.f32.gmra.mrb[0].mxu0 %v555
      %v1837 = vpop.f32.mrb[0].mxu0
      %v1838 = vadd.f32 0.0, %v1837
      %v1839 = vpop.f32.mrb[0].mxu0
      %1840 = vmatprep.mubr.f32.mxu0 0.0
      %1841 = vmatmul.mubr.f32.gmra.mrb[0].mxu0 %v557
      %v1842 = vpop.f32.mrb[0].mxu0
      %v1843 = vadd.f32 0.0, %v1842
      %v1844 = vpop.f32.mrb[0].mxu0
      %1845 = vmatprep.mubr.f32.mxu0 0.0
      %1846 = vmatmul.mubr.f32.gmra.mrb[0].mxu0 %v559
      %v1847 = vpop.f32.mrb[0].mxu0
      %v1848 = vadd.f32 0.0, %v1847
      %v1849 = vpop.f32.mrb[0].mxu0
      %1850 = vmatprep.mubr.f32.mxu0 0.0
      %1851 = vmatmul.mubr.f32.gmra.mrb[0].mxu0 %v561
      %v1852 = vpop.f32.mrb[0].mxu0
      %v1853 = vadd.f32 0.0, %v1852
      %v1854 = vpop.f32.mrb[0].mxu0
      %1855 = vmatprep.mubr.f32.mxu0 0.0
      %1856 = vmatmul.mubr.f32.gmra.mrb[0].mxu0 %v563
      %v1857 = vpop.f32.mrb[0].mxu0
      %v1858 = vadd.f32 0.0, %v1857
      %v1859 = vpop.f32.mrb[0].mxu0
      %1860 = vmatprep.mubr.f32.mxu0 0.0
      %1861 = vmatmul.mubr.f32.gmra.mrb[0].mxu0 %v565
      %v1862 = vpop.f32.mrb[0].mxu0
      %v1863 = vadd.f32 0.0, %v1862
      %v1864 = vpop.f32.mrb[0].mxu0
      %1865 = vmatprep.mubr.f32.mxu0 0.0
      %1866 = vmatmul.mubr.f32.gmra.mrb[0].mxu0 %v567
      %v1867 = vpop.f32.mrb[0].mxu0
      %v1868 = vadd.f32 0.0, %v1867
      %v1869 = vpop.f32.mrb[0].mxu0
      %1870 = vmatprep.mubr.f32.mxu0 0.0
      %1871 = vmatmul.mubr.f32.gmra.mrb[0].mxu0 %v569
      %v1872 = vpop.f32.mrb[0].mxu0
      %v1873 = vadd.f32 0.0, %v1872
      %v1874 = vpop.f32.mrb[0].mxu0
      %1875 = vmatprep.mubr.f32.mxu0 0.0
      %1876 = vmatmul.mubr.f32.gmra.mrb[0].mxu0 %v571
      %v1877 = vpop.f32.mrb[0].mxu0
      %v1878 = vadd.f32 0.0, %v1877
      %v1879 = vpop.f32.mrb[0].mxu0
      %1880 = vmatprep.mubr.f32.mxu0 0.0
      %1881 = vmatmul.mubr.f32.gmra.mrb[0].mxu0 %v573
      %v1882 = vpop.f32.mrb[0].mxu0
      %v1883 = vadd.f32 0.0, %v1882
      %v1884 = vpop.f32.mrb[0].mxu0
      %1885 = vmatprep.mubr.f32.mxu0 0.0
      %1886 = vmatmul.mubr.f32.gmra.mrb[0].mxu0 %v575
      %v1887 = vpop.f32.mrb[0].mxu0
      %v1888 = vadd.f32 0.0, %v1887
      %v1889 = vpop.f32.mrb[0].mxu0
      %1890 = vmatprep.mubr.f32.mxu0 0.0
      %1891 = vmatmul.mubr.f32.gmra.mrb[0].mxu0 %v577
      %v1892 = vpop.f32.mrb[0].mxu0
      %v1893 = vadd.f32 0.0, %v1892
      %v1894 = vpop.f32.mrb[0].mxu0
      %1895 = vmatprep.mubr.f32.mxu0 0.0
      %1896 = vmatmul.mubr.f32.gmra.mrb[0].mxu0 %v579
      %v1897 = vpop.f32.mrb[0].mxu0
      %v1898 = vadd.f32 0.0, %v1897
      %v1899 = vpop.f32.mrb[0].mxu0
      %1900 = vmatprep.mubr.f32.mxu0 0.0
      %1901 = vmatmul.mubr.f32.gmra.mrb[0].mxu0 %v581
      %v1902 = vpop.f32.mrb[0].mxu0
      %v1903 = vadd.f32 0.0, %v1902
      %v1904 = vpop.f32.mrb[0].mxu0
      %1905 = vmatprep.mubr.f32.mxu0 0.0
      %1906 = vmatmul.mubr.f32.gmra.mrb[0].mxu0 %v583
      %v1907 = vpop.f32.mrb[0].mxu0
      %v1908 = vadd.f32 0.0, %v1907
      %v1909 = vpop.f32.mrb[0].mxu0
      %1910 = vmatprep.mubr.f32.mxu0 0.0
      %1911 = vmatmul.mubr.f32.gmra.mrb[0].mxu0 %v585
      %v1912 = vpop.f32.mrb[0].mxu0
      %v1913 = vadd.f32 0.0, %v1912
      %v1914 = vpop.f32.mrb[0].mxu0
      %1915 = vmatprep.mubr.f32.mxu0 0.0
      %1916 = vmatmul.mubr.f32.gmra.mrb[0].mxu0 %v587
      %v1917 = vpop.f32.mrb[0].mxu0
      %v1918 = vadd.f32 0.0, %v1917
      %v1919 = vpop.f32.mrb[0].mxu0
      %1920 = vmatprep.mubr.f32.mxu0 0.0
      %1921 = vmatmul.mubr.f32.gmra.mrb[0].mxu0 %v589
      %v1922 = vpop.f32.mrb[0].mxu0
      %v1923 = vadd.f32 0.0, %v1922
      %v1924 = vpop.f32.mrb[0].mxu0
      %1925 = vmatprep.mubr.f32.mxu0 0.0
      %1926 = vmatmul.mubr.f32.gmra.mrb[0].mxu0 %v591
      %v1927 = vpop.f32.mrb[0].mxu0
      %v1928 = vadd.f32 0.0, %v1927
      %v1929 = vpop.f32.mrb[0].mxu0
      %1930 = vmatprep.mubr.f32.mxu0 0.0
      %1931 = vmatmul.mubr.f32.gmra.mrb[0].mxu0 %v593
      %v1932 = vpop.f32.mrb[0].mxu0
      %v1933 = vadd.f32 0.0, %v1932
      %v1934 = vpop.f32.mrb[0].mxu0
      %1935 = vmatprep.mubr.f32.mxu0 0.0
      %1936 = vmatmul.mubr.f32.gmra.mrb[0].mxu0 %v595
      %v1937 = vpop.f32.mrb[0].mxu0
      %v1938 = vadd.f32 0.0, %v1937
      %v1939 = vpop.f32.mrb[0].mxu0
      %1940 = vmatprep.mubr.f32.mxu0 0.0
      %1941 = vmatmul.mubr.f32.gmra.mrb[0].mxu0 %v597
      %v1942 = vpop.f32.mrb[0].mxu0
      %v1943 = vadd.f32 0.0, %v1942
      %v1944 = vpop.f32.mrb[0].mxu0
      %1945 = vmatprep.mubr.f32.mxu0 0.0
      %1946 = vmatmul.mubr.f32.gmra.mrb[0].mxu0 %v599
      %v1947 = vpop.f32.mrb[0].mxu0
      %v1948 = vadd.f32 0.0, %v1947
      %v1949 = vpop.f32.mrb[0].mxu0
      %1950 = vmatprep.mubr.f32.mxu0 0.0
      %1951 = vmatmul.mubr.f32.gmra.mrb[0].mxu0 %v601
      %v1952 = vpop.f32.mrb[0].mxu0
      %v1953 = vadd.f32 0.0, %v1952
      %v1954 = vpop.f32.mrb[0].mxu0
      %1955 = vmatprep.mubr.f32.mxu0 0.0
      %1956 = vmatmul.mubr.f32.gmra.mrb[0].mxu0 %v603
      %v1957 = vpop.f32.mrb[0].mxu0
      %v1958 = vadd.f32 0.0, %v1957
      %v1959 = vpop.f32.mrb[0].mxu0
      %1960 = vmatprep.mubr.f32.mxu0 0.0
      %1961 = vmatmul.mubr.f32.gmra.mrb[0].mxu0 %v1752
      %v1962 = vpop.f32.mrb[0].mxu0
      %v1963 = vadd.f32 0.0, %v1962
      %v1964 = vpop.f32.mrb[0].mxu0
      %1965 = vmatprep.mubr.f32.mxu0 0.0
      %1966 = vmatmul.mubr.f32.gmra.mrb[0].mxu0 %v1754
      %v1967 = vpop.f32.mrb[0].mxu0
      %v1968 = vadd.f32 0.0, %v1967
      %v1969 = vpop.f32.mrb[0].mxu0
      %1970 = vmatprep.mubr.f32.mxu0 0.0
      %1971 = vmatmul.mubr.f32.gmra.mrb[0].mxu0 %v1756
      %v1972 = vpop.f32.mrb[0].mxu0
      %v1973 = vadd.f32 0.0, %v1972
      %v1974 = vpop.f32.mrb[0].mxu0
      %1975 = vdwg.mxu0
      %v1976 = vadd.f32 %v1712, %v1828
      %v1977 = vadd.f32 %v1713, %v1833
      %v1978 = vadd.f32 %v1714, %v1838
      %v1979 = vadd.f32 %v1715, %v1843
      %v1980 = vadd.f32 %v1716, %v1848
      %v1981 = vadd.f32 %v1717, %v1853
      %v1982 = vadd.f32 %v1718, %v1858
      %v1983 = vadd.f32 %v1719, %v1863
      %v1984 = vadd.f32 %v1720, %v1868
      %v1985 = vadd.f32 %v1721, %v1873
      %v1986 = vadd.f32 %v1722, %v1878
      %v1987 = vadd.f32 %v1723, %v1883
      %v1988 = vadd.f32 %v1724, %v1888
      %v1989 = vadd.f32 %v1725, %v1893
      %v1990 = vadd.f32 %v1726, %v1898
      %v1991 = vadd.f32 %v1727, %v1903
      %v1992 = vadd.f32 %v1728, %v1908
      %v1993 = vadd.f32 %v1729, %v1913
      %v1994 = vadd.f32 %v1730, %v1918
      %v1995 = vadd.f32 %v1731, %v1923
      %v1996 = vadd.f32 %v1732, %v1928
      %v1997 = vadd.f32 %v1733, %v1933
      %v1998 = vadd.f32 %v1734, %v1938
      %v1999 = vadd.f32 %v1735, %v1943
      %v2000 = vadd.f32 %v1736, %v1948
      %v2001 = vadd.f32 %v1737, %v1953
      %v2002 = vadd.f32 %v1738, %v1958
      %v2003 = vadd.f32 %v1739, %v1963
      %v2004 = vadd.f32 %v1740, %v1968
      %v2005 = vadd.f32 %v1741, %v1973
      %v2006 = vrot.slane %v422, 2
      %v2007 = vrot.slane %v423, 2
      %v2008 = vsel %vm1102, %v2006, %v2007
      %v2009 = vrot.slane %v424, 2
      %v2010 = vsel %vm1102, %v2007, %v2009
      %v2011 = vrot.slane %v425, 2
      %v2012 = vsel %vm1102, %v2009, %v2011
      %s2013 = scalar_lea.vmem %s2, 20
      %v2014 = vld [vmem:[%s2013] sm:$0xf]
      %v2015 = vsel %vm544, %v2008, 0
      %v2017 = vsel %vm544, %v2010, 0
      %v2019 = vsel %vm544, %v2012, 0
      %v2022 = vsel %vm605, %v2014, 0
      %2024 = vmatprep.subr.mxu0 0.0
      %2025 = vmatpush1.msra.mxu0 %v2022
      %2026 = vmatprep.subr.mxu0 0.0
      %2027 = vmatpush1.msra.mxu0 0.0
      %2028 = vmatprep.subr.mxu0 0.0
      %2029 = vmatpush1.msra.mxu0 0.0
      %2030 = vmatprep.subr.mxu0 0.0
      %2031 = vmatpush1.msra.mxu0 0.0
      %2032 = vmatprep.subr.mxu0 0.0
      %2033 = vmatpush1.msra.mxu0 0.0
      %2034 = vmatprep.subr.mxu0 0.0
      %2035 = vmatpush1.msra.mxu0 0.0
      %2036 = vmatprep.subr.mxu0 0.0
      %2037 = vmatpush1.msra.mxu0 0.0
      %2038 = vmatprep.subr.mxu0 0.0
      %2039 = vmatpush1.msra.mxu0 0.0
      %2040 = vmatprep.subr.mxu0 0.0
      %2041 = vmatpush1.msra.mxu0 0.0
      %2042 = vmatprep.subr.mxu0 0.0
      %2043 = vmatpush1.msra.mxu0 0.0
      %2044 = vmatprep.subr.mxu0 0.0
      %2045 = vmatpush1.msra.mxu0 0.0
      %2046 = vmatprep.subr.mxu0 0.0
      %2047 = vmatpush1.msra.mxu0 0.0
      %2048 = vmatprep.subr.mxu0 0.0
      %2049 = vmatpush1.msra.mxu0 0.0
      %2050 = vmatprep.subr.mxu0 0.0
      %2051 = vmatpush1.msra.mxu0 0.0
      %2052 = vmatprep.subr.mxu0 0.0
      %2053 = vmatpush1.msra.mxu0 0.0
      %2054 = vmatprep.subr.mxu0 0.0
      %2055 = vmatpush1.msra.mxu0 0.0
      %2056 = vmatprep.subr.mxu0 0.0
      %2057 = vmatpush1.msra.mxu0 0.0
      %2058 = vmatprep.subr.mxu0 0.0
      %2059 = vmatpush1.msra.mxu0 0.0
      %2060 = vmatprep.subr.mxu0 0.0
      %2061 = vmatpush1.msra.mxu0 0.0
      %2062 = vmatprep.subr.mxu0 0.0
      %2063 = vmatpush1.msra.mxu0 0.0
      %2064 = vmatprep.subr.mxu0 0.0
      %2065 = vmatpush1.msra.mxu0 0.0
      %2066 = vmatprep.subr.mxu0 0.0
      %2067 = vmatpush1.msra.mxu0 0.0
      %2068 = vmatprep.subr.mxu0 0.0
      %2069 = vmatpush1.msra.mxu0 0.0
      %2070 = vmatprep.subr.mxu0 0.0
      %2071 = vmatpush1.msra.mxu0 0.0
      %2072 = vmatprep.subr.mxu0 0.0
      %2073 = vmatpush1.msra.mxu0 0.0
      %2074 = vmatprep.subr.mxu0 0.0
      %2075 = vmatpush1.msra.mxu0 0.0
      %2076 = vmatprep.subr.mxu0 0.0
      %2077 = vmatpush1.msra.mxu0 0.0
      %2078 = vmatprep.subr.mxu0 0.0
      %2079 = vmatpush1.msra.mxu0 0.0
      %2080 = vmatprep.subr.mxu0 0.0
      %2081 = vmatpush1.msra.mxu0 0.0
      %2082 = vmatprep.subr.mxu0 0.0
      %2083 = vmatpush1.msra.mxu0 0.0
      %2084 = vmatprep.subr.mxu0 0.0
      %2085 = vmatpush1.msra.mxu0 0.0
      %2086 = vmatprep.subr.mxu0 0.0
      %2087 = vmatpush1.msra.mxu0 0.0
      %2088 = vmatprep.mubr.f32.mxu0 0.0
      %2089 = vmatmul.mubr.f32.gmra.mrb[0].mxu0 %v1181
      %v2090 = vpop.f32.mrb[0].mxu0
      %v2091 = vadd.f32 0.0, %v2090
      %v2092 = vpop.f32.mrb[0].mxu0
      %2093 = vmatprep.mubr.f32.mxu0 0.0
      %2094 = vmatmul.mubr.f32.gmra.mrb[0].mxu0 %v1183
      %v2095 = vpop.f32.mrb[0].mxu0
      %v2096 = vadd.f32 0.0, %v2095
      %v2097 = vpop.f32.mrb[0].mxu0
      %2098 = vmatprep.mubr.f32.mxu0 0.0
      %2099 = vmatmul.mubr.f32.gmra.mrb[0].mxu0 %v1185
      %v2100 = vpop.f32.mrb[0].mxu0
      %v2101 = vadd.f32 0.0, %v2100
      %v2102 = vpop.f32.mrb[0].mxu0
      %2103 = vmatprep.mubr.f32.mxu0 0.0
      %2104 = vmatmul.mubr.f32.gmra.mrb[0].mxu0 %v1187
      %v2105 = vpop.f32.mrb[0].mxu0
      %v2106 = vadd.f32 0.0, %v2105
      %v2107 = vpop.f32.mrb[0].mxu0
      %2108 = vmatprep.mubr.f32.mxu0 0.0
      %2109 = vmatmul.mubr.f32.gmra.mrb[0].mxu0 %v1189
      %v2110 = vpop.f32.mrb[0].mxu0
      %v2111 = vadd.f32 0.0, %v2110
      %v2112 = vpop.f32.mrb[0].mxu0
      %2113 = vmatprep.mubr.f32.mxu0 0.0
      %2114 = vmatmul.mubr.f32.gmra.mrb[0].mxu0 %v1191
      %v2115 = vpop.f32.mrb[0].mxu0
      %v2116 = vadd.f32 0.0, %v2115
      %v2117 = vpop.f32.mrb[0].mxu0
      %2118 = vmatprep.mubr.f32.mxu0 0.0
      %2119 = vmatmul.mubr.f32.gmra.mrb[0].mxu0 %v1193
      %v2120 = vpop.f32.mrb[0].mxu0
      %v2121 = vadd.f32 0.0, %v2120
      %v2122 = vpop.f32.mrb[0].mxu0
      %2123 = vmatprep.mubr.f32.mxu0 0.0
      %2124 = vmatmul.mubr.f32.gmra.mrb[0].mxu0 %v1195
      %v2125 = vpop.f32.mrb[0].mxu0
      %v2126 = vadd.f32 0.0, %v2125
      %v2127 = vpop.f32.mrb[0].mxu0
      %2128 = vmatprep.mubr.f32.mxu0 0.0
      %2129 = vmatmul.mubr.f32.gmra.mrb[0].mxu0 %v1197
      %v2130 = vpop.f32.mrb[0].mxu0
      %v2131 = vadd.f32 0.0, %v2130
      %v2132 = vpop.f32.mrb[0].mxu0
      %2133 = vmatprep.mubr.f32.mxu0 0.0
      %2134 = vmatmul.mubr.f32.gmra.mrb[0].mxu0 %v1199
      %v2135 = vpop.f32.mrb[0].mxu0
      %v2136 = vadd.f32 0.0, %v2135
      %v2137 = vpop.f32.mrb[0].mxu0
      %2138 = vmatprep.mubr.f32.mxu0 0.0
      %2139 = vmatmul.mubr.f32.gmra.mrb[0].mxu0 %v1201
      %v2140 = vpop.f32.mrb[0].mxu0
      %v2141 = vadd.f32 0.0, %v2140
      %v2142 = vpop.f32.mrb[0].mxu0
      %2143 = vmatprep.mubr.f32.mxu0 0.0
      %2144 = vmatmul.mubr.f32.gmra.mrb[0].mxu0 %v1203
      %v2145 = vpop.f32.mrb[0].mxu0
      %v2146 = vadd.f32 0.0, %v2145
      %v2147 = vpop.f32.mrb[0].mxu0
      %2148 = vmatprep.mubr.f32.mxu0 0.0
      %2149 = vmatmul.mubr.f32.gmra.mrb[0].mxu0 %v1205
      %v2150 = vpop.f32.mrb[0].mxu0
      %v2151 = vadd.f32 0.0, %v2150
      %v2152 = vpop.f32.mrb[0].mxu0
      %2153 = vmatprep.mubr.f32.mxu0 0.0
      %2154 = vmatmul.mubr.f32.gmra.mrb[0].mxu0 %v1207
      %v2155 = vpop.f32.mrb[0].mxu0
      %v2156 = vadd.f32 0.0, %v2155
      %v2157 = vpop.f32.mrb[0].mxu0
      %2158 = vmatprep.mubr.f32.mxu0 0.0
      %2159 = vmatmul.mubr.f32.gmra.mrb[0].mxu0 %v1209
      %v2160 = vpop.f32.mrb[0].mxu0
      %v2161 = vadd.f32 0.0, %v2160
      %v2162 = vpop.f32.mrb[0].mxu0
      %2163 = vmatprep.mubr.f32.mxu0 0.0
      %2164 = vmatmul.mubr.f32.gmra.mrb[0].mxu0 %v1211
      %v2165 = vpop.f32.mrb[0].mxu0
      %v2166 = vadd.f32 0.0, %v2165
      %v2167 = vpop.f32.mrb[0].mxu0
      %2168 = vmatprep.mubr.f32.mxu0 0.0
      %2169 = vmatmul.mubr.f32.gmra.mrb[0].mxu0 %v1213
      %v2170 = vpop.f32.mrb[0].mxu0
      %v2171 = vadd.f32 0.0, %v2170
      %v2172 = vpop.f32.mrb[0].mxu0
      %2173 = vmatprep.mubr.f32.mxu0 0.0
      %2174 = vmatmul.mubr.f32.gmra.mrb[0].mxu0 %v1215
      %v2175 = vpop.f32.mrb[0].mxu0
      %v2176 = vadd.f32 0.0, %v2175
      %v2177 = vpop.f32.mrb[0].mxu0
      %2178 = vmatprep.mubr.f32.mxu0 0.0
      %2179 = vmatmul.mubr.f32.gmra.mrb[0].mxu0 %v1217
      %v2180 = vpop.f32.mrb[0].mxu0
      %v2181 = vadd.f32 0.0, %v2180
      %v2182 = vpop.f32.mrb[0].mxu0
      %2183 = vmatprep.mubr.f32.mxu0 0.0
      %2184 = vmatmul.mubr.f32.gmra.mrb[0].mxu0 %v1219
      %v2185 = vpop.f32.mrb[0].mxu0
      %v2186 = vadd.f32 0.0, %v2185
      %v2187 = vpop.f32.mrb[0].mxu0
      %2188 = vmatprep.mubr.f32.mxu0 0.0
      %2189 = vmatmul.mubr.f32.gmra.mrb[0].mxu0 %v1221
      %v2190 = vpop.f32.mrb[0].mxu0
      %v2191 = vadd.f32 0.0, %v2190
      %v2192 = vpop.f32.mrb[0].mxu0
      %2193 = vmatprep.mubr.f32.mxu0 0.0
      %2194 = vmatmul.mubr.f32.gmra.mrb[0].mxu0 %v1223
      %v2195 = vpop.f32.mrb[0].mxu0
      %v2196 = vadd.f32 0.0, %v2195
      %v2197 = vpop.f32.mrb[0].mxu0
      %2198 = vmatprep.mubr.f32.mxu0 0.0
      %2199 = vmatmul.mubr.f32.gmra.mrb[0].mxu0 %v1225
      %v2200 = vpop.f32.mrb[0].mxu0
      %v2201 = vadd.f32 0.0, %v2200
      %v2202 = vpop.f32.mrb[0].mxu0
      %2203 = vmatprep.mubr.f32.mxu0 0.0
      %2204 = vmatmul.mubr.f32.gmra.mrb[0].mxu0 %v1227
      %v2205 = vpop.f32.mrb[0].mxu0
      %v2206 = vadd.f32 0.0, %v2205
      %v2207 = vpop.f32.mrb[0].mxu0
      %2208 = vmatprep.mubr.f32.mxu0 0.0
      %2209 = vmatmul.mubr.f32.gmra.mrb[0].mxu0 %v1229
      %v2210 = vpop.f32.mrb[0].mxu0
      %v2211 = vadd.f32 0.0, %v2210
      %v2212 = vpop.f32.mrb[0].mxu0
      %2213 = vmatprep.mubr.f32.mxu0 0.0
      %2214 = vmatmul.mubr.f32.gmra.mrb[0].mxu0 %v1231
      %v2215 = vpop.f32.mrb[0].mxu0
      %v2216 = vadd.f32 0.0, %v2215
      %v2217 = vpop.f32.mrb[0].mxu0
      %2218 = vmatprep.mubr.f32.mxu0 0.0
      %2219 = vmatmul.mubr.f32.gmra.mrb[0].mxu0 %v1233
      %v2220 = vpop.f32.mrb[0].mxu0
      %v2221 = vadd.f32 0.0, %v2220
      %v2222 = vpop.f32.mrb[0].mxu0
      %2223 = vmatprep.mubr.f32.mxu0 0.0
      %2224 = vmatmul.mubr.f32.gmra.mrb[0].mxu0 %v2015
      %v2225 = vpop.f32.mrb[0].mxu0
      %v2226 = vadd.f32 0.0, %v2225
      %v2227 = vpop.f32.mrb[0].mxu0
      %2228 = vmatprep.mubr.f32.mxu0 0.0
      %2229 = vmatmul.mubr.f32.gmra.mrb[0].mxu0 %v2017
      %v2230 = vpop.f32.mrb[0].mxu0
      %v2231 = vadd.f32 0.0, %v2230
      %v2232 = vpop.f32.mrb[0].mxu0
      %2233 = vmatprep.mubr.f32.mxu0 0.0
      %2234 = vmatmul.mubr.f32.gmra.mrb[0].mxu0 %v2019
      %v2235 = vpop.f32.mrb[0].mxu0
      %v2236 = vadd.f32 0.0, %v2235
      %v2237 = vpop.f32.mrb[0].mxu0
      %2238 = vdwg.mxu0
      %v2239 = vadd.f32 %v1976, %v2091
      %v2240 = vadd.f32 %v1977, %v2096
      %v2241 = vadd.f32 %v1978, %v2101
      %v2242 = vadd.f32 %v1979, %v2106
      %v2243 = vadd.f32 %v1980, %v2111
      %v2244 = vadd.f32 %v1981, %v2116
      %v2245 = vadd.f32 %v1982, %v2121
      %v2246 = vadd.f32 %v1983, %v2126
      %v2247 = vadd.f32 %v1984, %v2131
      %v2248 = vadd.f32 %v1985, %v2136
      %v2249 = vadd.f32 %v1986, %v2141
      %v2250 = vadd.f32 %v1987, %v2146
      %v2251 = vadd.f32 %v1988, %v2151
      %v2252 = vadd.f32 %v1989, %v2156
      %v2253 = vadd.f32 %v1990, %v2161
      %v2254 = vadd.f32 %v1991, %v2166
      %v2255 = vadd.f32 %v1992, %v2171
      %v2256 = vadd.f32 %v1993, %v2176
      %v2257 = vadd.f32 %v1994, %v2181
      %v2258 = vadd.f32 %v1995, %v2186
      %v2259 = vadd.f32 %v1996, %v2191
      %v2260 = vadd.f32 %v1997, %v2196
      %v2261 = vadd.f32 %v1998, %v2201
      %v2262 = vadd.f32 %v1999, %v2206
      %v2263 = vadd.f32 %v2000, %v2211
      %v2264 = vadd.f32 %v2001, %v2216
      %v2265 = vadd.f32 %v2002, %v2221
      %v2266 = vadd.f32 %v2003, %v2226
      %v2267 = vadd.f32 %v2004, %v2231
      %v2268 = vadd.f32 %v2005, %v2236
      %s2269 = scalar_lea.vmem %s2, 24
      %v2270 = vld [vmem:[%s2269] sm:$0xf]
      %v2272 = vsel %vm544, %v426, 0
      %v2275 = vsel %vm544, %v427, 0
      %v2278 = vsel %vm544, %v428, 0
      %v2281 = vsel %vm605, %v2270, 0
      %2283 = vmatprep.subr.mxu0 0.0
      %2284 = vmatpush1.msra.mxu0 %v2281
      %2285 = vmatprep.subr.mxu0 0.0
      %2286 = vmatpush1.msra.mxu0 0.0
      %2287 = vmatprep.subr.mxu0 0.0
      %2288 = vmatpush1.msra.mxu0 0.0
      %2289 = vmatprep.subr.mxu0 0.0
      %2290 = vmatpush1.msra.mxu0 0.0
      %2291 = vmatprep.subr.mxu0 0.0
      %2292 = vmatpush1.msra.mxu0 0.0
      %2293 = vmatprep.subr.mxu0 0.0
      %2294 = vmatpush1.msra.mxu0 0.0
      %2295 = vmatprep.subr.mxu0 0.0
      %2296 = vmatpush1.msra.mxu0 0.0
      %2297 = vmatprep.subr.mxu0 0.0
      %2298 = vmatpush1.msra.mxu0 0.0
      %2299 = vmatprep.subr.mxu0 0.0
      %2300 = vmatpush1.msra.mxu0 0.0
      %2301 = vmatprep.subr.mxu0 0.0
      %2302 = vmatpush1.msra.mxu0 0.0
      %2303 = vmatprep.subr.mxu0 0.0
      %2304 = vmatpush1.msra.mxu0 0.0
      %2305 = vmatprep.subr.mxu0 0.0
      %2306 = vmatpush1.msra.mxu0 0.0
      %2307 = vmatprep.subr.mxu0 0.0
      %2308 = vmatpush1.msra.mxu0 0.0
      %2309 = vmatprep.subr.mxu0 0.0
      %2310 = vmatpush1.msra.mxu0 0.0
      %2311 = vmatprep.subr.mxu0 0.0
      %2312 = vmatpush1.msra.mxu0 0.0
      %2313 = vmatprep.subr.mxu0 0.0
      %2314 = vmatpush1.msra.mxu0 0.0
      %2315 = vmatprep.subr.mxu0 0.0
      %2316 = vmatpush1.msra.mxu0 0.0
      %2317 = vmatprep.subr.mxu0 0.0
      %2318 = vmatpush1.msra.mxu0 0.0
      %2319 = vmatprep.subr.mxu0 0.0
      %2320 = vmatpush1.msra.mxu0 0.0
      %2321 = vmatprep.subr.mxu0 0.0
      %2322 = vmatpush1.msra.mxu0 0.0
      %2323 = vmatprep.subr.mxu0 0.0
      %2324 = vmatpush1.msra.mxu0 0.0
      %2325 = vmatprep.subr.mxu0 0.0
      %2326 = vmatpush1.msra.mxu0 0.0
      %2327 = vmatprep.subr.mxu0 0.0
      %2328 = vmatpush1.msra.mxu0 0.0
      %2329 = vmatprep.subr.mxu0 0.0
      %2330 = vmatpush1.msra.mxu0 0.0
      %2331 = vmatprep.subr.mxu0 0.0
      %2332 = vmatpush1.msra.mxu0 0.0
      %2333 = vmatprep.subr.mxu0 0.0
      %2334 = vmatpush1.msra.mxu0 0.0
      %2335 = vmatprep.subr.mxu0 0.0
      %2336 = vmatpush1.msra.mxu0 0.0
      %2337 = vmatprep.subr.mxu0 0.0
      %2338 = vmatpush1.msra.mxu0 0.0
      %2339 = vmatprep.subr.mxu0 0.0
      %2340 = vmatpush1.msra.mxu0 0.0
      %2341 = vmatprep.subr.mxu0 0.0
      %2342 = vmatpush1.msra.mxu0 0.0
      %2343 = vmatprep.subr.mxu0 0.0
      %2344 = vmatpush1.msra.mxu0 0.0
      %2345 = vmatprep.subr.mxu0 0.0
      %2346 = vmatpush1.msra.mxu0 0.0
      %2347 = vmatprep.mubr.f32.mxu0 0.0
      %2348 = vmatmul.mubr.f32.gmra.mrb[0].mxu0 %v836
      %v2349 = vpop.f32.mrb[0].mxu0
      %v2350 = vadd.f32 0.0, %v2349
      %v2351 = vpop.f32.mrb[0].mxu0
      %2352 = vmatprep.mubr.f32.mxu0 0.0
      %2353 = vmatmul.mubr.f32.gmra.mrb[0].mxu0 %v838
      %v2354 = vpop.f32.mrb[0].mxu0
      %v2355 = vadd.f32 0.0, %v2354
      %v2356 = vpop.f32.mrb[0].mxu0
      %2357 = vmatprep.mubr.f32.mxu0 0.0
      %2358 = vmatmul.mubr.f32.gmra.mrb[0].mxu0 %v840
      %v2359 = vpop.f32.mrb[0].mxu0
      %v2360 = vadd.f32 0.0, %v2359
      %v2361 = vpop.f32.mrb[0].mxu0
      %2362 = vmatprep.mubr.f32.mxu0 0.0
      %2363 = vmatmul.mubr.f32.gmra.mrb[0].mxu0 %v842
      %v2364 = vpop.f32.mrb[0].mxu0
      %v2365 = vadd.f32 0.0, %v2364
      %v2366 = vpop.f32.mrb[0].mxu0
      %2367 = vmatprep.mubr.f32.mxu0 0.0
      %2368 = vmatmul.mubr.f32.gmra.mrb[0].mxu0 %v844
      %v2369 = vpop.f32.mrb[0].mxu0
      %v2370 = vadd.f32 0.0, %v2369
      %v2371 = vpop.f32.mrb[0].mxu0
      %2372 = vmatprep.mubr.f32.mxu0 0.0
      %2373 = vmatmul.mubr.f32.gmra.mrb[0].mxu0 %v846
      %v2374 = vpop.f32.mrb[0].mxu0
      %v2375 = vadd.f32 0.0, %v2374
      %v2376 = vpop.f32.mrb[0].mxu0
      %2377 = vmatprep.mubr.f32.mxu0 0.0
      %2378 = vmatmul.mubr.f32.gmra.mrb[0].mxu0 %v848
      %v2379 = vpop.f32.mrb[0].mxu0
      %v2380 = vadd.f32 0.0, %v2379
      %v2381 = vpop.f32.mrb[0].mxu0
      %2382 = vmatprep.mubr.f32.mxu0 0.0
      %2383 = vmatmul.mubr.f32.gmra.mrb[0].mxu0 %v850
      %v2384 = vpop.f32.mrb[0].mxu0
      %v2385 = vadd.f32 0.0, %v2384
      %v2386 = vpop.f32.mrb[0].mxu0
      %2387 = vmatprep.mubr.f32.mxu0 0.0
      %2388 = vmatmul.mubr.f32.gmra.mrb[0].mxu0 %v852
      %v2389 = vpop.f32.mrb[0].mxu0
      %v2390 = vadd.f32 0.0, %v2389
      %v2391 = vpop.f32.mrb[0].mxu0
      %2392 = vmatprep.mubr.f32.mxu0 0.0
      %2393 = vmatmul.mubr.f32.gmra.mrb[0].mxu0 %v854
      %v2394 = vpop.f32.mrb[0].mxu0
      %v2395 = vadd.f32 0.0, %v2394
      %v2396 = vpop.f32.mrb[0].mxu0
      %2397 = vmatprep.mubr.f32.mxu0 0.0
      %2398 = vmatmul.mubr.f32.gmra.mrb[0].mxu0 %v856
      %v2399 = vpop.f32.mrb[0].mxu0
      %v2400 = vadd.f32 0.0, %v2399
      %v2401 = vpop.f32.mrb[0].mxu0
      %2402 = vmatprep.mubr.f32.mxu0 0.0
      %2403 = vmatmul.mubr.f32.gmra.mrb[0].mxu0 %v858
      %v2404 = vpop.f32.mrb[0].mxu0
      %v2405 = vadd.f32 0.0, %v2404
      %v2406 = vpop.f32.mrb[0].mxu0
      %2407 = vmatprep.mubr.f32.mxu0 0.0
      %2408 = vmatmul.mubr.f32.gmra.mrb[0].mxu0 %v860
      %v2409 = vpop.f32.mrb[0].mxu0
      %v2410 = vadd.f32 0.0, %v2409
      %v2411 = vpop.f32.mrb[0].mxu0
      %2412 = vmatprep.mubr.f32.mxu0 0.0
      %2413 = vmatmul.mubr.f32.gmra.mrb[0].mxu0 %v862
      %v2414 = vpop.f32.mrb[0].mxu0
      %v2415 = vadd.f32 0.0, %v2414
      %v2416 = vpop.f32.mrb[0].mxu0
      %2417 = vmatprep.mubr.f32.mxu0 0.0
      %2418 = vmatmul.mubr.f32.gmra.mrb[0].mxu0 %v864
      %v2419 = vpop.f32.mrb[0].mxu0
      %v2420 = vadd.f32 0.0, %v2419
      %v2421 = vpop.f32.mrb[0].mxu0
      %2422 = vmatprep.mubr.f32.mxu0 0.0
      %2423 = vmatmul.mubr.f32.gmra.mrb[0].mxu0 %v866
      %v2424 = vpop.f32.mrb[0].mxu0
      %v2425 = vadd.f32 0.0, %v2424
      %v2426 = vpop.f32.mrb[0].mxu0
      %2427 = vmatprep.mubr.f32.mxu0 0.0
      %2428 = vmatmul.mubr.f32.gmra.mrb[0].mxu0 %v868
      %v2429 = vpop.f32.mrb[0].mxu0
      %v2430 = vadd.f32 0.0, %v2429
      %v2431 = vpop.f32.mrb[0].mxu0
      %2432 = vmatprep.mubr.f32.mxu0 0.0
      %2433 = vmatmul.mubr.f32.gmra.mrb[0].mxu0 %v870
      %v2434 = vpop.f32.mrb[0].mxu0
      %v2435 = vadd.f32 0.0, %v2434
      %v2436 = vpop.f32.mrb[0].mxu0
      %2437 = vmatprep.mubr.f32.mxu0 0.0
      %2438 = vmatmul.mubr.f32.gmra.mrb[0].mxu0 %v872
      %v2439 = vpop.f32.mrb[0].mxu0
      %v2440 = vadd.f32 0.0, %v2439
      %v2441 = vpop.f32.mrb[0].mxu0
      %2442 = vmatprep.mubr.f32.mxu0 0.0
      %2443 = vmatmul.mubr.f32.gmra.mrb[0].mxu0 %v874
      %v2444 = vpop.f32.mrb[0].mxu0
      %v2445 = vadd.f32 0.0, %v2444
      %v2446 = vpop.f32.mrb[0].mxu0
      %2447 = vmatprep.mubr.f32.mxu0 0.0
      %2448 = vmatmul.mubr.f32.gmra.mrb[0].mxu0 %v876
      %v2449 = vpop.f32.mrb[0].mxu0
      %v2450 = vadd.f32 0.0, %v2449
      %v2451 = vpop.f32.mrb[0].mxu0
      %2452 = vmatprep.mubr.f32.mxu0 0.0
      %2453 = vmatmul.mubr.f32.gmra.mrb[0].mxu0 %v878
      %v2454 = vpop.f32.mrb[0].mxu0
      %v2455 = vadd.f32 0.0, %v2454
      %v2456 = vpop.f32.mrb[0].mxu0
      %2457 = vmatprep.mubr.f32.mxu0 0.0
      %2458 = vmatmul.mubr.f32.gmra.mrb[0].mxu0 %v880
      %v2459 = vpop.f32.mrb[0].mxu0
      %v2460 = vadd.f32 0.0, %v2459
      %v2461 = vpop.f32.mrb[0].mxu0
      %2462 = vmatprep.mubr.f32.mxu0 0.0
      %2463 = vmatmul.mubr.f32.gmra.mrb[0].mxu0 %v882
      %v2464 = vpop.f32.mrb[0].mxu0
      %v2465 = vadd.f32 0.0, %v2464
      %v2466 = vpop.f32.mrb[0].mxu0
      %2467 = vmatprep.mubr.f32.mxu0 0.0
      %2468 = vmatmul.mubr.f32.gmra.mrb[0].mxu0 %v1486
      %v2469 = vpop.f32.mrb[0].mxu0
      %v2470 = vadd.f32 0.0, %v2469
      %v2471 = vpop.f32.mrb[0].mxu0
      %2472 = vmatprep.mubr.f32.mxu0 0.0
      %2473 = vmatmul.mubr.f32.gmra.mrb[0].mxu0 %v1489
      %v2474 = vpop.f32.mrb[0].mxu0
      %v2475 = vadd.f32 0.0, %v2474
      %v2476 = vpop.f32.mrb[0].mxu0
      %2477 = vmatprep.mubr.f32.mxu0 0.0
      %2478 = vmatmul.mubr.f32.gmra.mrb[0].mxu0 %v1492
      %v2479 = vpop.f32.mrb[0].mxu0
      %v2480 = vadd.f32 0.0, %v2479
      %v2481 = vpop.f32.mrb[0].mxu0
      %2482 = vmatprep.mubr.f32.mxu0 0.0
      %2483 = vmatmul.mubr.f32.gmra.mrb[0].mxu0 %v2272
      %v2484 = vpop.f32.mrb[0].mxu0
      %v2485 = vadd.f32 0.0, %v2484
      %v2486 = vpop.f32.mrb[0].mxu0
      %2487 = vmatprep.mubr.f32.mxu0 0.0
      %2488 = vmatmul.mubr.f32.gmra.mrb[0].mxu0 %v2275
      %v2489 = vpop.f32.mrb[0].mxu0
      %v2490 = vadd.f32 0.0, %v2489
      %v2491 = vpop.f32.mrb[0].mxu0
      %2492 = vmatprep.mubr.f32.mxu0 0.0
      %2493 = vmatmul.mubr.f32.gmra.mrb[0].mxu0 %v2278
      %v2494 = vpop.f32.mrb[0].mxu0
      %v2495 = vadd.f32 0.0, %v2494
      %v2496 = vpop.f32.mrb[0].mxu0
      %2497 = vdwg.mxu0
      %v2498 = vadd.f32 %v2239, %v2350
      %v2499 = vadd.f32 %v2240, %v2355
      %v2500 = vadd.f32 %v2241, %v2360
      %v2501 = vadd.f32 %v2242, %v2365
      %v2502 = vadd.f32 %v2243, %v2370
      %v2503 = vadd.f32 %v2244, %v2375
      %v2504 = vadd.f32 %v2245, %v2380
      %v2505 = vadd.f32 %v2246, %v2385
      %v2506 = vadd.f32 %v2247, %v2390
      %v2507 = vadd.f32 %v2248, %v2395
      %v2508 = vadd.f32 %v2249, %v2400
      %v2509 = vadd.f32 %v2250, %v2405
      %v2510 = vadd.f32 %v2251, %v2410
      %v2511 = vadd.f32 %v2252, %v2415
      %v2512 = vadd.f32 %v2253, %v2420
      %v2513 = vadd.f32 %v2254, %v2425
      %v2514 = vadd.f32 %v2255, %v2430
      %v2515 = vadd.f32 %v2256, %v2435
      %v2516 = vadd.f32 %v2257, %v2440
      %v2517 = vadd.f32 %v2258, %v2445
      %v2518 = vadd.f32 %v2259, %v2450
      %v2519 = vadd.f32 %v2260, %v2455
      %v2520 = vadd.f32 %v2261, %v2460
      %v2521 = vadd.f32 %v2262, %v2465
      %v2522 = vadd.f32 %v2263, %v2470
      %v2523 = vadd.f32 %v2264, %v2475
      %v2524 = vadd.f32 %v2265, %v2480
      %v2525 = vadd.f32 %v2266, %v2485
      %v2526 = vadd.f32 %v2267, %v2490
      %v2527 = vadd.f32 %v2268, %v2495
      %v2529 = vrot.slane %v426, 1
      %v2530 = vrot.slane %v427, 1
      %v2531 = vsel %vm471, %v2529, %v2530
      %v2532 = vrot.slane %v428, 1
      %v2533 = vsel %vm471, %v2530, %v2532
      %v2534 = vrot.slane %v429, 1
      %v2535 = vsel %vm471, %v2532, %v2534
      %s2536 = scalar_lea.vmem %s2, 28
      %v2537 = vld [vmem:[%s2536] sm:$0xf]
      %v2538 = vsel %vm544, %v2531, 0
      %v2540 = vsel %vm544, %v2533, 0
      %v2542 = vsel %vm544, %v2535, 0
      %v2545 = vsel %vm605, %v2537, 0
      %2547 = vmatprep.subr.mxu0 0.0
      %2548 = vmatpush1.msra.mxu0 %v2545
      %2549 = vmatprep.subr.mxu0 0.0
      %2550 = vmatpush1.msra.mxu0 0.0
      %2551 = vmatprep.subr.mxu0 0.0
      %2552 = vmatpush1.msra.mxu0 0.0
      %2553 = vmatprep.subr.mxu0 0.0
      %2554 = vmatpush1.msra.mxu0 0.0
      %2555 = vmatprep.subr.mxu0 0.0
      %2556 = vmatpush1.msra.mxu0 0.0
      %2557 = vmatprep.subr.mxu0 0.0
      %2558 = vmatpush1.msra.mxu0 0.0
      %2559 = vmatprep.subr.mxu0 0.0
      %2560 = vmatpush1.msra.mxu0 0.0
      %2561 = vmatprep.subr.mxu0 0.0
      %2562 = vmatpush1.msra.mxu0 0.0
      %2563 = vmatprep.subr.mxu0 0.0
      %2564 = vmatpush1.msra.mxu0 0.0
      %2565 = vmatprep.subr.mxu0 0.0
      %2566 = vmatpush1.msra.mxu0 0.0
      %2567 = vmatprep.subr.mxu0 0.0
      %2568 = vmatpush1.msra.mxu0 0.0
      %2569 = vmatprep.subr.mxu0 0.0
      %2570 = vmatpush1.msra.mxu0 0.0
      %2571 = vmatprep.subr.mxu0 0.0
      %2572 = vmatpush1.msra.mxu0 0.0
      %2573 = vmatprep.subr.mxu0 0.0
      %2574 = vmatpush1.msra.mxu0 0.0
      %2575 = vmatprep.subr.mxu0 0.0
      %2576 = vmatpush1.msra.mxu0 0.0
      %2577 = vmatprep.subr.mxu0 0.0
      %2578 = vmatpush1.msra.mxu0 0.0
      %2579 = vmatprep.subr.mxu0 0.0
      %2580 = vmatpush1.msra.mxu0 0.0
      %2581 = vmatprep.subr.mxu0 0.0
      %2582 = vmatpush1.msra.mxu0 0.0
      %2583 = vmatprep.subr.mxu0 0.0
      %2584 = vmatpush1.msra.mxu0 0.0
      %2585 = vmatprep.subr.mxu0 0.0
      %2586 = vmatpush1.msra.mxu0 0.0
      %2587 = vmatprep.subr.mxu0 0.0
      %2588 = vmatpush1.msra.mxu0 0.0
      %2589 = vmatprep.subr.mxu0 0.0
      %2590 = vmatpush1.msra.mxu0 0.0
      %2591 = vmatprep.subr.mxu0 0.0
      %2592 = vmatpush1.msra.mxu0 0.0
      %2593 = vmatprep.subr.mxu0 0.0
      %2594 = vmatpush1.msra.mxu0 0.0
      %2595 = vmatprep.subr.mxu0 0.0
      %2596 = vmatpush1.msra.mxu0 0.0
      %2597 = vmatprep.subr.mxu0 0.0
      %2598 = vmatpush1.msra.mxu0 0.0
      %2599 = vmatprep.subr.mxu0 0.0
      %2600 = vmatpush1.msra.mxu0 0.0
      %2601 = vmatprep.subr.mxu0 0.0
      %2602 = vmatpush1.msra.mxu0 0.0
      %2603 = vmatprep.subr.mxu0 0.0
      %2604 = vmatpush1.msra.mxu0 0.0
      %2605 = vmatprep.subr.mxu0 0.0
      %2606 = vmatpush1.msra.mxu0 0.0
      %2607 = vmatprep.subr.mxu0 0.0
      %2608 = vmatpush1.msra.mxu0 0.0
      %2609 = vmatprep.subr.mxu0 0.0
      %2610 = vmatpush1.msra.mxu0 0.0
      %2611 = vmatprep.mubr.f32.mxu0 0.0
      %2612 = vmatmul.mubr.f32.gmra.mrb[0].mxu0 %v557
      %v2613 = vpop.f32.mrb[0].mxu0
      %v2614 = vadd.f32 0.0, %v2613
      %v2615 = vpop.f32.mrb[0].mxu0
      %2616 = vmatprep.mubr.f32.mxu0 0.0
      %2617 = vmatmul.mubr.f32.gmra.mrb[0].mxu0 %v559
      %v2618 = vpop.f32.mrb[0].mxu0
      %v2619 = vadd.f32 0.0, %v2618
      %v2620 = vpop.f32.mrb[0].mxu0
      %2621 = vmatprep.mubr.f32.mxu0 0.0
      %2622 = vmatmul.mubr.f32.gmra.mrb[0].mxu0 %v561
      %v2623 = vpop.f32.mrb[0].mxu0
      %v2624 = vadd.f32 0.0, %v2623
      %v2625 = vpop.f32.mrb[0].mxu0
      %2626 = vmatprep.mubr.f32.mxu0 0.0
      %2627 = vmatmul.mubr.f32.gmra.mrb[0].mxu0 %v563
      %v2628 = vpop.f32.mrb[0].mxu0
      %v2629 = vadd.f32 0.0, %v2628
      %v2630 = vpop.f32.mrb[0].mxu0
      %2631 = vmatprep.mubr.f32.mxu0 0.0
      %2632 = vmatmul.mubr.f32.gmra.mrb[0].mxu0 %v565
      %v2633 = vpop.f32.mrb[0].mxu0
      %v2634 = vadd.f32 0.0, %v2633
      %v2635 = vpop.f32.mrb[0].mxu0
      %2636 = vmatprep.mubr.f32.mxu0 0.0
      %2637 = vmatmul.mubr.f32.gmra.mrb[0].mxu0 %v567
      %v2638 = vpop.f32.mrb[0].mxu0
      %v2639 = vadd.f32 0.0, %v2638
      %v2640 = vpop.f32.mrb[0].mxu0
      %2641 = vmatprep.mubr.f32.mxu0 0.0
      %2642 = vmatmul.mubr.f32.gmra.mrb[0].mxu0 %v569
      %v2643 = vpop.f32.mrb[0].mxu0
      %v2644 = vadd.f32 0.0, %v2643
      %v2645 = vpop.f32.mrb[0].mxu0
      %2646 = vmatprep.mubr.f32.mxu0 0.0
      %2647 = vmatmul.mubr.f32.gmra.mrb[0].mxu0 %v571
      %v2648 = vpop.f32.mrb[0].mxu0
      %v2649 = vadd.f32 0.0, %v2648
      %v2650 = vpop.f32.mrb[0].mxu0
      %2651 = vmatprep.mubr.f32.mxu0 0.0
      %2652 = vmatmul.mubr.f32.gmra.mrb[0].mxu0 %v573
      %v2653 = vpop.f32.mrb[0].mxu0
      %v2654 = vadd.f32 0.0, %v2653
      %v2655 = vpop.f32.mrb[0].mxu0
      %2656 = vmatprep.mubr.f32.mxu0 0.0
      %2657 = vmatmul.mubr.f32.gmra.mrb[0].mxu0 %v575
      %v2658 = vpop.f32.mrb[0].mxu0
      %v2659 = vadd.f32 0.0, %v2658
      %v2660 = vpop.f32.mrb[0].mxu0
      %2661 = vmatprep.mubr.f32.mxu0 0.0
      %2662 = vmatmul.mubr.f32.gmra.mrb[0].mxu0 %v577
      %v2663 = vpop.f32.mrb[0].mxu0
      %v2664 = vadd.f32 0.0, %v2663
      %v2665 = vpop.f32.mrb[0].mxu0
      %2666 = vmatprep.mubr.f32.mxu0 0.0
      %2667 = vmatmul.mubr.f32.gmra.mrb[0].mxu0 %v579
      %v2668 = vpop.f32.mrb[0].mxu0
      %v2669 = vadd.f32 0.0, %v2668
      %v2670 = vpop.f32.mrb[0].mxu0
      %2671 = vmatprep.mubr.f32.mxu0 0.0
      %2672 = vmatmul.mubr.f32.gmra.mrb[0].mxu0 %v581
      %v2673 = vpop.f32.mrb[0].mxu0
      %v2674 = vadd.f32 0.0, %v2673
      %v2675 = vpop.f32.mrb[0].mxu0
      %2676 = vmatprep.mubr.f32.mxu0 0.0
      %2677 = vmatmul.mubr.f32.gmra.mrb[0].mxu0 %v583
      %v2678 = vpop.f32.mrb[0].mxu0
      %v2679 = vadd.f32 0.0, %v2678
      %v2680 = vpop.f32.mrb[0].mxu0
      %2681 = vmatprep.mubr.f32.mxu0 0.0
      %2682 = vmatmul.mubr.f32.gmra.mrb[0].mxu0 %v585
      %v2683 = vpop.f32.mrb[0].mxu0
      %v2684 = vadd.f32 0.0, %v2683
      %v2685 = vpop.f32.mrb[0].mxu0
      %2686 = vmatprep.mubr.f32.mxu0 0.0
      %2687 = vmatmul.mubr.f32.gmra.mrb[0].mxu0 %v587
      %v2688 = vpop.f32.mrb[0].mxu0
      %v2689 = vadd.f32 0.0, %v2688
      %v2690 = vpop.f32.mrb[0].mxu0
      %2691 = vmatprep.mubr.f32.mxu0 0.0
      %2692 = vmatmul.mubr.f32.gmra.mrb[0].mxu0 %v589
      %v2693 = vpop.f32.mrb[0].mxu0
      %v2694 = vadd.f32 0.0, %v2693
      %v2695 = vpop.f32.mrb[0].mxu0
      %2696 = vmatprep.mubr.f32.mxu0 0.0
      %2697 = vmatmul.mubr.f32.gmra.mrb[0].mxu0 %v591
      %v2698 = vpop.f32.mrb[0].mxu0
      %v2699 = vadd.f32 0.0, %v2698
      %v2700 = vpop.f32.mrb[0].mxu0
      %2701 = vmatprep.mubr.f32.mxu0 0.0
      %2702 = vmatmul.mubr.f32.gmra.mrb[0].mxu0 %v593
      %v2703 = vpop.f32.mrb[0].mxu0
      %v2704 = vadd.f32 0.0, %v2703
      %v2705 = vpop.f32.mrb[0].mxu0
      %2706 = vmatprep.mubr.f32.mxu0 0.0
      %2707 = vmatmul.mubr.f32.gmra.mrb[0].mxu0 %v595
      %v2708 = vpop.f32.mrb[0].mxu0
      %v2709 = vadd.f32 0.0, %v2708
      %v2710 = vpop.f32.mrb[0].mxu0
      %2711 = vmatprep.mubr.f32.mxu0 0.0
      %2712 = vmatmul.mubr.f32.gmra.mrb[0].mxu0 %v597
      %v2713 = vpop.f32.mrb[0].mxu0
      %v2714 = vadd.f32 0.0, %v2713
      %v2715 = vpop.f32.mrb[0].mxu0
      %2716 = vmatprep.mubr.f32.mxu0 0.0
      %2717 = vmatmul.mubr.f32.gmra.mrb[0].mxu0 %v599
      %v2718 = vpop.f32.mrb[0].mxu0
      %v2719 = vadd.f32 0.0, %v2718
      %v2720 = vpop.f32.mrb[0].mxu0
      %2721 = vmatprep.mubr.f32.mxu0 0.0
      %2722 = vmatmul.mubr.f32.gmra.mrb[0].mxu0 %v601
      %v2723 = vpop.f32.mrb[0].mxu0
      %v2724 = vadd.f32 0.0, %v2723
      %v2725 = vpop.f32.mrb[0].mxu0
      %2726 = vmatprep.mubr.f32.mxu0 0.0
      %2727 = vmatmul.mubr.f32.gmra.mrb[0].mxu0 %v603
      %v2728 = vpop.f32.mrb[0].mxu0
      %v2729 = vadd.f32 0.0, %v2728
      %v2730 = vpop.f32.mrb[0].mxu0
      %2731 = vmatprep.mubr.f32.mxu0 0.0
      %2732 = vmatmul.mubr.f32.gmra.mrb[0].mxu0 %v1752
      %v2733 = vpop.f32.mrb[0].mxu0
      %v2734 = vadd.f32 0.0, %v2733
      %v2735 = vpop.f32.mrb[0].mxu0
      %2736 = vmatprep.mubr.f32.mxu0 0.0
      %2737 = vmatmul.mubr.f32.gmra.mrb[0].mxu0 %v1754
      %v2738 = vpop.f32.mrb[0].mxu0
      %v2739 = vadd.f32 0.0, %v2738
      %v2740 = vpop.f32.mrb[0].mxu0
      %2741 = vmatprep.mubr.f32.mxu0 0.0
      %2742 = vmatmul.mubr.f32.gmra.mrb[0].mxu0 %v1756
      %v2743 = vpop.f32.mrb[0].mxu0
      %v2744 = vadd.f32 0.0, %v2743
      %v2745 = vpop.f32.mrb[0].mxu0
      %2746 = vmatprep.mubr.f32.mxu0 0.0
      %2747 = vmatmul.mubr.f32.gmra.mrb[0].mxu0 %v2538
      %v2748 = vpop.f32.mrb[0].mxu0
      %v2749 = vadd.f32 0.0, %v2748
      %v2750 = vpop.f32.mrb[0].mxu0
      %2751 = vmatprep.mubr.f32.mxu0 0.0
      %2752 = vmatmul.mubr.f32.gmra.mrb[0].mxu0 %v2540
      %v2753 = vpop.f32.mrb[0].mxu0
      %v2754 = vadd.f32 0.0, %v2753
      %v2755 = vpop.f32.mrb[0].mxu0
      %2756 = vmatprep.mubr.f32.mxu0 0.0
      %2757 = vmatmul.mubr.f32.gmra.mrb[0].mxu0 %v2542
      %v2758 = vpop.f32.mrb[0].mxu0
      %v2759 = vadd.f32 0.0, %v2758
      %v2760 = vpop.f32.mrb[0].mxu0
      %2761 = vdwg.mxu0
      %v2762 = vadd.f32 %v2498, %v2614
      %v2763 = vadd.f32 %v2499, %v2619
      %v2764 = vadd.f32 %v2500, %v2624
      %v2765 = vadd.f32 %v2501, %v2629
      %v2766 = vadd.f32 %v2502, %v2634
      %v2767 = vadd.f32 %v2503, %v2639
      %v2768 = vadd.f32 %v2504, %v2644
      %v2769 = vadd.f32 %v2505, %v2649
      %v2770 = vadd.f32 %v2506, %v2654
      %v2771 = vadd.f32 %v2507, %v2659
      %v2772 = vadd.f32 %v2508, %v2664
      %v2773 = vadd.f32 %v2509, %v2669
      %v2774 = vadd.f32 %v2510, %v2674
      %v2775 = vadd.f32 %v2511, %v2679
      %v2776 = vadd.f32 %v2512, %v2684
      %v2777 = vadd.f32 %v2513, %v2689
      %v2778 = vadd.f32 %v2514, %v2694
      %v2779 = vadd.f32 %v2515, %v2699
      %v2780 = vadd.f32 %v2516, %v2704
      %v2781 = vadd.f32 %v2517, %v2709
      %v2782 = vadd.f32 %v2518, %v2714
      %v2783 = vadd.f32 %v2519, %v2719
      %v2784 = vadd.f32 %v2520, %v2724
      %v2785 = vadd.f32 %v2521, %v2729
      %v2786 = vadd.f32 %v2522, %v2734
      %v2787 = vadd.f32 %v2523, %v2739
      %v2788 = vadd.f32 %v2524, %v2744
      %v2789 = vadd.f32 %v2525, %v2749
      %v2790 = vadd.f32 %v2526, %v2754
      %v2791 = vadd.f32 %v2527, %v2759
      %v2792 = vrot.slane %v426, 2
      %v2793 = vrot.slane %v427, 2
      %v2794 = vsel %vm1102, %v2792, %v2793
      %v2795 = vrot.slane %v428, 2
      %v2796 = vsel %vm1102, %v2793, %v2795
      %v2797 = vrot.slane %v429, 2
      %v2798 = vsel %vm1102, %v2795, %v2797
      %s2799 = scalar_lea.vmem %s2, 32
      %v2800 = vld [vmem:[%s2799] sm:$0xf]
      %v2801 = vsel %vm544, %v2794, 0
      %v2803 = vsel %vm544, %v2796, 0
      %v2805 = vsel %vm544, %v2798, 0
      %v2808 = vsel %vm605, %v2800, 0
      %2810 = vmatprep.subr.mxu0 0.0
      %2811 = vmatpush1.msra.mxu0 %v2808
      %2812 = vmatprep.subr.mxu0 0.0
      %2813 = vmatpush1.msra.mxu0 0.0
      %2814 = vmatprep.subr.mxu0 0.0
      %2815 = vmatpush1.msra.mxu0 0.0
      %2816 = vmatprep.subr.mxu0 0.0
      %2817 = vmatpush1.msra.mxu0 0.0
      %2818 = vmatprep.subr.mxu0 0.0
      %2819 = vmatpush1.msra.mxu0 0.0
      %2820 = vmatprep.subr.mxu0 0.0
      %2821 = vmatpush1.msra.mxu0 0.0
      %2822 = vmatprep.subr.mxu0 0.0
      %2823 = vmatpush1.msra.mxu0 0.0
      %2824 = vmatprep.subr.mxu0 0.0
      %2825 = vmatpush1.msra.mxu0 0.0
      %2826 = vmatprep.subr.mxu0 0.0
      %2827 = vmatpush1.msra.mxu0 0.0
      %2828 = vmatprep.subr.mxu0 0.0
      %2829 = vmatpush1.msra.mxu0 0.0
      %2830 = vmatprep.subr.mxu0 0.0
      %2831 = vmatpush1.msra.mxu0 0.0
      %2832 = vmatprep.subr.mxu0 0.0
      %2833 = vmatpush1.msra.mxu0 0.0
      %2834 = vmatprep.subr.mxu0 0.0
      %2835 = vmatpush1.msra.mxu0 0.0
      %2836 = vmatprep.subr.mxu0 0.0
      %2837 = vmatpush1.msra.mxu0 0.0
      %2838 = vmatprep.subr.mxu0 0.0
      %2839 = vmatpush1.msra.mxu0 0.0
      %2840 = vmatprep.subr.mxu0 0.0
      %2841 = vmatpush1.msra.mxu0 0.0
      %2842 = vmatprep.subr.mxu0 0.0
      %2843 = vmatpush1.msra.mxu0 0.0
      %2844 = vmatprep.subr.mxu0 0.0
      %2845 = vmatpush1.msra.mxu0 0.0
      %2846 = vmatprep.subr.mxu0 0.0
      %2847 = vmatpush1.msra.mxu0 0.0
      %2848 = vmatprep.subr.mxu0 0.0
      %2849 = vmatpush1.msra.mxu0 0.0
      %2850 = vmatprep.subr.mxu0 0.0
      %2851 = vmatpush1.msra.mxu0 0.0
      %2852 = vmatprep.subr.mxu0 0.0
      %2853 = vmatpush1.msra.mxu0 0.0
      %2854 = vmatprep.subr.mxu0 0.0
      %2855 = vmatpush1.msra.mxu0 0.0
      %2856 = vmatprep.subr.mxu0 0.0
      %2857 = vmatpush1.msra.mxu0 0.0
      %2858 = vmatprep.subr.mxu0 0.0
      %2859 = vmatpush1.msra.mxu0 0.0
      %2860 = vmatprep.subr.mxu0 0.0
      %2861 = vmatpush1.msra.mxu0 0.0
      %2862 = vmatprep.subr.mxu0 0.0
      %2863 = vmatpush1.msra.mxu0 0.0
      %2864 = vmatprep.subr.mxu0 0.0
      %2865 = vmatpush1.msra.mxu0 0.0
      %2866 = vmatprep.subr.mxu0 0.0
      %2867 = vmatpush1.msra.mxu0 0.0
      %2868 = vmatprep.subr.mxu0 0.0
      %2869 = vmatpush1.msra.mxu0 0.0
      %2870 = vmatprep.subr.mxu0 0.0
      %2871 = vmatpush1.msra.mxu0 0.0
      %2872 = vmatprep.subr.mxu0 0.0
      %2873 = vmatpush1.msra.mxu0 0.0
      %2874 = vmatprep.mubr.f32.mxu0 0.0
      %2875 = vmatmul.mubr.f32.gmra.mrb[0].mxu0 %v1187
      %v2876 = vpop.f32.mrb[0].mxu0
      %v2877 = vadd.f32 0.0, %v2876
      %v2878 = vpop.f32.mrb[0].mxu0
      %2879 = vmatprep.mubr.f32.mxu0 0.0
      %2880 = vmatmul.mubr.f32.gmra.mrb[0].mxu0 %v1189
      %v2881 = vpop.f32.mrb[0].mxu0
      %v2882 = vadd.f32 0.0, %v2881
      %v2883 = vpop.f32.mrb[0].mxu0
      %2884 = vmatprep.mubr.f32.mxu0 0.0
      %2885 = vmatmul.mubr.f32.gmra.mrb[0].mxu0 %v1191
      %v2886 = vpop.f32.mrb[0].mxu0
      %v2887 = vadd.f32 0.0, %v2886
      %v2888 = vpop.f32.mrb[0].mxu0
      %2889 = vmatprep.mubr.f32.mxu0 0.0
      %2890 = vmatmul.mubr.f32.gmra.mrb[0].mxu0 %v1193
      %v2891 = vpop.f32.mrb[0].mxu0
      %v2892 = vadd.f32 0.0, %v2891
      %v2893 = vpop.f32.mrb[0].mxu0
      %2894 = vmatprep.mubr.f32.mxu0 0.0
      %2895 = vmatmul.mubr.f32.gmra.mrb[0].mxu0 %v1195
      %v2896 = vpop.f32.mrb[0].mxu0
      %v2897 = vadd.f32 0.0, %v2896
      %v2898 = vpop.f32.mrb[0].mxu0
      %2899 = vmatprep.mubr.f32.mxu0 0.0
      %2900 = vmatmul.mubr.f32.gmra.mrb[0].mxu0 %v1197
      %v2901 = vpop.f32.mrb[0].mxu0
      %v2902 = vadd.f32 0.0, %v2901
      %v2903 = vpop.f32.mrb[0].mxu0
      %2904 = vmatprep.mubr.f32.mxu0 0.0
      %2905 = vmatmul.mubr.f32.gmra.mrb[0].mxu0 %v1199
      %v2906 = vpop.f32.mrb[0].mxu0
      %v2907 = vadd.f32 0.0, %v2906
      %v2908 = vpop.f32.mrb[0].mxu0
      %2909 = vmatprep.mubr.f32.mxu0 0.0
      %2910 = vmatmul.mubr.f32.gmra.mrb[0].mxu0 %v1201
      %v2911 = vpop.f32.mrb[0].mxu0
      %v2912 = vadd.f32 0.0, %v2911
      %v2913 = vpop.f32.mrb[0].mxu0
      %2914 = vmatprep.mubr.f32.mxu0 0.0
      %2915 = vmatmul.mubr.f32.gmra.mrb[0].mxu0 %v1203
      %v2916 = vpop.f32.mrb[0].mxu0
      %v2917 = vadd.f32 0.0, %v2916
      %v2918 = vpop.f32.mrb[0].mxu0
      %2919 = vmatprep.mubr.f32.mxu0 0.0
      %2920 = vmatmul.mubr.f32.gmra.mrb[0].mxu0 %v1205
      %v2921 = vpop.f32.mrb[0].mxu0
      %v2922 = vadd.f32 0.0, %v2921
      %v2923 = vpop.f32.mrb[0].mxu0
      %2924 = vmatprep.mubr.f32.mxu0 0.0
      %2925 = vmatmul.mubr.f32.gmra.mrb[0].mxu0 %v1207
      %v2926 = vpop.f32.mrb[0].mxu0
      %v2927 = vadd.f32 0.0, %v2926
      %v2928 = vpop.f32.mrb[0].mxu0
      %2929 = vmatprep.mubr.f32.mxu0 0.0
      %2930 = vmatmul.mubr.f32.gmra.mrb[0].mxu0 %v1209
      %v2931 = vpop.f32.mrb[0].mxu0
      %v2932 = vadd.f32 0.0, %v2931
      %v2933 = vpop.f32.mrb[0].mxu0
      %2934 = vmatprep.mubr.f32.mxu0 0.0
      %2935 = vmatmul.mubr.f32.gmra.mrb[0].mxu0 %v1211
      %v2936 = vpop.f32.mrb[0].mxu0
      %v2937 = vadd.f32 0.0, %v2936
      %v2938 = vpop.f32.mrb[0].mxu0
      %2939 = vmatprep.mubr.f32.mxu0 0.0
      %2940 = vmatmul.mubr.f32.gmra.mrb[0].mxu0 %v1213
      %v2941 = vpop.f32.mrb[0].mxu0
      %v2942 = vadd.f32 0.0, %v2941
      %v2943 = vpop.f32.mrb[0].mxu0
      %2944 = vmatprep.mubr.f32.mxu0 0.0
      %2945 = vmatmul.mubr.f32.gmra.mrb[0].mxu0 %v1215
      %v2946 = vpop.f32.mrb[0].mxu0
      %v2947 = vadd.f32 0.0, %v2946
      %v2948 = vpop.f32.mrb[0].mxu0
      %2949 = vmatprep.mubr.f32.mxu0 0.0
      %2950 = vmatmul.mubr.f32.gmra.mrb[0].mxu0 %v1217
      %v2951 = vpop.f32.mrb[0].mxu0
      %v2952 = vadd.f32 0.0, %v2951
      %v2953 = vpop.f32.mrb[0].mxu0
      %2954 = vmatprep.mubr.f32.mxu0 0.0
      %2955 = vmatmul.mubr.f32.gmra.mrb[0].mxu0 %v1219
      %v2956 = vpop.f32.mrb[0].mxu0
      %v2957 = vadd.f32 0.0, %v2956
      %v2958 = vpop.f32.mrb[0].mxu0
      %2959 = vmatprep.mubr.f32.mxu0 0.0
      %2960 = vmatmul.mubr.f32.gmra.mrb[0].mxu0 %v1221
      %v2961 = vpop.f32.mrb[0].mxu0
      %v2962 = vadd.f32 0.0, %v2961
      %v2963 = vpop.f32.mrb[0].mxu0
      %2964 = vmatprep.mubr.f32.mxu0 0.0
      %2965 = vmatmul.mubr.f32.gmra.mrb[0].mxu0 %v1223
      %v2966 = vpop.f32.mrb[0].mxu0
      %v2967 = vadd.f32 0.0, %v2966
      %v2968 = vpop.f32.mrb[0].mxu0
      %2969 = vmatprep.mubr.f32.mxu0 0.0
      %2970 = vmatmul.mubr.f32.gmra.mrb[0].mxu0 %v1225
      %v2971 = vpop.f32.mrb[0].mxu0
      %v2972 = vadd.f32 0.0, %v2971
      %v2973 = vpop.f32.mrb[0].mxu0
      %2974 = vmatprep.mubr.f32.mxu0 0.0
      %2975 = vmatmul.mubr.f32.gmra.mrb[0].mxu0 %v1227
      %v2976 = vpop.f32.mrb[0].mxu0
      %v2977 = vadd.f32 0.0, %v2976
      %v2978 = vpop.f32.mrb[0].mxu0
      %2979 = vmatprep.mubr.f32.mxu0 0.0
      %2980 = vmatmul.mubr.f32.gmra.mrb[0].mxu0 %v1229
      %v2981 = vpop.f32.mrb[0].mxu0
      %v2982 = vadd.f32 0.0, %v2981
      %v2983 = vpop.f32.mrb[0].mxu0
      %2984 = vmatprep.mubr.f32.mxu0 0.0
      %2985 = vmatmul.mubr.f32.gmra.mrb[0].mxu0 %v1231
      %v2986 = vpop.f32.mrb[0].mxu0
      %v2987 = vadd.f32 0.0, %v2986
      %v2988 = vpop.f32.mrb[0].mxu0
      %2989 = vmatprep.mubr.f32.mxu0 0.0
      %2990 = vmatmul.mubr.f32.gmra.mrb[0].mxu0 %v1233
      %v2991 = vpop.f32.mrb[0].mxu0
      %v2992 = vadd.f32 0.0, %v2991
      %v2993 = vpop.f32.mrb[0].mxu0
      %2994 = vmatprep.mubr.f32.mxu0 0.0
      %2995 = vmatmul.mubr.f32.gmra.mrb[0].mxu0 %v2015
      %v2996 = vpop.f32.mrb[0].mxu0
      %v2997 = vadd.f32 0.0, %v2996
      %v2998 = vpop.f32.mrb[0].mxu0
      %2999 = vmatprep.mubr.f32.mxu0 0.0
      %3000 = vmatmul.mubr.f32.gmra.mrb[0].mxu0 %v2017
      %v3001 = vpop.f32.mrb[0].mxu0
      %v3002 = vadd.f32 0.0, %v3001
      %v3003 = vpop.f32.mrb[0].mxu0
      %3004 = vmatprep.mubr.f32.mxu0 0.0
      %3005 = vmatmul.mubr.f32.gmra.mrb[0].mxu0 %v2019
      %v3006 = vpop.f32.mrb[0].mxu0
      %v3007 = vadd.f32 0.0, %v3006
      %v3008 = vpop.f32.mrb[0].mxu0
      %3009 = vmatprep.mubr.f32.mxu0 0.0
      %3010 = vmatmul.mubr.f32.gmra.mrb[0].mxu0 %v2801
      %v3011 = vpop.f32.mrb[0].mxu0
      %v3012 = vadd.f32 0.0, %v3011
      %v3013 = vpop.f32.mrb[0].mxu0
      %3014 = vmatprep.mubr.f32.mxu0 0.0
      %3015 = vmatmul.mubr.f32.gmra.mrb[0].mxu0 %v2803
      %v3016 = vpop.f32.mrb[0].mxu0
      %v3017 = vadd.f32 0.0, %v3016
      %v3018 = vpop.f32.mrb[0].mxu0
      %3019 = vmatprep.mubr.f32.mxu0 0.0
      %3020 = vmatmul.mubr.f32.gmra.mrb[0].mxu0 %v2805
      %v3021 = vpop.f32.mrb[0].mxu0
      %v3022 = vadd.f32 0.0, %v3021
      %v3023 = vpop.f32.mrb[0].mxu0
      %3024 = vdwg.mxu0
      %v3025 = vadd.f32 %v2762, %v2877
      %v3026 = vadd.f32 %v2763, %v2882
      %v3027 = vadd.f32 %v2764, %v2887
      %v3028 = vadd.f32 %v2765, %v2892
      %v3029 = vadd.f32 %v2766, %v2897
      %v3030 = vadd.f32 %v2767, %v2902
      %v3031 = vadd.f32 %v2768, %v2907
      %v3032 = vadd.f32 %v2769, %v2912
      %v3033 = vadd.f32 %v2770, %v2917
      %v3034 = vadd.f32 %v2771, %v2922
      %v3035 = vadd.f32 %v2772, %v2927
      %v3036 = vadd.f32 %v2773, %v2932
      %v3037 = vadd.f32 %v2774, %v2937
      %v3038 = vadd.f32 %v2775, %v2942
      %v3039 = vadd.f32 %v2776, %v2947
      %v3040 = vadd.f32 %v2777, %v2952
      %v3041 = vadd.f32 %v2778, %v2957
      %v3042 = vadd.f32 %v2779, %v2962
      %v3043 = vadd.f32 %v2780, %v2967
      %v3044 = vadd.f32 %v2781, %v2972
      %v3045 = vadd.f32 %v2782, %v2977
      %v3046 = vadd.f32 %v2783, %v2982
      %v3047 = vadd.f32 %v2784, %v2987
      %v3048 = vadd.f32 %v2785, %v2992
      %v3049 = vadd.f32 %v2786, %v2997
      %v3050 = vadd.f32 %v2787, %v3002
      %v3051 = vadd.f32 %v2788, %v3007
      %v3052 = vadd.f32 %v2789, %v3012
      %v3053 = vadd.f32 %v2790, %v3017
      %v3054 = vadd.f32 %v2791, %v3022
      %v3055 = vld [vmem:[%s3] sm:$0x1]
      %v3057 = vlaneseq
      %v3058 = vshrl.u32 %v3057, 7
      %v3059 = vsub.s32 0, %v3058
      %v3060 = vrot.slane %v3055, %v3059
      %v3062 = vadd.f32 %v3025, %v3060
      %v3063 = vadd.f32 %v3026, %v3060
      %v3064 = vadd.f32 %v3027, %v3060
      %v3065 = vadd.f32 %v3028, %v3060
      %v3066 = vadd.f32 %v3029, %v3060
      %v3067 = vadd.f32 %v3030, %v3060
      %v3068 = vadd.f32 %v3031, %v3060
      %v3069 = vadd.f32 %v3032, %v3060
      %v3070 = vadd.f32 %v3033, %v3060
      %v3071 = vadd.f32 %v3034, %v3060
      %v3072 = vadd.f32 %v3035, %v3060
      %v3073 = vadd.f32 %v3036, %v3060
      %v3074 = vadd.f32 %v3037, %v3060
      %v3075 = vadd.f32 %v3038, %v3060
      %v3076 = vadd.f32 %v3039, %v3060
      %v3077 = vadd.f32 %v3040, %v3060
      %v3078 = vadd.f32 %v3041, %v3060
      %v3079 = vadd.f32 %v3042, %v3060
      %v3080 = vadd.f32 %v3043, %v3060
      %v3081 = vadd.f32 %v3044, %v3060
      %v3082 = vadd.f32 %v3045, %v3060
      %v3083 = vadd.f32 %v3046, %v3060
      %v3084 = vadd.f32 %v3047, %v3060
      %v3085 = vadd.f32 %v3048, %v3060
      %v3086 = vadd.f32 %v3049, %v3060
      %v3087 = vadd.f32 %v3050, %v3060
      %v3088 = vadd.f32 %v3051, %v3060
      %v3089 = vadd.f32 %v3052, %v3060
      %v3090 = vadd.f32 %v3053, %v3060
      %v3091 = vadd.f32 %v3054, %v3060
      %v3092 = vmax.f32 %v3062, 0.0
      %v3093 = vmax.f32 %v3063, 0.0
      %v3094 = vmax.f32 %v3064, 0.0
      %v3095 = vmax.f32 %v3065, 0.0
      %v3096 = vmax.f32 %v3066, 0.0
      %v3097 = vmax.f32 %v3067, 0.0
      %v3098 = vmax.f32 %v3068, 0.0
      %v3099 = vmax.f32 %v3069, 0.0
      %v3100 = vmax.f32 %v3070, 0.0
      %v3101 = vmax.f32 %v3071, 0.0
      %v3102 = vmax.f32 %v3072, 0.0
      %v3103 = vmax.f32 %v3073, 0.0
      %v3104 = vmax.f32 %v3074, 0.0
      %v3105 = vmax.f32 %v3075, 0.0
      %v3106 = vmax.f32 %v3076, 0.0
      %v3107 = vmax.f32 %v3077, 0.0
      %v3108 = vmax.f32 %v3078, 0.0
      %v3109 = vmax.f32 %v3079, 0.0
      %v3110 = vmax.f32 %v3080, 0.0
      %v3111 = vmax.f32 %v3081, 0.0
      %v3112 = vmax.f32 %v3082, 0.0
      %v3113 = vmax.f32 %v3083, 0.0
      %v3114 = vmax.f32 %v3084, 0.0
      %v3115 = vmax.f32 %v3085, 0.0
      %v3116 = vmax.f32 %v3086, 0.0
      %v3117 = vmax.f32 %v3087, 0.0
      %v3118 = vmax.f32 %v3088, 0.0
      %v3119 = vmax.f32 %v3089, 0.0
      %v3120 = vmax.f32 %v3090, 0.0
      %v3121 = vmax.f32 %v3091, 0.0
      %s3122 = ssub.s32 %s381, 1
      %v3123 = vstv %s3122
      %v3124 = vadd.s32 %v3123, 1
      %v3125 = vadd.s32 %v3123, 2
      %v3126 = vadd.s32 %v3123, 3
      %v3127 = vadd.s32 %v3123, 4
      %v3128 = vadd.s32 %v3123, 5
      %v3129 = vadd.s32 %v3123, 6
      %v3130 = vadd.s32 %v3123, 7
      %v3131 = vadd.s32 %v3123, 8
      %v3132 = vadd.s32 %v3123, 9
      %v3133 = vlaneseq
      %v3134 = vshrl.u32 %v3133, 7
      %v3135 = vadd.s32 %v3134, 8
      %v3136 = vadd.s32 %v3134, 16
      %v3137 = vsub.s32 %v3134, 1
      %v3138 = vsub.s32 %v3135, 1
      %v3139 = vsub.s32 %v3136, 1
      %vm3140 = vcmp.ge.s32.totalorder %v3123, 0
      %vm3141 = vcmp.ge.s32.totalorder %v3124, 0
      %vm3142 = vcmp.ge.s32.totalorder %v3125, 0
      %vm3143 = vcmp.ge.s32.totalorder %v3126, 0
      %vm3144 = vcmp.ge.s32.totalorder %v3127, 0
      %vm3145 = vcmp.ge.s32.totalorder %v3128, 0
      %vm3146 = vcmp.ge.s32.totalorder %v3129, 0
      %vm3147 = vcmp.ge.s32.totalorder %v3130, 0
      %vm3148 = vcmp.ge.s32.totalorder %v3131, 0
      %vm3149 = vcmp.ge.s32.totalorder %v3132, 0
      %vm3150 = vcmp.lt.s32.totalorder %v3123, 16
      %vm3151 = vcmp.lt.s32.totalorder %v3124, 16
      %vm3152 = vcmp.lt.s32.totalorder %v3125, 16
      %vm3153 = vcmp.lt.s32.totalorder %v3126, 16
      %vm3154 = vcmp.lt.s32.totalorder %v3127, 16
      %vm3155 = vcmp.lt.s32.totalorder %v3128, 16
      %vm3156 = vcmp.lt.s32.totalorder %v3129, 16
      %vm3157 = vcmp.lt.s32.totalorder %v3130, 16
      %vm3158 = vcmp.lt.s32.totalorder %v3131, 16
      %vm3159 = vcmp.lt.s32.totalorder %v3132, 16
      %vm3160 = vmand %vm3140, %vm3150
      %vm3161 = vmand %vm3141, %vm3151
      %vm3162 = vmand %vm3142, %vm3152
      %vm3163 = vmand %vm3143, %vm3153
      %vm3164 = vmand %vm3144, %vm3154
      %vm3165 = vmand %vm3145, %vm3155
      %vm3166 = vmand %vm3146, %vm3156
      %vm3167 = vmand %vm3147, %vm3157
      %vm3168 = vmand %vm3148, %vm3158
      %vm3169 = vmand %vm3149, %vm3159
      %vm3170 = vcmp.ge.s32.totalorder %v3137, 0
      %vm3171 = vcmp.ge.s32.totalorder %v3138, 0
      %vm3172 = vcmp.ge.s32.totalorder %v3139, 0
      %vm3173 = vmand %vm3160, %vm3170
      %vm3174 = vmand %vm3160, %vm3171
      %vm3175 = vmand %vm3160, %vm3172
      %vm3176 = vmand %vm3161, %vm3170
      %vm3177 = vmand %vm3161, %vm3171
      %vm3178 = vmand %vm3161, %vm3172
      %vm3179 = vmand %vm3162, %vm3170
      %vm3180 = vmand %vm3162, %vm3171
      %vm3181 = vmand %vm3162, %vm3172
      %vm3182 = vmand %vm3163, %vm3170
      %vm3183 = vmand %vm3163, %vm3171
      %vm3184 = vmand %vm3163, %vm3172
      %vm3185 = vmand %vm3164, %vm3170
      %vm3186 = vmand %vm3164, %vm3171
      %vm3187 = vmand %vm3164, %vm3172
      %vm3188 = vmand %vm3165, %vm3170
      %vm3189 = vmand %vm3165, %vm3171
      %vm3190 = vmand %vm3165, %vm3172
      %vm3191 = vmand %vm3166, %vm3170
      %vm3192 = vmand %vm3166, %vm3171
      %vm3193 = vmand %vm3166, %vm3172
      %vm3194 = vmand %vm3167, %vm3170
      %vm3195 = vmand %vm3167, %vm3171
      %vm3196 = vmand %vm3167, %vm3172
      %vm3197 = vmand %vm3168, %vm3170
      %vm3198 = vmand %vm3168, %vm3171
      %vm3199 = vmand %vm3168, %vm3172
      %vm3200 = vmand %vm3169, %vm3170
      %vm3201 = vmand %vm3169, %vm3171
      %vm3202 = vmand %vm3169, %vm3172
      %vm3203 = vcmp.lt.s32.totalorder %v3137, 16
      %vm3204 = vcmp.lt.s32.totalorder %v3138, 16
      %vm3205 = vcmp.lt.s32.totalorder %v3139, 16
      %vm3206 = vmand %vm3173, %vm3203
      %vm3207 = vmand %vm3174, %vm3204
      %vm3208 = vmand %vm3175, %vm3205
      %vm3209 = vmand %vm3176, %vm3203
      %vm3210 = vmand %vm3177, %vm3204
      %vm3211 = vmand %vm3178, %vm3205
      %vm3212 = vmand %vm3179, %vm3203
      %vm3213 = vmand %vm3180, %vm3204
      %vm3214 = vmand %vm3181, %vm3205
      %vm3215 = vmand %vm3182, %vm3203
      %vm3216 = vmand %vm3183, %vm3204
      %vm3217 = vmand %vm3184, %vm3205
      %vm3218 = vmand %vm3185, %vm3203
      %vm3219 = vmand %vm3186, %vm3204
      %vm3220 = vmand %vm3187, %vm3205
      %vm3221 = vmand %vm3188, %vm3203
      %vm3222 = vmand %vm3189, %vm3204
      %vm3223 = vmand %vm3190, %vm3205
      %vm3224 = vmand %vm3191, %vm3203
      %vm3225 = vmand %vm3192, %vm3204
      %vm3226 = vmand %vm3193, %vm3205
      %vm3227 = vmand %vm3194, %vm3203
      %vm3228 = vmand %vm3195, %vm3204
      %vm3229 = vmand %vm3196, %vm3205
      %vm3230 = vmand %vm3197, %vm3203
      %vm3231 = vmand %vm3198, %vm3204
      %vm3232 = vmand %vm3199, %vm3205
      %vm3233 = vmand %vm3200, %vm3203
      %vm3234 = vmand %vm3201, %vm3204
      %vm3235 = vmand %vm3202, %vm3205
      %v3236 = vsel %vm3206, %v3092, 0.0
      %v3237 = vsel %vm3207, %v3093, 0.0
      %v3238 = vsel %vm3208, %v3094, 0.0
      %v3239 = vsel %vm3209, %v3095, 0.0
      %v3240 = vsel %vm3210, %v3096, 0.0
      %v3241 = vsel %vm3211, %v3097, 0.0
      %v3242 = vsel %vm3212, %v3098, 0.0
      %v3243 = vsel %vm3213, %v3099, 0.0
      %v3244 = vsel %vm3214, %v3100, 0.0
      %v3245 = vsel %vm3215, %v3101, 0.0
      %v3246 = vsel %vm3216, %v3102, 0.0
      %v3247 = vsel %vm3217, %v3103, 0.0
      %v3248 = vsel %vm3218, %v3104, 0.0
      %v3249 = vsel %vm3219, %v3105, 0.0
      %v3250 = vsel %vm3220, %v3106, 0.0
      %v3251 = vsel %vm3221, %v3107, 0.0
      %v3252 = vsel %vm3222, %v3108, 0.0
      %v3253 = vsel %vm3223, %v3109, 0.0
      %v3254 = vsel %vm3224, %v3110, 0.0
      %v3255 = vsel %vm3225, %v3111, 0.0
      %v3256 = vsel %vm3226, %v3112, 0.0
      %v3257 = vsel %vm3227, %v3113, 0.0
      %v3258 = vsel %vm3228, %v3114, 0.0
      %v3259 = vsel %vm3229, %v3115, 0.0
      %v3260 = vsel %vm3230, %v3116, 0.0
      %v3261 = vsel %vm3231, %v3117, 0.0
      %v3262 = vsel %vm3232, %v3118, 0.0
      %v3263 = vsel %vm3233, %v3119, 0.0
      %v3264 = vsel %vm3234, %v3120, 0.0
      %v3265 = vsel %vm3235, %v3121, 0.0
      %v3266 = vld [vmem:[%s4] sm:$0xff]
      %v3291 = vrot.slane %v3236, 1
      %v3292 = vrot.slane %v3237, 1
      %v3293 = vsel %vm471, %v3291, %v3292
      %v3294 = vrot.slane %v3238, 1
      %v3295 = vsel %vm471, %v3292, %v3294
      %v3296 = vrot.slane %v3239, 1
      %v3297 = vrot.slane %v3240, 1
      %v3298 = vsel %vm471, %v3296, %v3297
      %v3299 = vrot.slane %v3241, 1
      %v3300 = vsel %vm471, %v3297, %v3299
      %v3301 = vrot.slane %v3242, 1
      %v3302 = vrot.slane %v3243, 1
      %v3303 = vsel %vm471, %v3301, %v3302
      %v3304 = vrot.slane %v3244, 1
      %v3305 = vsel %vm471, %v3302, %v3304
      %v3306 = vrot.slane %v3245, 1
      %v3307 = vrot.slane %v3246, 1
      %v3308 = vsel %vm471, %v3306, %v3307
      %v3309 = vrot.slane %v3247, 1
      %v3310 = vsel %vm471, %v3307, %v3309
      %v3311 = vrot.slane %v3248, 1
      %v3312 = vrot.slane %v3249, 1
      %v3313 = vsel %vm471, %v3311, %v3312
      %v3314 = vrot.slane %v3250, 1
      %v3315 = vsel %vm471, %v3312, %v3314
      %v3316 = vrot.slane %v3251, 1
      %v3317 = vrot.slane %v3252, 1
      %v3318 = vsel %vm471, %v3316, %v3317
      %v3319 = vrot.slane %v3253, 1
      %v3320 = vsel %vm471, %v3317, %v3319
      %v3321 = vrot.slane %v3254, 1
      %v3322 = vrot.slane %v3255, 1
      %v3323 = vsel %vm471, %v3321, %v3322
      %v3324 = vrot.slane %v3256, 1
      %v3325 = vsel %vm471, %v3322, %v3324
      %v3326 = vrot.slane %v3257, 1
      %v3327 = vrot.slane %v3258, 1
      %v3328 = vsel %vm471, %v3326, %v3327
      %v3329 = vrot.slane %v3259, 1
      %v3330 = vsel %vm471, %v3327, %v3329
      %s3331 = scalar_lea.vmem %s4, 8
      %v3332 = vld [vmem:[%s3331] sm:$0xff]
      %vm3333 = vcmask 64512
      %v3334 = vsel %vm3333, %v3293, 0
      %v3336 = vsel %vm3333, %v3295, 0
      %v3338 = vsel %vm3333, %v3298, 0
      %v3340 = vsel %vm3333, %v3300, 0
      %v3342 = vsel %vm3333, %v3303, 0
      %v3344 = vsel %vm3333, %v3305, 0
      %v3346 = vsel %vm3333, %v3308, 0
      %v3348 = vsel %vm3333, %v3310, 0
      %v3350 = vsel %vm3333, %v3313, 0
      %v3352 = vsel %vm3333, %v3315, 0
      %v3354 = vsel %vm3333, %v3318, 0
      %v3356 = vsel %vm3333, %v3320, 0
      %v3358 = vsel %vm3333, %v3323, 0
      %v3360 = vsel %vm3333, %v3325, 0
      %v3362 = vsel %vm3333, %v3328, 0
      %v3364 = vsel %vm3333, %v3330, 0
      %3366 = vmatprep.subr.mxu0 0.0
      %3367 = vmatpush1.msra.mxu0 %v3332
      %3368 = vmatprep.subr.mxu0 0.0
      %3369 = vmatpush1.msra.mxu0 0.0
      %3370 = vmatprep.subr.mxu0 0.0
      %3371 = vmatpush1.msra.mxu0 0.0
      %3372 = vmatprep.subr.mxu0 0.0
      %3373 = vmatpush1.msra.mxu0 0.0
      %3374 = vmatprep.subr.mxu0 0.0
      %3375 = vmatpush1.msra.mxu0 0.0
      %3376 = vmatprep.subr.mxu0 0.0
      %3377 = vmatpush1.msra.mxu0 0.0
      %3378 = vmatprep.subr.mxu0 0.0
      %3379 = vmatpush1.msra.mxu0 0.0
      %3380 = vmatprep.subr.mxu0 0.0
      %3381 = vmatpush1.msra.mxu0 0.0
      %3382 = vmatprep.subr.mxu0 0.0
      %3383 = vmatpush1.msra.mxu0 0.0
      %3384 = vmatprep.subr.mxu0 0.0
      %3385 = vmatpush1.msra.mxu0 0.0
      %3386 = vmatprep.subr.mxu0 0.0
      %3387 = vmatpush1.msra.mxu0 0.0
      %3388 = vmatprep.subr.mxu0 0.0
      %3389 = vmatpush1.msra.mxu0 0.0
      %3390 = vmatprep.subr.mxu0 0.0
      %3391 = vmatpush1.msra.mxu0 0.0
      %3392 = vmatprep.subr.mxu0 0.0
      %3393 = vmatpush1.msra.mxu0 0.0
      %3394 = vmatprep.subr.mxu0 0.0
      %3395 = vmatpush1.msra.mxu0 0.0
      %3396 = vmatprep.subr.mxu0 0.0
      %3397 = vmatpush1.msra.mxu0 0.0
      %3398 = vmatprep.subr.mxu0 0.0
      %3399 = vmatpush1.msra.mxu0 0.0
      %3400 = vmatprep.subr.mxu0 0.0
      %3401 = vmatpush1.msra.mxu0 0.0
      %3402 = vmatprep.subr.mxu0 0.0
      %3403 = vmatpush1.msra.mxu0 0.0
      %3404 = vmatprep.subr.mxu0 0.0
      %3405 = vmatpush1.msra.mxu0 0.0
      %3406 = vmatprep.subr.mxu0 0.0
      %3407 = vmatpush1.msra.mxu0 0.0
      %3408 = vmatprep.subr.mxu0 0.0
      %3409 = vmatpush1.msra.mxu0 0.0
      %3410 = vmatprep.subr.mxu0 0.0
      %3411 = vmatpush1.msra.mxu0 0.0
      %3412 = vmatprep.subr.mxu0 0.0
      %3413 = vmatpush1.msra.mxu0 0.0
      %3414 = vmatprep.subr.mxu0 0.0
      %3415 = vmatpush1.msra.mxu0 0.0
      %3416 = vmatprep.subr.mxu0 0.0
      %3417 = vmatpush1.msra.mxu0 0.0
      %3418 = vmatprep.subr.mxu0 0.0
      %3419 = vmatpush1.msra.mxu0 0.0
      %3420 = vmatprep.subr.mxu0 0.0
      %3421 = vmatpush1.msra.mxu0 0.0
      %3422 = vmatprep.subr.mxu0 0.0
      %3423 = vmatpush1.msra.mxu0 0.0
      %3424 = vmatprep.subr.mxu0 0.0
      %3425 = vmatpush1.msra.mxu0 0.0
      %3426 = vmatprep.subr.mxu0 0.0
      %3427 = vmatpush1.msra.mxu0 0.0
      %3428 = vmatprep.subr.mxu0 0.0
      %3429 = vmatpush1.msra.mxu0 0.0
      %3430 = vmatprep.mubr.f32.mxu0 0.0
      %3431 = vmatmul.mubr.f32.gmra.mrb[0].mxu0 %v3334
      %v3432 = vpop.f32.mrb[0].mxu0
      %v3433 = vadd.f32 0.0, %v3432
      %v3434 = vpop.f32.mrb[0].mxu0
      %3435 = vmatprep.mubr.f32.mxu0 0.0
      %3436 = vmatmul.mubr.f32.gmra.mrb[0].mxu0 %v3336
      %v3437 = vpop.f32.mrb[0].mxu0
      %v3438 = vadd.f32 0.0, %v3437
      %v3439 = vpop.f32.mrb[0].mxu0
      %3440 = vmatprep.mubr.f32.mxu0 0.0
      %3441 = vmatmul.mubr.f32.gmra.mrb[0].mxu0 %v3338
      %v3442 = vpop.f32.mrb[0].mxu0
      %v3443 = vadd.f32 0.0, %v3442
      %v3444 = vpop.f32.mrb[0].mxu0
      %3445 = vmatprep.mubr.f32.mxu0 0.0
      %3446 = vmatmul.mubr.f32.gmra.mrb[0].mxu0 %v3340
      %v3447 = vpop.f32.mrb[0].mxu0
      %v3448 = vadd.f32 0.0, %v3447
      %v3449 = vpop.f32.mrb[0].mxu0
      %3450 = vmatprep.mubr.f32.mxu0 0.0
      %3451 = vmatmul.mubr.f32.gmra.mrb[0].mxu0 %v3342
      %v3452 = vpop.f32.mrb[0].mxu0
      %v3453 = vadd.f32 0.0, %v3452
      %v3454 = vpop.f32.mrb[0].mxu0
      %3455 = vmatprep.mubr.f32.mxu0 0.0
      %3456 = vmatmul.mubr.f32.gmra.mrb[0].mxu0 %v3344
      %v3457 = vpop.f32.mrb[0].mxu0
      %v3458 = vadd.f32 0.0, %v3457
      %v3459 = vpop.f32.mrb[0].mxu0
      %3460 = vmatprep.mubr.f32.mxu0 0.0
      %3461 = vmatmul.mubr.f32.gmra.mrb[0].mxu0 %v3346
      %v3462 = vpop.f32.mrb[0].mxu0
      %v3463 = vadd.f32 0.0, %v3462
      %v3464 = vpop.f32.mrb[0].mxu0
      %3465 = vmatprep.mubr.f32.mxu0 0.0
      %3466 = vmatmul.mubr.f32.gmra.mrb[0].mxu0 %v3348
      %v3467 = vpop.f32.mrb[0].mxu0
      %v3468 = vadd.f32 0.0, %v3467
      %v3469 = vpop.f32.mrb[0].mxu0
      %3470 = vmatprep.mubr.f32.mxu0 0.0
      %3471 = vmatmul.mubr.f32.gmra.mrb[0].mxu0 %v3350
      %v3472 = vpop.f32.mrb[0].mxu0
      %v3473 = vadd.f32 0.0, %v3472
      %v3474 = vpop.f32.mrb[0].mxu0
      %3475 = vmatprep.mubr.f32.mxu0 0.0
      %3476 = vmatmul.mubr.f32.gmra.mrb[0].mxu0 %v3352
      %v3477 = vpop.f32.mrb[0].mxu0
      %v3478 = vadd.f32 0.0, %v3477
      %v3479 = vpop.f32.mrb[0].mxu0
      %3480 = vmatprep.mubr.f32.mxu0 0.0
      %3481 = vmatmul.mubr.f32.gmra.mrb[0].mxu0 %v3354
      %v3482 = vpop.f32.mrb[0].mxu0
      %v3483 = vadd.f32 0.0, %v3482
      %v3484 = vpop.f32.mrb[0].mxu0
      %3485 = vmatprep.mubr.f32.mxu0 0.0
      %3486 = vmatmul.mubr.f32.gmra.mrb[0].mxu0 %v3356
      %v3487 = vpop.f32.mrb[0].mxu0
      %v3488 = vadd.f32 0.0, %v3487
      %v3489 = vpop.f32.mrb[0].mxu0
      %3490 = vmatprep.mubr.f32.mxu0 0.0
      %3491 = vmatmul.mubr.f32.gmra.mrb[0].mxu0 %v3358
      %v3492 = vpop.f32.mrb[0].mxu0
      %v3493 = vadd.f32 0.0, %v3492
      %v3494 = vpop.f32.mrb[0].mxu0
      %3495 = vmatprep.mubr.f32.mxu0 0.0
      %3496 = vmatmul.mubr.f32.gmra.mrb[0].mxu0 %v3360
      %v3497 = vpop.f32.mrb[0].mxu0
      %v3498 = vadd.f32 0.0, %v3497
      %v3499 = vpop.f32.mrb[0].mxu0
      %3500 = vmatprep.mubr.f32.mxu0 0.0
      %3501 = vmatmul.mubr.f32.gmra.mrb[0].mxu0 %v3362
      %v3502 = vpop.f32.mrb[0].mxu0
      %v3503 = vadd.f32 0.0, %v3502
      %v3504 = vpop.f32.mrb[0].mxu0
      %3505 = vmatprep.mubr.f32.mxu0 0.0
      %3506 = vmatmul.mubr.f32.gmra.mrb[0].mxu0 %v3364
      %v3507 = vpop.f32.mrb[0].mxu0
      %v3508 = vadd.f32 0.0, %v3507
      %v3509 = vpop.f32.mrb[0].mxu0
      %3510 = vdwg.mxu0
      %v3511 = vsel %vm3333, %v3236, 0
      %v3513 = vsel %vm3333, %v3237, 0
      %v3515 = vsel %vm3333, %v3239, 0
      %v3517 = vsel %vm3333, %v3240, 0
      %v3519 = vsel %vm3333, %v3242, 0
      %v3521 = vsel %vm3333, %v3243, 0
      %v3523 = vsel %vm3333, %v3245, 0
      %v3525 = vsel %vm3333, %v3246, 0
      %v3527 = vsel %vm3333, %v3248, 0
      %v3529 = vsel %vm3333, %v3249, 0
      %v3531 = vsel %vm3333, %v3251, 0
      %v3533 = vsel %vm3333, %v3252, 0
      %v3535 = vsel %vm3333, %v3254, 0
      %v3537 = vsel %vm3333, %v3255, 0
      %v3539 = vsel %vm3333, %v3257, 0
      %v3541 = vsel %vm3333, %v3258, 0
      %3543 = vmatprep.subr.mxu0 0.0
      %3544 = vmatpush1.msra.mxu0 %v3266
      %3545 = vmatprep.subr.mxu0 0.0
      %3546 = vmatpush1.msra.mxu0 0.0
      %3547 = vmatprep.subr.mxu0 0.0
      %3548 = vmatpush1.msra.mxu0 0.0
      %3549 = vmatprep.subr.mxu0 0.0
      %3550 = vmatpush1.msra.mxu0 0.0
      %3551 = vmatprep.subr.mxu0 0.0
      %3552 = vmatpush1.msra.mxu0 0.0
      %3553 = vmatprep.subr.mxu0 0.0
      %3554 = vmatpush1.msra.mxu0 0.0
      %3555 = vmatprep.subr.mxu0 0.0
      %3556 = vmatpush1.msra.mxu0 0.0
      %3557 = vmatprep.subr.mxu0 0.0
      %3558 = vmatpush1.msra.mxu0 0.0
      %3559 = vmatprep.subr.mxu0 0.0
      %3560 = vmatpush1.msra.mxu0 0.0
      %3561 = vmatprep.subr.mxu0 0.0
      %3562 = vmatpush1.msra.mxu0 0.0
      %3563 = vmatprep.subr.mxu0 0.0
      %3564 = vmatpush1.msra.mxu0 0.0
      %3565 = vmatprep.subr.mxu0 0.0
      %3566 = vmatpush1.msra.mxu0 0.0
      %3567 = vmatprep.subr.mxu0 0.0
      %3568 = vmatpush1.msra.mxu0 0.0
      %3569 = vmatprep.subr.mxu0 0.0
      %3570 = vmatpush1.msra.mxu0 0.0
      %3571 = vmatprep.subr.mxu0 0.0
      %3572 = vmatpush1.msra.mxu0 0.0
      %3573 = vmatprep.subr.mxu0 0.0
      %3574 = vmatpush1.msra.mxu0 0.0
      %3575 = vmatprep.subr.mxu0 0.0
      %3576 = vmatpush1.msra.mxu0 0.0
      %3577 = vmatprep.subr.mxu0 0.0
      %3578 = vmatpush1.msra.mxu0 0.0
      %3579 = vmatprep.subr.mxu0 0.0
      %3580 = vmatpush1.msra.mxu0 0.0
      %3581 = vmatprep.subr.mxu0 0.0
      %3582 = vmatpush1.msra.mxu0 0.0
      %3583 = vmatprep.subr.mxu0 0.0
      %3584 = vmatpush1.msra.mxu0 0.0
      %3585 = vmatprep.subr.mxu0 0.0
      %3586 = vmatpush1.msra.mxu0 0.0
      %3587 = vmatprep.subr.mxu0 0.0
      %3588 = vmatpush1.msra.mxu0 0.0
      %3589 = vmatprep.subr.mxu0 0.0
      %3590 = vmatpush1.msra.mxu0 0.0
      %3591 = vmatprep.subr.mxu0 0.0
      %3592 = vmatpush1.msra.mxu0 0.0
      %3593 = vmatprep.subr.mxu0 0.0
      %3594 = vmatpush1.msra.mxu0 0.0
      %3595 = vmatprep.subr.mxu0 0.0
      %3596 = vmatpush1.msra.mxu0 0.0
      %3597 = vmatprep.subr.mxu0 0.0
      %3598 = vmatpush1.msra.mxu0 0.0
      %3599 = vmatprep.subr.mxu0 0.0
      %3600 = vmatpush1.msra.mxu0 0.0
      %3601 = vmatprep.subr.mxu0 0.0
      %3602 = vmatpush1.msra.mxu0 0.0
      %3603 = vmatprep.subr.mxu0 0.0
      %3604 = vmatpush1.msra.mxu0 0.0
      %3605 = vmatprep.subr.mxu0 0.0
      %3606 = vmatpush1.msra.mxu0 0.0
      %3607 = vmatprep.mubr.f32.mxu0 0.0
      %3608 = vmatmul.mubr.f32.gmra.mrb[0].mxu0 %v3511
      %v3609 = vpop.f32.mrb[0].mxu0
      %v3610 = vadd.f32 %v3433, %v3609
      %v3611 = vpop.f32.mrb[0].mxu0
      %3612 = vmatprep.mubr.f32.mxu0 0.0
      %3613 = vmatmul.mubr.f32.gmra.mrb[0].mxu0 %v3513
      %v3614 = vpop.f32.mrb[0].mxu0
      %v3615 = vadd.f32 %v3438, %v3614
      %v3616 = vpop.f32.mrb[0].mxu0
      %3617 = vmatprep.mubr.f32.mxu0 0.0
      %3618 = vmatmul.mubr.f32.gmra.mrb[0].mxu0 %v3515
      %v3619 = vpop.f32.mrb[0].mxu0
      %v3620 = vadd.f32 %v3443, %v3619
      %v3621 = vpop.f32.mrb[0].mxu0
      %3622 = vmatprep.mubr.f32.mxu0 0.0
      %3623 = vmatmul.mubr.f32.gmra.mrb[0].mxu0 %v3517
      %v3624 = vpop.f32.mrb[0].mxu0
      %v3625 = vadd.f32 %v3448, %v3624
      %v3626 = vpop.f32.mrb[0].mxu0
      %3627 = vmatprep.mubr.f32.mxu0 0.0
      %3628 = vmatmul.mubr.f32.gmra.mrb[0].mxu0 %v3519
      %v3629 = vpop.f32.mrb[0].mxu0
      %v3630 = vadd.f32 %v3453, %v3629
      %v3631 = vpop.f32.mrb[0].mxu0
      %3632 = vmatprep.mubr.f32.mxu0 0.0
      %3633 = vmatmul.mubr.f32.gmra.mrb[0].mxu0 %v3521
      %v3634 = vpop.f32.mrb[0].mxu0
      %v3635 = vadd.f32 %v3458, %v3634
      %v3636 = vpop.f32.mrb[0].mxu0
      %3637 = vmatprep.mubr.f32.mxu0 0.0
      %3638 = vmatmul.mubr.f32.gmra.mrb[0].mxu0 %v3523
      %v3639 = vpop.f32.mrb[0].mxu0
      %v3640 = vadd.f32 %v3463, %v3639
      %v3641 = vpop.f32.mrb[0].mxu0
      %3642 = vmatprep.mubr.f32.mxu0 0.0
      %3643 = vmatmul.mubr.f32.gmra.mrb[0].mxu0 %v3525
      %v3644 = vpop.f32.mrb[0].mxu0
      %v3645 = vadd.f32 %v3468, %v3644
      %v3646 = vpop.f32.mrb[0].mxu0
      %3647 = vmatprep.mubr.f32.mxu0 0.0
      %3648 = vmatmul.mubr.f32.gmra.mrb[0].mxu0 %v3527
      %v3649 = vpop.f32.mrb[0].mxu0
      %v3650 = vadd.f32 %v3473, %v3649
      %v3651 = vpop.f32.mrb[0].mxu0
      %3652 = vmatprep.mubr.f32.mxu0 0.0
      %3653 = vmatmul.mubr.f32.gmra.mrb[0].mxu0 %v3529
      %v3654 = vpop.f32.mrb[0].mxu0
      %v3655 = vadd.f32 %v3478, %v3654
      %v3656 = vpop.f32.mrb[0].mxu0
      %3657 = vmatprep.mubr.f32.mxu0 0.0
      %3658 = vmatmul.mubr.f32.gmra.mrb[0].mxu0 %v3531
      %v3659 = vpop.f32.mrb[0].mxu0
      %v3660 = vadd.f32 %v3483, %v3659
      %v3661 = vpop.f32.mrb[0].mxu0
      %3662 = vmatprep.mubr.f32.mxu0 0.0
      %3663 = vmatmul.mubr.f32.gmra.mrb[0].mxu0 %v3533
      %v3664 = vpop.f32.mrb[0].mxu0
      %v3665 = vadd.f32 %v3488, %v3664
      %v3666 = vpop.f32.mrb[0].mxu0
      %3667 = vmatprep.mubr.f32.mxu0 0.0
      %3668 = vmatmul.mubr.f32.gmra.mrb[0].mxu0 %v3535
      %v3669 = vpop.f32.mrb[0].mxu0
      %v3670 = vadd.f32 %v3493, %v3669
      %v3671 = vpop.f32.mrb[0].mxu0
      %3672 = vmatprep.mubr.f32.mxu0 0.0
      %3673 = vmatmul.mubr.f32.gmra.mrb[0].mxu0 %v3537
      %v3674 = vpop.f32.mrb[0].mxu0
      %v3675 = vadd.f32 %v3498, %v3674
      %v3676 = vpop.f32.mrb[0].mxu0
      %3677 = vmatprep.mubr.f32.mxu0 0.0
      %3678 = vmatmul.mubr.f32.gmra.mrb[0].mxu0 %v3539
      %v3679 = vpop.f32.mrb[0].mxu0
      %v3680 = vadd.f32 %v3503, %v3679
      %v3681 = vpop.f32.mrb[0].mxu0
      %3682 = vmatprep.mubr.f32.mxu0 0.0
      %3683 = vmatmul.mubr.f32.gmra.mrb[0].mxu0 %v3541
      %v3684 = vpop.f32.mrb[0].mxu0
      %v3685 = vadd.f32 %v3508, %v3684
      %v3686 = vpop.f32.mrb[0].mxu0
      %3687 = vdwg.mxu0
      %v3688 = vrot.slane %v3236, 2
      %v3689 = vrot.slane %v3237, 2
      %v3690 = vsel %vm1102, %v3688, %v3689
      %v3691 = vrot.slane %v3238, 2
      %v3692 = vsel %vm1102, %v3689, %v3691
      %v3693 = vrot.slane %v3239, 2
      %v3694 = vrot.slane %v3240, 2
      %v3695 = vsel %vm1102, %v3693, %v3694
      %v3696 = vrot.slane %v3241, 2
      %v3697 = vsel %vm1102, %v3694, %v3696
      %v3698 = vrot.slane %v3242, 2
      %v3699 = vrot.slane %v3243, 2
      %v3700 = vsel %vm1102, %v3698, %v3699
      %v3701 = vrot.slane %v3244, 2
      %v3702 = vsel %vm1102, %v3699, %v3701
      %v3703 = vrot.slane %v3245, 2
      %v3704 = vrot.slane %v3246, 2
      %v3705 = vsel %vm1102, %v3703, %v3704
      %v3706 = vrot.slane %v3247, 2
      %v3707 = vsel %vm1102, %v3704, %v3706
      %v3708 = vrot.slane %v3248, 2
      %v3709 = vrot.slane %v3249, 2
      %v3710 = vsel %vm1102, %v3708, %v3709
      %v3711 = vrot.slane %v3250, 2
      %v3712 = vsel %vm1102, %v3709, %v3711
      %v3713 = vrot.slane %v3251, 2
      %v3714 = vrot.slane %v3252, 2
      %v3715 = vsel %vm1102, %v3713, %v3714
      %v3716 = vrot.slane %v3253, 2
      %v3717 = vsel %vm1102, %v3714, %v3716
      %v3718 = vrot.slane %v3254, 2
      %v3719 = vrot.slane %v3255, 2
      %v3720 = vsel %vm1102, %v3718, %v3719
      %v3721 = vrot.slane %v3256, 2
      %v3722 = vsel %vm1102, %v3719, %v3721
      %v3723 = vrot.slane %v3257, 2
      %v3724 = vrot.slane %v3258, 2
      %v3725 = vsel %vm1102, %v3723, %v3724
      %v3726 = vrot.slane %v3259, 2
      %v3727 = vsel %vm1102, %v3724, %v3726
      %s3728 = scalar_lea.vmem %s4, 16
      %v3729 = vld [vmem:[%s3728] sm:$0xff]
      %v3730 = vsel %vm3333, %v3690, 0
      %v3732 = vsel %vm3333, %v3692, 0
      %v3734 = vsel %vm3333, %v3695, 0
      %v3736 = vsel %vm3333, %v3697, 0
      %v3738 = vsel %vm3333, %v3700, 0
      %v3740 = vsel %vm3333, %v3702, 0
      %v3742 = vsel %vm3333, %v3705, 0
      %v3744 = vsel %vm3333, %v3707, 0
      %v3746 = vsel %vm3333, %v3710, 0
      %v3748 = vsel %vm3333, %v3712, 0
      %v3750 = vsel %vm3333, %v3715, 0
      %v3752 = vsel %vm3333, %v3717, 0
      %v3754 = vsel %vm3333, %v3720, 0
      %v3756 = vsel %vm3333, %v3722, 0
      %v3758 = vsel %vm3333, %v3725, 0
      %v3760 = vsel %vm3333, %v3727, 0
      %3762 = vmatprep.subr.mxu0 0.0
      %3763 = vmatpush1.msra.mxu0 %v3729
      %3764 = vmatprep.subr.mxu0 0.0
      %3765 = vmatpush1.msra.mxu0 0.0
      %3766 = vmatprep.subr.mxu0 0.0
      %3767 = vmatpush1.msra.mxu0 0.0
      %3768 = vmatprep.subr.mxu0 0.0
      %3769 = vmatpush1.msra.mxu0 0.0
      %3770 = vmatprep.subr.mxu0 0.0
      %3771 = vmatpush1.msra.mxu0 0.0
      %3772 = vmatprep.subr.mxu0 0.0
      %3773 = vmatpush1.msra.mxu0 0.0
      %3774 = vmatprep.subr.mxu0 0.0
      %3775 = vmatpush1.msra.mxu0 0.0
      %3776 = vmatprep.subr.mxu0 0.0
      %3777 = vmatpush1.msra.mxu0 0.0
      %3778 = vmatprep.subr.mxu0 0.0
      %3779 = vmatpush1.msra.mxu0 0.0
      %3780 = vmatprep.subr.mxu0 0.0
      %3781 = vmatpush1.msra.mxu0 0.0
      %3782 = vmatprep.subr.mxu0 0.0
      %3783 = vmatpush1.msra.mxu0 0.0
      %3784 = vmatprep.subr.mxu0 0.0
      %3785 = vmatpush1.msra.mxu0 0.0
      %3786 = vmatprep.subr.mxu0 0.0
      %3787 = vmatpush1.msra.mxu0 0.0
      %3788 = vmatprep.subr.mxu0 0.0
      %3789 = vmatpush1.msra.mxu0 0.0
      %3790 = vmatprep.subr.mxu0 0.0
      %3791 = vmatpush1.msra.mxu0 0.0
      %3792 = vmatprep.subr.mxu0 0.0
      %3793 = vmatpush1.msra.mxu0 0.0
      %3794 = vmatprep.subr.mxu0 0.0
      %3795 = vmatpush1.msra.mxu0 0.0
      %3796 = vmatprep.subr.mxu0 0.0
      %3797 = vmatpush1.msra.mxu0 0.0
      %3798 = vmatprep.subr.mxu0 0.0
      %3799 = vmatpush1.msra.mxu0 0.0
      %3800 = vmatprep.subr.mxu0 0.0
      %3801 = vmatpush1.msra.mxu0 0.0
      %3802 = vmatprep.subr.mxu0 0.0
      %3803 = vmatpush1.msra.mxu0 0.0
      %3804 = vmatprep.subr.mxu0 0.0
      %3805 = vmatpush1.msra.mxu0 0.0
      %3806 = vmatprep.subr.mxu0 0.0
      %3807 = vmatpush1.msra.mxu0 0.0
      %3808 = vmatprep.subr.mxu0 0.0
      %3809 = vmatpush1.msra.mxu0 0.0
      %3810 = vmatprep.subr.mxu0 0.0
      %3811 = vmatpush1.msra.mxu0 0.0
      %3812 = vmatprep.subr.mxu0 0.0
      %3813 = vmatpush1.msra.mxu0 0.0
      %3814 = vmatprep.subr.mxu0 0.0
      %3815 = vmatpush1.msra.mxu0 0.0
      %3816 = vmatprep.subr.mxu0 0.0
      %3817 = vmatpush1.msra.mxu0 0.0
      %3818 = vmatprep.subr.mxu0 0.0
      %3819 = vmatpush1.msra.mxu0 0.0
      %3820 = vmatprep.subr.mxu0 0.0
      %3821 = vmatpush1.msra.mxu0 0.0
      %3822 = vmatprep.subr.mxu0 0.0
      %3823 = vmatpush1.msra.mxu0 0.0
      %3824 = vmatprep.subr.mxu0 0.0
      %3825 = vmatpush1.msra.mxu0 0.0
      %3826 = vmatprep.mubr.f32.mxu0 0.0
      %3827 = vmatmul.mubr.f32.gmra.mrb[0].mxu0 %v3730
      %v3828 = vpop.f32.mrb[0].mxu0
      %v3829 = vadd.f32 0.0, %v3828
      %v3830 = vpop.f32.mrb[0].mxu0
      %3831 = vmatprep.mubr.f32.mxu0 0.0
      %3832 = vmatmul.mubr.f32.gmra.mrb[0].mxu0 %v3732
      %v3833 = vpop.f32.mrb[0].mxu0
      %v3834 = vadd.f32 0.0, %v3833
      %v3835 = vpop.f32.mrb[0].mxu0
      %3836 = vmatprep.mubr.f32.mxu0 0.0
      %3837 = vmatmul.mubr.f32.gmra.mrb[0].mxu0 %v3734
      %v3838 = vpop.f32.mrb[0].mxu0
      %v3839 = vadd.f32 0.0, %v3838
      %v3840 = vpop.f32.mrb[0].mxu0
      %3841 = vmatprep.mubr.f32.mxu0 0.0
      %3842 = vmatmul.mubr.f32.gmra.mrb[0].mxu0 %v3736
      %v3843 = vpop.f32.mrb[0].mxu0
      %v3844 = vadd.f32 0.0, %v3843
      %v3845 = vpop.f32.mrb[0].mxu0
      %3846 = vmatprep.mubr.f32.mxu0 0.0
      %3847 = vmatmul.mubr.f32.gmra.mrb[0].mxu0 %v3738
      %v3848 = vpop.f32.mrb[0].mxu0
      %v3849 = vadd.f32 0.0, %v3848
      %v3850 = vpop.f32.mrb[0].mxu0
      %3851 = vmatprep.mubr.f32.mxu0 0.0
      %3852 = vmatmul.mubr.f32.gmra.mrb[0].mxu0 %v3740
      %v3853 = vpop.f32.mrb[0].mxu0
      %v3854 = vadd.f32 0.0, %v3853
      %v3855 = vpop.f32.mrb[0].mxu0
      %3856 = vmatprep.mubr.f32.mxu0 0.0
      %3857 = vmatmul.mubr.f32.gmra.mrb[0].mxu0 %v3742
      %v3858 = vpop.f32.mrb[0].mxu0
      %v3859 = vadd.f32 0.0, %v3858
      %v3860 = vpop.f32.mrb[0].mxu0
      %3861 = vmatprep.mubr.f32.mxu0 0.0
      %3862 = vmatmul.mubr.f32.gmra.mrb[0].mxu0 %v3744
      %v3863 = vpop.f32.mrb[0].mxu0
      %v3864 = vadd.f32 0.0, %v3863
      %v3865 = vpop.f32.mrb[0].mxu0
      %3866 = vmatprep.mubr.f32.mxu0 0.0
      %3867 = vmatmul.mubr.f32.gmra.mrb[0].mxu0 %v3746
      %v3868 = vpop.f32.mrb[0].mxu0
      %v3869 = vadd.f32 0.0, %v3868
      %v3870 = vpop.f32.mrb[0].mxu0
      %3871 = vmatprep.mubr.f32.mxu0 0.0
      %3872 = vmatmul.mubr.f32.gmra.mrb[0].mxu0 %v3748
      %v3873 = vpop.f32.mrb[0].mxu0
      %v3874 = vadd.f32 0.0, %v3873
      %v3875 = vpop.f32.mrb[0].mxu0
      %3876 = vmatprep.mubr.f32.mxu0 0.0
      %3877 = vmatmul.mubr.f32.gmra.mrb[0].mxu0 %v3750
      %v3878 = vpop.f32.mrb[0].mxu0
      %v3879 = vadd.f32 0.0, %v3878
      %v3880 = vpop.f32.mrb[0].mxu0
      %3881 = vmatprep.mubr.f32.mxu0 0.0
      %3882 = vmatmul.mubr.f32.gmra.mrb[0].mxu0 %v3752
      %v3883 = vpop.f32.mrb[0].mxu0
      %v3884 = vadd.f32 0.0, %v3883
      %v3885 = vpop.f32.mrb[0].mxu0
      %3886 = vmatprep.mubr.f32.mxu0 0.0
      %3887 = vmatmul.mubr.f32.gmra.mrb[0].mxu0 %v3754
      %v3888 = vpop.f32.mrb[0].mxu0
      %v3889 = vadd.f32 0.0, %v3888
      %v3890 = vpop.f32.mrb[0].mxu0
      %3891 = vmatprep.mubr.f32.mxu0 0.0
      %3892 = vmatmul.mubr.f32.gmra.mrb[0].mxu0 %v3756
      %v3893 = vpop.f32.mrb[0].mxu0
      %v3894 = vadd.f32 0.0, %v3893
      %v3895 = vpop.f32.mrb[0].mxu0
      %3896 = vmatprep.mubr.f32.mxu0 0.0
      %3897 = vmatmul.mubr.f32.gmra.mrb[0].mxu0 %v3758
      %v3898 = vpop.f32.mrb[0].mxu0
      %v3899 = vadd.f32 0.0, %v3898
      %v3900 = vpop.f32.mrb[0].mxu0
      %3901 = vmatprep.mubr.f32.mxu0 0.0
      %3902 = vmatmul.mubr.f32.gmra.mrb[0].mxu0 %v3760
      %v3903 = vpop.f32.mrb[0].mxu0
      %v3904 = vadd.f32 0.0, %v3903
      %v3905 = vpop.f32.mrb[0].mxu0
      %3906 = vdwg.mxu0
      %v3907 = vadd.f32 %v3610, %v3829
      %v3908 = vadd.f32 %v3615, %v3834
      %v3909 = vadd.f32 %v3620, %v3839
      %v3910 = vadd.f32 %v3625, %v3844
      %v3911 = vadd.f32 %v3630, %v3849
      %v3912 = vadd.f32 %v3635, %v3854
      %v3913 = vadd.f32 %v3640, %v3859
      %v3914 = vadd.f32 %v3645, %v3864
      %v3915 = vadd.f32 %v3650, %v3869
      %v3916 = vadd.f32 %v3655, %v3874
      %v3917 = vadd.f32 %v3660, %v3879
      %v3918 = vadd.f32 %v3665, %v3884
      %v3919 = vadd.f32 %v3670, %v3889
      %v3920 = vadd.f32 %v3675, %v3894
      %v3921 = vadd.f32 %v3680, %v3899
      %v3922 = vadd.f32 %v3685, %v3904
      %s3923 = scalar_lea.vmem %s4, 24
      %v3924 = vld [vmem:[%s3923] sm:$0xff]
      %v3926 = vsel %vm3333, %v3260, 0
      %v3929 = vsel %vm3333, %v3261, 0
      %3931 = vmatprep.subr.mxu0 0.0
      %3932 = vmatpush1.msra.mxu0 %v3924
      %3933 = vmatprep.subr.mxu0 0.0
      %3934 = vmatpush1.msra.mxu0 0.0
      %3935 = vmatprep.subr.mxu0 0.0
      %3936 = vmatpush1.msra.mxu0 0.0
      %3937 = vmatprep.subr.mxu0 0.0
      %3938 = vmatpush1.msra.mxu0 0.0
      %3939 = vmatprep.subr.mxu0 0.0
      %3940 = vmatpush1.msra.mxu0 0.0
      %3941 = vmatprep.subr.mxu0 0.0
      %3942 = vmatpush1.msra.mxu0 0.0
      %3943 = vmatprep.subr.mxu0 0.0
      %3944 = vmatpush1.msra.mxu0 0.0
      %3945 = vmatprep.subr.mxu0 0.0
      %3946 = vmatpush1.msra.mxu0 0.0
      %3947 = vmatprep.subr.mxu0 0.0
      %3948 = vmatpush1.msra.mxu0 0.0
      %3949 = vmatprep.subr.mxu0 0.0
      %3950 = vmatpush1.msra.mxu0 0.0
      %3951 = vmatprep.subr.mxu0 0.0
      %3952 = vmatpush1.msra.mxu0 0.0
      %3953 = vmatprep.subr.mxu0 0.0
      %3954 = vmatpush1.msra.mxu0 0.0
      %3955 = vmatprep.subr.mxu0 0.0
      %3956 = vmatpush1.msra.mxu0 0.0
      %3957 = vmatprep.subr.mxu0 0.0
      %3958 = vmatpush1.msra.mxu0 0.0
      %3959 = vmatprep.subr.mxu0 0.0
      %3960 = vmatpush1.msra.mxu0 0.0
      %3961 = vmatprep.subr.mxu0 0.0
      %3962 = vmatpush1.msra.mxu0 0.0
      %3963 = vmatprep.subr.mxu0 0.0
      %3964 = vmatpush1.msra.mxu0 0.0
      %3965 = vmatprep.subr.mxu0 0.0
      %3966 = vmatpush1.msra.mxu0 0.0
      %3967 = vmatprep.subr.mxu0 0.0
      %3968 = vmatpush1.msra.mxu0 0.0
      %3969 = vmatprep.subr.mxu0 0.0
      %3970 = vmatpush1.msra.mxu0 0.0
      %3971 = vmatprep.subr.mxu0 0.0
      %3972 = vmatpush1.msra.mxu0 0.0
      %3973 = vmatprep.subr.mxu0 0.0
      %3974 = vmatpush1.msra.mxu0 0.0
      %3975 = vmatprep.subr.mxu0 0.0
      %3976 = vmatpush1.msra.mxu0 0.0
      %3977 = vmatprep.subr.mxu0 0.0
      %3978 = vmatpush1.msra.mxu0 0.0
      %3979 = vmatprep.subr.mxu0 0.0
      %3980 = vmatpush1.msra.mxu0 0.0
      %3981 = vmatprep.subr.mxu0 0.0
      %3982 = vmatpush1.msra.mxu0 0.0
      %3983 = vmatprep.subr.mxu0 0.0
      %3984 = vmatpush1.msra.mxu0 0.0
      %3985 = vmatprep.subr.mxu0 0.0
      %3986 = vmatpush1.msra.mxu0 0.0
      %3987 = vmatprep.subr.mxu0 0.0
      %3988 = vmatpush1.msra.mxu0 0.0
      %3989 = vmatprep.subr.mxu0 0.0
      %3990 = vmatpush1.msra.mxu0 0.0
      %3991 = vmatprep.subr.mxu0 0.0
      %3992 = vmatpush1.msra.mxu0 0.0
      %3993 = vmatprep.subr.mxu0 0.0
      %3994 = vmatpush1.msra.mxu0 0.0
      %3995 = vmatprep.mubr.f32.mxu0 0.0
      %3996 = vmatmul.mubr.f32.gmra.mrb[0].mxu0 %v3515
      %v3997 = vpop.f32.mrb[0].mxu0
      %v3998 = vadd.f32 0.0, %v3997
      %v3999 = vpop.f32.mrb[0].mxu0
      %4000 = vmatprep.mubr.f32.mxu0 0.0
      %4001 = vmatmul.mubr.f32.gmra.mrb[0].mxu0 %v3517
      %v4002 = vpop.f32.mrb[0].mxu0
      %v4003 = vadd.f32 0.0, %v4002
      %v4004 = vpop.f32.mrb[0].mxu0
      %4005 = vmatprep.mubr.f32.mxu0 0.0
      %4006 = vmatmul.mubr.f32.gmra.mrb[0].mxu0 %v3519
      %v4007 = vpop.f32.mrb[0].mxu0
      %v4008 = vadd.f32 0.0, %v4007
      %v4009 = vpop.f32.mrb[0].mxu0
      %4010 = vmatprep.mubr.f32.mxu0 0.0
      %4011 = vmatmul.mubr.f32.gmra.mrb[0].mxu0 %v3521
      %v4012 = vpop.f32.mrb[0].mxu0
      %v4013 = vadd.f32 0.0, %v4012
      %v4014 = vpop.f32.mrb[0].mxu0
      %4015 = vmatprep.mubr.f32.mxu0 0.0
      %4016 = vmatmul.mubr.f32.gmra.mrb[0].mxu0 %v3523
      %v4017 = vpop.f32.mrb[0].mxu0
      %v4018 = vadd.f32 0.0, %v4017
      %v4019 = vpop.f32.mrb[0].mxu0
      %4020 = vmatprep.mubr.f32.mxu0 0.0
      %4021 = vmatmul.mubr.f32.gmra.mrb[0].mxu0 %v3525
      %v4022 = vpop.f32.mrb[0].mxu0
      %v4023 = vadd.f32 0.0, %v4022
      %v4024 = vpop.f32.mrb[0].mxu0
      %4025 = vmatprep.mubr.f32.mxu0 0.0
      %4026 = vmatmul.mubr.f32.gmra.mrb[0].mxu0 %v3527
      %v4027 = vpop.f32.mrb[0].mxu0
      %v4028 = vadd.f32 0.0, %v4027
      %v4029 = vpop.f32.mrb[0].mxu0
      %4030 = vmatprep.mubr.f32.mxu0 0.0
      %4031 = vmatmul.mubr.f32.gmra.mrb[0].mxu0 %v3529
      %v4032 = vpop.f32.mrb[0].mxu0
      %v4033 = vadd.f32 0.0, %v4032
      %v4034 = vpop.f32.mrb[0].mxu0
      %4035 = vmatprep.mubr.f32.mxu0 0.0
      %4036 = vmatmul.mubr.f32.gmra.mrb[0].mxu0 %v3531
      %v4037 = vpop.f32.mrb[0].mxu0
      %v4038 = vadd.f32 0.0, %v4037
      %v4039 = vpop.f32.mrb[0].mxu0
      %4040 = vmatprep.mubr.f32.mxu0 0.0
      %4041 = vmatmul.mubr.f32.gmra.mrb[0].mxu0 %v3533
      %v4042 = vpop.f32.mrb[0].mxu0
      %v4043 = vadd.f32 0.0, %v4042
      %v4044 = vpop.f32.mrb[0].mxu0
      %4045 = vmatprep.mubr.f32.mxu0 0.0
      %4046 = vmatmul.mubr.f32.gmra.mrb[0].mxu0 %v3535
      %v4047 = vpop.f32.mrb[0].mxu0
      %v4048 = vadd.f32 0.0, %v4047
      %v4049 = vpop.f32.mrb[0].mxu0
      %4050 = vmatprep.mubr.f32.mxu0 0.0
      %4051 = vmatmul.mubr.f32.gmra.mrb[0].mxu0 %v3537
      %v4052 = vpop.f32.mrb[0].mxu0
      %v4053 = vadd.f32 0.0, %v4052
      %v4054 = vpop.f32.mrb[0].mxu0
      %4055 = vmatprep.mubr.f32.mxu0 0.0
      %4056 = vmatmul.mubr.f32.gmra.mrb[0].mxu0 %v3539
      %v4057 = vpop.f32.mrb[0].mxu0
      %v4058 = vadd.f32 0.0, %v4057
      %v4059 = vpop.f32.mrb[0].mxu0
      %4060 = vmatprep.mubr.f32.mxu0 0.0
      %4061 = vmatmul.mubr.f32.gmra.mrb[0].mxu0 %v3541
      %v4062 = vpop.f32.mrb[0].mxu0
      %v4063 = vadd.f32 0.0, %v4062
      %v4064 = vpop.f32.mrb[0].mxu0
      %4065 = vmatprep.mubr.f32.mxu0 0.0
      %4066 = vmatmul.mubr.f32.gmra.mrb[0].mxu0 %v3926
      %v4067 = vpop.f32.mrb[0].mxu0
      %v4068 = vadd.f32 0.0, %v4067
      %v4069 = vpop.f32.mrb[0].mxu0
      %4070 = vmatprep.mubr.f32.mxu0 0.0
      %4071 = vmatmul.mubr.f32.gmra.mrb[0].mxu0 %v3929
      %v4072 = vpop.f32.mrb[0].mxu0
      %v4073 = vadd.f32 0.0, %v4072
      %v4074 = vpop.f32.mrb[0].mxu0
      %4075 = vdwg.mxu0
      %v4076 = vadd.f32 %v3907, %v3998
      %v4077 = vadd.f32 %v3908, %v4003
      %v4078 = vadd.f32 %v3909, %v4008
      %v4079 = vadd.f32 %v3910, %v4013
      %v4080 = vadd.f32 %v3911, %v4018
      %v4081 = vadd.f32 %v3912, %v4023
      %v4082 = vadd.f32 %v3913, %v4028
      %v4083 = vadd.f32 %v3914, %v4033
      %v4084 = vadd.f32 %v3915, %v4038
      %v4085 = vadd.f32 %v3916, %v4043
      %v4086 = vadd.f32 %v3917, %v4048
      %v4087 = vadd.f32 %v3918, %v4053
      %v4088 = vadd.f32 %v3919, %v4058
      %v4089 = vadd.f32 %v3920, %v4063
      %v4090 = vadd.f32 %v3921, %v4068
      %v4091 = vadd.f32 %v3922, %v4073
      %v4093 = vrot.slane %v3260, 1
      %v4094 = vrot.slane %v3261, 1
      %v4095 = vsel %vm471, %v4093, %v4094
      %v4096 = vrot.slane %v3262, 1
      %v4097 = vsel %vm471, %v4094, %v4096
      %s4098 = scalar_lea.vmem %s4, 32
      %v4099 = vld [vmem:[%s4098] sm:$0xff]
      %v4100 = vsel %vm3333, %v4095, 0
      %v4102 = vsel %vm3333, %v4097, 0
      %4104 = vmatprep.subr.mxu0 0.0
      %4105 = vmatpush1.msra.mxu0 %v4099
      %4106 = vmatprep.subr.mxu0 0.0
      %4107 = vmatpush1.msra.mxu0 0.0
      %4108 = vmatprep.subr.mxu0 0.0
      %4109 = vmatpush1.msra.mxu0 0.0
      %4110 = vmatprep.subr.mxu0 0.0
      %4111 = vmatpush1.msra.mxu0 0.0
      %4112 = vmatprep.subr.mxu0 0.0
      %4113 = vmatpush1.msra.mxu0 0.0
      %4114 = vmatprep.subr.mxu0 0.0
      %4115 = vmatpush1.msra.mxu0 0.0
      %4116 = vmatprep.subr.mxu0 0.0
      %4117 = vmatpush1.msra.mxu0 0.0
      %4118 = vmatprep.subr.mxu0 0.0
      %4119 = vmatpush1.msra.mxu0 0.0
      %4120 = vmatprep.subr.mxu0 0.0
      %4121 = vmatpush1.msra.mxu0 0.0
      %4122 = vmatprep.subr.mxu0 0.0
      %4123 = vmatpush1.msra.mxu0 0.0
      %4124 = vmatprep.subr.mxu0 0.0
      %4125 = vmatpush1.msra.mxu0 0.0
      %4126 = vmatprep.subr.mxu0 0.0
      %4127 = vmatpush1.msra.mxu0 0.0
      %4128 = vmatprep.subr.mxu0 0.0
      %4129 = vmatpush1.msra.mxu0 0.0
      %4130 = vmatprep.subr.mxu0 0.0
      %4131 = vmatpush1.msra.mxu0 0.0
      %4132 = vmatprep.subr.mxu0 0.0
      %4133 = vmatpush1.msra.mxu0 0.0
      %4134 = vmatprep.subr.mxu0 0.0
      %4135 = vmatpush1.msra.mxu0 0.0
      %4136 = vmatprep.subr.mxu0 0.0
      %4137 = vmatpush1.msra.mxu0 0.0
      %4138 = vmatprep.subr.mxu0 0.0
      %4139 = vmatpush1.msra.mxu0 0.0
      %4140 = vmatprep.subr.mxu0 0.0
      %4141 = vmatpush1.msra.mxu0 0.0
      %4142 = vmatprep.subr.mxu0 0.0
      %4143 = vmatpush1.msra.mxu0 0.0
      %4144 = vmatprep.subr.mxu0 0.0
      %4145 = vmatpush1.msra.mxu0 0.0
      %4146 = vmatprep.subr.mxu0 0.0
      %4147 = vmatpush1.msra.mxu0 0.0
      %4148 = vmatprep.subr.mxu0 0.0
      %4149 = vmatpush1.msra.mxu0 0.0
      %4150 = vmatprep.subr.mxu0 0.0
      %4151 = vmatpush1.msra.mxu0 0.0
      %4152 = vmatprep.subr.mxu0 0.0
      %4153 = vmatpush1.msra.mxu0 0.0
      %4154 = vmatprep.subr.mxu0 0.0
      %4155 = vmatpush1.msra.mxu0 0.0
      %4156 = vmatprep.subr.mxu0 0.0
      %4157 = vmatpush1.msra.mxu0 0.0
      %4158 = vmatprep.subr.mxu0 0.0
      %4159 = vmatpush1.msra.mxu0 0.0
      %4160 = vmatprep.subr.mxu0 0.0
      %4161 = vmatpush1.msra.mxu0 0.0
      %4162 = vmatprep.subr.mxu0 0.0
      %4163 = vmatpush1.msra.mxu0 0.0
      %4164 = vmatprep.subr.mxu0 0.0
      %4165 = vmatpush1.msra.mxu0 0.0
      %4166 = vmatprep.subr.mxu0 0.0
      %4167 = vmatpush1.msra.mxu0 0.0
      %4168 = vmatprep.mubr.f32.mxu0 0.0
      %4169 = vmatmul.mubr.f32.gmra.mrb[0].mxu0 %v3338
      %v4170 = vpop.f32.mrb[0].mxu0
      %v4171 = vadd.f32 0.0, %v4170
      %v4172 = vpop.f32.mrb[0].mxu0
      %4173 = vmatprep.mubr.f32.mxu0 0.0
      %4174 = vmatmul.mubr.f32.gmra.mrb[0].mxu0 %v3340
      %v4175 = vpop.f32.mrb[0].mxu0
      %v4176 = vadd.f32 0.0, %v4175
      %v4177 = vpop.f32.mrb[0].mxu0
      %4178 = vmatprep.mubr.f32.mxu0 0.0
      %4179 = vmatmul.mubr.f32.gmra.mrb[0].mxu0 %v3342
      %v4180 = vpop.f32.mrb[0].mxu0
      %v4181 = vadd.f32 0.0, %v4180
      %v4182 = vpop.f32.mrb[0].mxu0
      %4183 = vmatprep.mubr.f32.mxu0 0.0
      %4184 = vmatmul.mubr.f32.gmra.mrb[0].mxu0 %v3344
      %v4185 = vpop.f32.mrb[0].mxu0
      %v4186 = vadd.f32 0.0, %v4185
      %v4187 = vpop.f32.mrb[0].mxu0
      %4188 = vmatprep.mubr.f32.mxu0 0.0
      %4189 = vmatmul.mubr.f32.gmra.mrb[0].mxu0 %v3346
      %v4190 = vpop.f32.mrb[0].mxu0
      %v4191 = vadd.f32 0.0, %v4190
      %v4192 = vpop.f32.mrb[0].mxu0
      %4193 = vmatprep.mubr.f32.mxu0 0.0
      %4194 = vmatmul.mubr.f32.gmra.mrb[0].mxu0 %v3348
      %v4195 = vpop.f32.mrb[0].mxu0
      %v4196 = vadd.f32 0.0, %v4195
      %v4197 = vpop.f32.mrb[0].mxu0
      %4198 = vmatprep.mubr.f32.mxu0 0.0
      %4199 = vmatmul.mubr.f32.gmra.mrb[0].mxu0 %v3350
      %v4200 = vpop.f32.mrb[0].mxu0
      %v4201 = vadd.f32 0.0, %v4200
      %v4202 = vpop.f32.mrb[0].mxu0
      %4203 = vmatprep.mubr.f32.mxu0 0.0
      %4204 = vmatmul.mubr.f32.gmra.mrb[0].mxu0 %v3352
      %v4205 = vpop.f32.mrb[0].mxu0
      %v4206 = vadd.f32 0.0, %v4205
      %v4207 = vpop.f32.mrb[0].mxu0
      %4208 = vmatprep.mubr.f32.mxu0 0.0
      %4209 = vmatmul.mubr.f32.gmra.mrb[0].mxu0 %v3354
      %v4210 = vpop.f32.mrb[0].mxu0
      %v4211 = vadd.f32 0.0, %v4210
      %v4212 = vpop.f32.mrb[0].mxu0
      %4213 = vmatprep.mubr.f32.mxu0 0.0
      %4214 = vmatmul.mubr.f32.gmra.mrb[0].mxu0 %v3356
      %v4215 = vpop.f32.mrb[0].mxu0
      %v4216 = vadd.f32 0.0, %v4215
      %v4217 = vpop.f32.mrb[0].mxu0
      %4218 = vmatprep.mubr.f32.mxu0 0.0
      %4219 = vmatmul.mubr.f32.gmra.mrb[0].mxu0 %v3358
      %v4220 = vpop.f32.mrb[0].mxu0
      %v4221 = vadd.f32 0.0, %v4220
      %v4222 = vpop.f32.mrb[0].mxu0
      %4223 = vmatprep.mubr.f32.mxu0 0.0
      %4224 = vmatmul.mubr.f32.gmra.mrb[0].mxu0 %v3360
      %v4225 = vpop.f32.mrb[0].mxu0
      %v4226 = vadd.f32 0.0, %v4225
      %v4227 = vpop.f32.mrb[0].mxu0
      %4228 = vmatprep.mubr.f32.mxu0 0.0
      %4229 = vmatmul.mubr.f32.gmra.mrb[0].mxu0 %v3362
      %v4230 = vpop.f32.mrb[0].mxu0
      %v4231 = vadd.f32 0.0, %v4230
      %v4232 = vpop.f32.mrb[0].mxu0
      %4233 = vmatprep.mubr.f32.mxu0 0.0
      %4234 = vmatmul.mubr.f32.gmra.mrb[0].mxu0 %v3364
      %v4235 = vpop.f32.mrb[0].mxu0
      %v4236 = vadd.f32 0.0, %v4235
      %v4237 = vpop.f32.mrb[0].mxu0
      %4238 = vmatprep.mubr.f32.mxu0 0.0
      %4239 = vmatmul.mubr.f32.gmra.mrb[0].mxu0 %v4100
      %v4240 = vpop.f32.mrb[0].mxu0
      %v4241 = vadd.f32 0.0, %v4240
      %v4242 = vpop.f32.mrb[0].mxu0
      %4243 = vmatprep.mubr.f32.mxu0 0.0
      %4244 = vmatmul.mubr.f32.gmra.mrb[0].mxu0 %v4102
      %v4245 = vpop.f32.mrb[0].mxu0
      %v4246 = vadd.f32 0.0, %v4245
      %v4247 = vpop.f32.mrb[0].mxu0
      %4248 = vdwg.mxu0
      %v4249 = vadd.f32 %v4076, %v4171
      %v4250 = vadd.f32 %v4077, %v4176
      %v4251 = vadd.f32 %v4078, %v4181
      %v4252 = vadd.f32 %v4079, %v4186
      %v4253 = vadd.f32 %v4080, %v4191
      %v4254 = vadd.f32 %v4081, %v4196
      %v4255 = vadd.f32 %v4082, %v4201
      %v4256 = vadd.f32 %v4083, %v4206
      %v4257 = vadd.f32 %v4084, %v4211
      %v4258 = vadd.f32 %v4085, %v4216
      %v4259 = vadd.f32 %v4086, %v4221
      %v4260 = vadd.f32 %v4087, %v4226
      %v4261 = vadd.f32 %v4088, %v4231
      %v4262 = vadd.f32 %v4089, %v4236
      %v4263 = vadd.f32 %v4090, %v4241
      %v4264 = vadd.f32 %v4091, %v4246
      %v4265 = vrot.slane %v3260, 2
      %v4266 = vrot.slane %v3261, 2
      %v4267 = vsel %vm1102, %v4265, %v4266
      %v4268 = vrot.slane %v3262, 2
      %v4269 = vsel %vm1102, %v4266, %v4268
      %s4270 = scalar_lea.vmem %s4, 40
      %v4271 = vld [vmem:[%s4270] sm:$0xff]
      %v4272 = vsel %vm3333, %v4267, 0
      %v4274 = vsel %vm3333, %v4269, 0
      %4276 = vmatprep.subr.mxu0 0.0
      %4277 = vmatpush1.msra.mxu0 %v4271
      %4278 = vmatprep.subr.mxu0 0.0
      %4279 = vmatpush1.msra.mxu0 0.0
      %4280 = vmatprep.subr.mxu0 0.0
      %4281 = vmatpush1.msra.mxu0 0.0
      %4282 = vmatprep.subr.mxu0 0.0
      %4283 = vmatpush1.msra.mxu0 0.0
      %4284 = vmatprep.subr.mxu0 0.0
      %4285 = vmatpush1.msra.mxu0 0.0
      %4286 = vmatprep.subr.mxu0 0.0
      %4287 = vmatpush1.msra.mxu0 0.0
      %4288 = vmatprep.subr.mxu0 0.0
      %4289 = vmatpush1.msra.mxu0 0.0
      %4290 = vmatprep.subr.mxu0 0.0
      %4291 = vmatpush1.msra.mxu0 0.0
      %4292 = vmatprep.subr.mxu0 0.0
      %4293 = vmatpush1.msra.mxu0 0.0
      %4294 = vmatprep.subr.mxu0 0.0
      %4295 = vmatpush1.msra.mxu0 0.0
      %4296 = vmatprep.subr.mxu0 0.0
      %4297 = vmatpush1.msra.mxu0 0.0
      %4298 = vmatprep.subr.mxu0 0.0
      %4299 = vmatpush1.msra.mxu0 0.0
      %4300 = vmatprep.subr.mxu0 0.0
      %4301 = vmatpush1.msra.mxu0 0.0
      %4302 = vmatprep.subr.mxu0 0.0
      %4303 = vmatpush1.msra.mxu0 0.0
      %4304 = vmatprep.subr.mxu0 0.0
      %4305 = vmatpush1.msra.mxu0 0.0
      %4306 = vmatprep.subr.mxu0 0.0
      %4307 = vmatpush1.msra.mxu0 0.0
      %4308 = vmatprep.subr.mxu0 0.0
      %4309 = vmatpush1.msra.mxu0 0.0
      %4310 = vmatprep.subr.mxu0 0.0
      %4311 = vmatpush1.msra.mxu0 0.0
      %4312 = vmatprep.subr.mxu0 0.0
      %4313 = vmatpush1.msra.mxu0 0.0
      %4314 = vmatprep.subr.mxu0 0.0
      %4315 = vmatpush1.msra.mxu0 0.0
      %4316 = vmatprep.subr.mxu0 0.0
      %4317 = vmatpush1.msra.mxu0 0.0
      %4318 = vmatprep.subr.mxu0 0.0
      %4319 = vmatpush1.msra.mxu0 0.0
      %4320 = vmatprep.subr.mxu0 0.0
      %4321 = vmatpush1.msra.mxu0 0.0
      %4322 = vmatprep.subr.mxu0 0.0
      %4323 = vmatpush1.msra.mxu0 0.0
      %4324 = vmatprep.subr.mxu0 0.0
      %4325 = vmatpush1.msra.mxu0 0.0
      %4326 = vmatprep.subr.mxu0 0.0
      %4327 = vmatpush1.msra.mxu0 0.0
      %4328 = vmatprep.subr.mxu0 0.0
      %4329 = vmatpush1.msra.mxu0 0.0
      %4330 = vmatprep.subr.mxu0 0.0
      %4331 = vmatpush1.msra.mxu0 0.0
      %4332 = vmatprep.subr.mxu0 0.0
      %4333 = vmatpush1.msra.mxu0 0.0
      %4334 = vmatprep.subr.mxu0 0.0
      %4335 = vmatpush1.msra.mxu0 0.0
      %4336 = vmatprep.subr.mxu0 0.0
      %4337 = vmatpush1.msra.mxu0 0.0
      %4338 = vmatprep.subr.mxu0 0.0
      %4339 = vmatpush1.msra.mxu0 0.0
      %4340 = vmatprep.mubr.f32.mxu0 0.0
      %4341 = vmatmul.mubr.f32.gmra.mrb[0].mxu0 %v3734
      %v4342 = vpop.f32.mrb[0].mxu0
      %v4343 = vadd.f32 0.0, %v4342
      %v4344 = vpop.f32.mrb[0].mxu0
      %4345 = vmatprep.mubr.f32.mxu0 0.0
      %4346 = vmatmul.mubr.f32.gmra.mrb[0].mxu0 %v3736
      %v4347 = vpop.f32.mrb[0].mxu0
      %v4348 = vadd.f32 0.0, %v4347
      %v4349 = vpop.f32.mrb[0].mxu0
      %4350 = vmatprep.mubr.f32.mxu0 0.0
      %4351 = vmatmul.mubr.f32.gmra.mrb[0].mxu0 %v3738
      %v4352 = vpop.f32.mrb[0].mxu0
      %v4353 = vadd.f32 0.0, %v4352
      %v4354 = vpop.f32.mrb[0].mxu0
      %4355 = vmatprep.mubr.f32.mxu0 0.0
      %4356 = vmatmul.mubr.f32.gmra.mrb[0].mxu0 %v3740
      %v4357 = vpop.f32.mrb[0].mxu0
      %v4358 = vadd.f32 0.0, %v4357
      %v4359 = vpop.f32.mrb[0].mxu0
      %4360 = vmatprep.mubr.f32.mxu0 0.0
      %4361 = vmatmul.mubr.f32.gmra.mrb[0].mxu0 %v3742
      %v4362 = vpop.f32.mrb[0].mxu0
      %v4363 = vadd.f32 0.0, %v4362
      %v4364 = vpop.f32.mrb[0].mxu0
      %4365 = vmatprep.mubr.f32.mxu0 0.0
      %4366 = vmatmul.mubr.f32.gmra.mrb[0].mxu0 %v3744
      %v4367 = vpop.f32.mrb[0].mxu0
      %v4368 = vadd.f32 0.0, %v4367
      %v4369 = vpop.f32.mrb[0].mxu0
      %4370 = vmatprep.mubr.f32.mxu0 0.0
      %4371 = vmatmul.mubr.f32.gmra.mrb[0].mxu0 %v3746
      %v4372 = vpop.f32.mrb[0].mxu0
      %v4373 = vadd.f32 0.0, %v4372
      %v4374 = vpop.f32.mrb[0].mxu0
      %4375 = vmatprep.mubr.f32.mxu0 0.0
      %4376 = vmatmul.mubr.f32.gmra.mrb[0].mxu0 %v3748
      %v4377 = vpop.f32.mrb[0].mxu0
      %v4378 = vadd.f32 0.0, %v4377
      %v4379 = vpop.f32.mrb[0].mxu0
      %4380 = vmatprep.mubr.f32.mxu0 0.0
      %4381 = vmatmul.mubr.f32.gmra.mrb[0].mxu0 %v3750
      %v4382 = vpop.f32.mrb[0].mxu0
      %v4383 = vadd.f32 0.0, %v4382
      %v4384 = vpop.f32.mrb[0].mxu0
      %4385 = vmatprep.mubr.f32.mxu0 0.0
      %4386 = vmatmul.mubr.f32.gmra.mrb[0].mxu0 %v3752
      %v4387 = vpop.f32.mrb[0].mxu0
      %v4388 = vadd.f32 0.0, %v4387
      %v4389 = vpop.f32.mrb[0].mxu0
      %4390 = vmatprep.mubr.f32.mxu0 0.0
      %4391 = vmatmul.mubr.f32.gmra.mrb[0].mxu0 %v3754
      %v4392 = vpop.f32.mrb[0].mxu0
      %v4393 = vadd.f32 0.0, %v4392
      %v4394 = vpop.f32.mrb[0].mxu0
      %4395 = vmatprep.mubr.f32.mxu0 0.0
      %4396 = vmatmul.mubr.f32.gmra.mrb[0].mxu0 %v3756
      %v4397 = vpop.f32.mrb[0].mxu0
      %v4398 = vadd.f32 0.0, %v4397
      %v4399 = vpop.f32.mrb[0].mxu0
      %4400 = vmatprep.mubr.f32.mxu0 0.0
      %4401 = vmatmul.mubr.f32.gmra.mrb[0].mxu0 %v3758
      %v4402 = vpop.f32.mrb[0].mxu0
      %v4403 = vadd.f32 0.0, %v4402
      %v4404 = vpop.f32.mrb[0].mxu0
      %4405 = vmatprep.mubr.f32.mxu0 0.0
      %4406 = vmatmul.mubr.f32.gmra.mrb[0].mxu0 %v3760
      %v4407 = vpop.f32.mrb[0].mxu0
      %v4408 = vadd.f32 0.0, %v4407
      %v4409 = vpop.f32.mrb[0].mxu0
      %4410 = vmatprep.mubr.f32.mxu0 0.0
      %4411 = vmatmul.mubr.f32.gmra.mrb[0].mxu0 %v4272
      %v4412 = vpop.f32.mrb[0].mxu0
      %v4413 = vadd.f32 0.0, %v4412
      %v4414 = vpop.f32.mrb[0].mxu0
      %4415 = vmatprep.mubr.f32.mxu0 0.0
      %4416 = vmatmul.mubr.f32.gmra.mrb[0].mxu0 %v4274
      %v4417 = vpop.f32.mrb[0].mxu0
      %v4418 = vadd.f32 0.0, %v4417
      %v4419 = vpop.f32.mrb[0].mxu0
      %4420 = vdwg.mxu0
      %v4421 = vadd.f32 %v4249, %v4343
      %v4422 = vadd.f32 %v4250, %v4348
      %v4423 = vadd.f32 %v4251, %v4353
      %v4424 = vadd.f32 %v4252, %v4358
      %v4425 = vadd.f32 %v4253, %v4363
      %v4426 = vadd.f32 %v4254, %v4368
      %v4427 = vadd.f32 %v4255, %v4373
      %v4428 = vadd.f32 %v4256, %v4378
      %v4429 = vadd.f32 %v4257, %v4383
      %v4430 = vadd.f32 %v4258, %v4388
      %v4431 = vadd.f32 %v4259, %v4393
      %v4432 = vadd.f32 %v4260, %v4398
      %v4433 = vadd.f32 %v4261, %v4403
      %v4434 = vadd.f32 %v4262, %v4408
      %v4435 = vadd.f32 %v4263, %v4413
      %v4436 = vadd.f32 %v4264, %v4418
      %s4437 = scalar_lea.vmem %s4, 48
      %v4438 = vld [vmem:[%s4437] sm:$0xff]
      %v4440 = vsel %vm3333, %v3263, 0
      %v4443 = vsel %vm3333, %v3264, 0
      %4445 = vmatprep.subr.mxu0 0.0
      %4446 = vmatpush1.msra.mxu0 %v4438
      %4447 = vmatprep.subr.mxu0 0.0
      %4448 = vmatpush1.msra.mxu0 0.0
      %4449 = vmatprep.subr.mxu0 0.0
      %4450 = vmatpush1.msra.mxu0 0.0
      %4451 = vmatprep.subr.mxu0 0.0
      %4452 = vmatpush1.msra.mxu0 0.0
      %4453 = vmatprep.subr.mxu0 0.0
      %4454 = vmatpush1.msra.mxu0 0.0
      %4455 = vmatprep.subr.mxu0 0.0
      %4456 = vmatpush1.msra.mxu0 0.0
      %4457 = vmatprep.subr.mxu0 0.0
      %4458 = vmatpush1.msra.mxu0 0.0
      %4459 = vmatprep.subr.mxu0 0.0
      %4460 = vmatpush1.msra.mxu0 0.0
      %4461 = vmatprep.subr.mxu0 0.0
      %4462 = vmatpush1.msra.mxu0 0.0
      %4463 = vmatprep.subr.mxu0 0.0
      %4464 = vmatpush1.msra.mxu0 0.0
      %4465 = vmatprep.subr.mxu0 0.0
      %4466 = vmatpush1.msra.mxu0 0.0
      %4467 = vmatprep.subr.mxu0 0.0
      %4468 = vmatpush1.msra.mxu0 0.0
      %4469 = vmatprep.subr.mxu0 0.0
      %4470 = vmatpush1.msra.mxu0 0.0
      %4471 = vmatprep.subr.mxu0 0.0
      %4472 = vmatpush1.msra.mxu0 0.0
      %4473 = vmatprep.subr.mxu0 0.0
      %4474 = vmatpush1.msra.mxu0 0.0
      %4475 = vmatprep.subr.mxu0 0.0
      %4476 = vmatpush1.msra.mxu0 0.0
      %4477 = vmatprep.subr.mxu0 0.0
      %4478 = vmatpush1.msra.mxu0 0.0
      %4479 = vmatprep.subr.mxu0 0.0
      %4480 = vmatpush1.msra.mxu0 0.0
      %4481 = vmatprep.subr.mxu0 0.0
      %4482 = vmatpush1.msra.mxu0 0.0
      %4483 = vmatprep.subr.mxu0 0.0
      %4484 = vmatpush1.msra.mxu0 0.0
      %4485 = vmatprep.subr.mxu0 0.0
      %4486 = vmatpush1.msra.mxu0 0.0
      %4487 = vmatprep.subr.mxu0 0.0
      %4488 = vmatpush1.msra.mxu0 0.0
      %4489 = vmatprep.subr.mxu0 0.0
      %4490 = vmatpush1.msra.mxu0 0.0
      %4491 = vmatprep.subr.mxu0 0.0
      %4492 = vmatpush1.msra.mxu0 0.0
      %4493 = vmatprep.subr.mxu0 0.0
      %4494 = vmatpush1.msra.mxu0 0.0
      %4495 = vmatprep.subr.mxu0 0.0
      %4496 = vmatpush1.msra.mxu0 0.0
      %4497 = vmatprep.subr.mxu0 0.0
      %4498 = vmatpush1.msra.mxu0 0.0
      %4499 = vmatprep.subr.mxu0 0.0
      %4500 = vmatpush1.msra.mxu0 0.0
      %4501 = vmatprep.subr.mxu0 0.0
      %4502 = vmatpush1.msra.mxu0 0.0
      %4503 = vmatprep.subr.mxu0 0.0
      %4504 = vmatpush1.msra.mxu0 0.0
      %4505 = vmatprep.subr.mxu0 0.0
      %4506 = vmatpush1.msra.mxu0 0.0
      %4507 = vmatprep.subr.mxu0 0.0
      %4508 = vmatpush1.msra.mxu0 0.0
      %4509 = vmatprep.mubr.f32.mxu0 0.0
      %4510 = vmatmul.mubr.f32.gmra.mrb[0].mxu0 %v3519
      %v4511 = vpop.f32.mrb[0].mxu0
      %v4512 = vadd.f32 0.0, %v4511
      %v4513 = vpop.f32.mrb[0].mxu0
      %4514 = vmatprep.mubr.f32.mxu0 0.0
      %4515 = vmatmul.mubr.f32.gmra.mrb[0].mxu0 %v3521
      %v4516 = vpop.f32.mrb[0].mxu0
      %v4517 = vadd.f32 0.0, %v4516
      %v4518 = vpop.f32.mrb[0].mxu0
      %4519 = vmatprep.mubr.f32.mxu0 0.0
      %4520 = vmatmul.mubr.f32.gmra.mrb[0].mxu0 %v3523
      %v4521 = vpop.f32.mrb[0].mxu0
      %v4522 = vadd.f32 0.0, %v4521
      %v4523 = vpop.f32.mrb[0].mxu0
      %4524 = vmatprep.mubr.f32.mxu0 0.0
      %4525 = vmatmul.mubr.f32.gmra.mrb[0].mxu0 %v3525
      %v4526 = vpop.f32.mrb[0].mxu0
      %v4527 = vadd.f32 0.0, %v4526
      %v4528 = vpop.f32.mrb[0].mxu0
      %4529 = vmatprep.mubr.f32.mxu0 0.0
      %4530 = vmatmul.mubr.f32.gmra.mrb[0].mxu0 %v3527
      %v4531 = vpop.f32.mrb[0].mxu0
      %v4532 = vadd.f32 0.0, %v4531
      %v4533 = vpop.f32.mrb[0].mxu0
      %4534 = vmatprep.mubr.f32.mxu0 0.0
      %4535 = vmatmul.mubr.f32.gmra.mrb[0].mxu0 %v3529
      %v4536 = vpop.f32.mrb[0].mxu0
      %v4537 = vadd.f32 0.0, %v4536
      %v4538 = vpop.f32.mrb[0].mxu0
      %4539 = vmatprep.mubr.f32.mxu0 0.0
      %4540 = vmatmul.mubr.f32.gmra.mrb[0].mxu0 %v3531
      %v4541 = vpop.f32.mrb[0].mxu0
      %v4542 = vadd.f32 0.0, %v4541
      %v4543 = vpop.f32.mrb[0].mxu0
      %4544 = vmatprep.mubr.f32.mxu0 0.0
      %4545 = vmatmul.mubr.f32.gmra.mrb[0].mxu0 %v3533
      %v4546 = vpop.f32.mrb[0].mxu0
      %v4547 = vadd.f32 0.0, %v4546
      %v4548 = vpop.f32.mrb[0].mxu0
      %4549 = vmatprep.mubr.f32.mxu0 0.0
      %4550 = vmatmul.mubr.f32.gmra.mrb[0].mxu0 %v3535
      %v4551 = vpop.f32.mrb[0].mxu0
      %v4552 = vadd.f32 0.0, %v4551
      %v4553 = vpop.f32.mrb[0].mxu0
      %4554 = vmatprep.mubr.f32.mxu0 0.0
      %4555 = vmatmul.mubr.f32.gmra.mrb[0].mxu0 %v3537
      %v4556 = vpop.f32.mrb[0].mxu0
      %v4557 = vadd.f32 0.0, %v4556
      %v4558 = vpop.f32.mrb[0].mxu0
      %4559 = vmatprep.mubr.f32.mxu0 0.0
      %4560 = vmatmul.mubr.f32.gmra.mrb[0].mxu0 %v3539
      %v4561 = vpop.f32.mrb[0].mxu0
      %v4562 = vadd.f32 0.0, %v4561
      %v4563 = vpop.f32.mrb[0].mxu0
      %4564 = vmatprep.mubr.f32.mxu0 0.0
      %4565 = vmatmul.mubr.f32.gmra.mrb[0].mxu0 %v3541
      %v4566 = vpop.f32.mrb[0].mxu0
      %v4567 = vadd.f32 0.0, %v4566
      %v4568 = vpop.f32.mrb[0].mxu0
      %4569 = vmatprep.mubr.f32.mxu0 0.0
      %4570 = vmatmul.mubr.f32.gmra.mrb[0].mxu0 %v3926
      %v4571 = vpop.f32.mrb[0].mxu0
      %v4572 = vadd.f32 0.0, %v4571
      %v4573 = vpop.f32.mrb[0].mxu0
      %4574 = vmatprep.mubr.f32.mxu0 0.0
      %4575 = vmatmul.mubr.f32.gmra.mrb[0].mxu0 %v3929
      %v4576 = vpop.f32.mrb[0].mxu0
      %v4577 = vadd.f32 0.0, %v4576
      %v4578 = vpop.f32.mrb[0].mxu0
      %4579 = vmatprep.mubr.f32.mxu0 0.0
      %4580 = vmatmul.mubr.f32.gmra.mrb[0].mxu0 %v4440
      %v4581 = vpop.f32.mrb[0].mxu0
      %v4582 = vadd.f32 0.0, %v4581
      %v4583 = vpop.f32.mrb[0].mxu0
      %4584 = vmatprep.mubr.f32.mxu0 0.0
      %4585 = vmatmul.mubr.f32.gmra.mrb[0].mxu0 %v4443
      %v4586 = vpop.f32.mrb[0].mxu0
      %v4587 = vadd.f32 0.0, %v4586
      %v4588 = vpop.f32.mrb[0].mxu0
      %4589 = vdwg.mxu0
      %v4590 = vadd.f32 %v4421, %v4512
      %v4591 = vadd.f32 %v4422, %v4517
      %v4592 = vadd.f32 %v4423, %v4522
      %v4593 = vadd.f32 %v4424, %v4527
      %v4594 = vadd.f32 %v4425, %v4532
      %v4595 = vadd.f32 %v4426, %v4537
      %v4596 = vadd.f32 %v4427, %v4542
      %v4597 = vadd.f32 %v4428, %v4547
      %v4598 = vadd.f32 %v4429, %v4552
      %v4599 = vadd.f32 %v4430, %v4557
      %v4600 = vadd.f32 %v4431, %v4562
      %v4601 = vadd.f32 %v4432, %v4567
      %v4602 = vadd.f32 %v4433, %v4572
      %v4603 = vadd.f32 %v4434, %v4577
      %v4604 = vadd.f32 %v4435, %v4582
      %v4605 = vadd.f32 %v4436, %v4587
      %v4607 = vrot.slane %v3263, 1
      %v4608 = vrot.slane %v3264, 1
      %v4609 = vsel %vm471, %v4607, %v4608
      %v4610 = vrot.slane %v3265, 1
      %v4611 = vsel %vm471, %v4608, %v4610
      %s4612 = scalar_lea.vmem %s4, 56
      %v4613 = vld [vmem:[%s4612] sm:$0xff]
      %v4614 = vsel %vm3333, %v4609, 0
      %v4616 = vsel %vm3333, %v4611, 0
      %4618 = vmatprep.subr.mxu0 0.0
      %4619 = vmatpush1.msra.mxu0 %v4613
      %4620 = vmatprep.subr.mxu0 0.0
      %4621 = vmatpush1.msra.mxu0 0.0
      %4622 = vmatprep.subr.mxu0 0.0
      %4623 = vmatpush1.msra.mxu0 0.0
      %4624 = vmatprep.subr.mxu0 0.0
      %4625 = vmatpush1.msra.mxu0 0.0
      %4626 = vmatprep.subr.mxu0 0.0
      %4627 = vmatpush1.msra.mxu0 0.0
      %4628 = vmatprep.subr.mxu0 0.0
      %4629 = vmatpush1.msra.mxu0 0.0
      %4630 = vmatprep.subr.mxu0 0.0
      %4631 = vmatpush1.msra.mxu0 0.0
      %4632 = vmatprep.subr.mxu0 0.0
      %4633 = vmatpush1.msra.mxu0 0.0
      %4634 = vmatprep.subr.mxu0 0.0
      %4635 = vmatpush1.msra.mxu0 0.0
      %4636 = vmatprep.subr.mxu0 0.0
      %4637 = vmatpush1.msra.mxu0 0.0
      %4638 = vmatprep.subr.mxu0 0.0
      %4639 = vmatpush1.msra.mxu0 0.0
      %4640 = vmatprep.subr.mxu0 0.0
      %4641 = vmatpush1.msra.mxu0 0.0
      %4642 = vmatprep.subr.mxu0 0.0
      %4643 = vmatpush1.msra.mxu0 0.0
      %4644 = vmatprep.subr.mxu0 0.0
      %4645 = vmatpush1.msra.mxu0 0.0
      %4646 = vmatprep.subr.mxu0 0.0
      %4647 = vmatpush1.msra.mxu0 0.0
      %4648 = vmatprep.subr.mxu0 0.0
      %4649 = vmatpush1.msra.mxu0 0.0
      %4650 = vmatprep.subr.mxu0 0.0
      %4651 = vmatpush1.msra.mxu0 0.0
      %4652 = vmatprep.subr.mxu0 0.0
      %4653 = vmatpush1.msra.mxu0 0.0
      %4654 = vmatprep.subr.mxu0 0.0
      %4655 = vmatpush1.msra.mxu0 0.0
      %4656 = vmatprep.subr.mxu0 0.0
      %4657 = vmatpush1.msra.mxu0 0.0
      %4658 = vmatprep.subr.mxu0 0.0
      %4659 = vmatpush1.msra.mxu0 0.0
      %4660 = vmatprep.subr.mxu0 0.0
      %4661 = vmatpush1.msra.mxu0 0.0
      %4662 = vmatprep.subr.mxu0 0.0
      %4663 = vmatpush1.msra.mxu0 0.0
      %4664 = vmatprep.subr.mxu0 0.0
      %4665 = vmatpush1.msra.mxu0 0.0
      %4666 = vmatprep.subr.mxu0 0.0
      %4667 = vmatpush1.msra.mxu0 0.0
      %4668 = vmatprep.subr.mxu0 0.0
      %4669 = vmatpush1.msra.mxu0 0.0
      %4670 = vmatprep.subr.mxu0 0.0
      %4671 = vmatpush1.msra.mxu0 0.0
      %4672 = vmatprep.subr.mxu0 0.0
      %4673 = vmatpush1.msra.mxu0 0.0
      %4674 = vmatprep.subr.mxu0 0.0
      %4675 = vmatpush1.msra.mxu0 0.0
      %4676 = vmatprep.subr.mxu0 0.0
      %4677 = vmatpush1.msra.mxu0 0.0
      %4678 = vmatprep.subr.mxu0 0.0
      %4679 = vmatpush1.msra.mxu0 0.0
      %4680 = vmatprep.subr.mxu0 0.0
      %4681 = vmatpush1.msra.mxu0 0.0
      %4682 = vmatprep.mubr.f32.mxu0 0.0
      %4683 = vmatmul.mubr.f32.gmra.mrb[0].mxu0 %v3342
      %v4684 = vpop.f32.mrb[0].mxu0
      %v4685 = vadd.f32 0.0, %v4684
      %v4686 = vpop.f32.mrb[0].mxu0
      %4687 = vmatprep.mubr.f32.mxu0 0.0
      %4688 = vmatmul.mubr.f32.gmra.mrb[0].mxu0 %v3344
      %v4689 = vpop.f32.mrb[0].mxu0
      %v4690 = vadd.f32 0.0, %v4689
      %v4691 = vpop.f32.mrb[0].mxu0
      %4692 = vmatprep.mubr.f32.mxu0 0.0
      %4693 = vmatmul.mubr.f32.gmra.mrb[0].mxu0 %v3346
      %v4694 = vpop.f32.mrb[0].mxu0
      %v4695 = vadd.f32 0.0, %v4694
      %v4696 = vpop.f32.mrb[0].mxu0
      %4697 = vmatprep.mubr.f32.mxu0 0.0
      %4698 = vmatmul.mubr.f32.gmra.mrb[0].mxu0 %v3348
      %v4699 = vpop.f32.mrb[0].mxu0
      %v4700 = vadd.f32 0.0, %v4699
      %v4701 = vpop.f32.mrb[0].mxu0
      %4702 = vmatprep.mubr.f32.mxu0 0.0
      %4703 = vmatmul.mubr.f32.gmra.mrb[0].mxu0 %v3350
      %v4704 = vpop.f32.mrb[0].mxu0
      %v4705 = vadd.f32 0.0, %v4704
      %v4706 = vpop.f32.mrb[0].mxu0
      %4707 = vmatprep.mubr.f32.mxu0 0.0
      %4708 = vmatmul.mubr.f32.gmra.mrb[0].mxu0 %v3352
      %v4709 = vpop.f32.mrb[0].mxu0
      %v4710 = vadd.f32 0.0, %v4709
      %v4711 = vpop.f32.mrb[0].mxu0
      %4712 = vmatprep.mubr.f32.mxu0 0.0
      %4713 = vmatmul.mubr.f32.gmra.mrb[0].mxu0 %v3354
      %v4714 = vpop.f32.mrb[0].mxu0
      %v4715 = vadd.f32 0.0, %v4714
      %v4716 = vpop.f32.mrb[0].mxu0
      %4717 = vmatprep.mubr.f32.mxu0 0.0
      %4718 = vmatmul.mubr.f32.gmra.mrb[0].mxu0 %v3356
      %v4719 = vpop.f32.mrb[0].mxu0
      %v4720 = vadd.f32 0.0, %v4719
      %v4721 = vpop.f32.mrb[0].mxu0
      %4722 = vmatprep.mubr.f32.mxu0 0.0
      %4723 = vmatmul.mubr.f32.gmra.mrb[0].mxu0 %v3358
      %v4724 = vpop.f32.mrb[0].mxu0
      %v4725 = vadd.f32 0.0, %v4724
      %v4726 = vpop.f32.mrb[0].mxu0
      %4727 = vmatprep.mubr.f32.mxu0 0.0
      %4728 = vmatmul.mubr.f32.gmra.mrb[0].mxu0 %v3360
      %v4729 = vpop.f32.mrb[0].mxu0
      %v4730 = vadd.f32 0.0, %v4729
      %v4731 = vpop.f32.mrb[0].mxu0
      %4732 = vmatprep.mubr.f32.mxu0 0.0
      %4733 = vmatmul.mubr.f32.gmra.mrb[0].mxu0 %v3362
      %v4734 = vpop.f32.mrb[0].mxu0
      %v4735 = vadd.f32 0.0, %v4734
      %v4736 = vpop.f32.mrb[0].mxu0
      %4737 = vmatprep.mubr.f32.mxu0 0.0
      %4738 = vmatmul.mubr.f32.gmra.mrb[0].mxu0 %v3364
      %v4739 = vpop.f32.mrb[0].mxu0
      %v4740 = vadd.f32 0.0, %v4739
      %v4741 = vpop.f32.mrb[0].mxu0
      %4742 = vmatprep.mubr.f32.mxu0 0.0
      %4743 = vmatmul.mubr.f32.gmra.mrb[0].mxu0 %v4100
      %v4744 = vpop.f32.mrb[0].mxu0
      %v4745 = vadd.f32 0.0, %v4744
      %v4746 = vpop.f32.mrb[0].mxu0
      %4747 = vmatprep.mubr.f32.mxu0 0.0
      %4748 = vmatmul.mubr.f32.gmra.mrb[0].mxu0 %v4102
      %v4749 = vpop.f32.mrb[0].mxu0
      %v4750 = vadd.f32 0.0, %v4749
      %v4751 = vpop.f32.mrb[0].mxu0
      %4752 = vmatprep.mubr.f32.mxu0 0.0
      %4753 = vmatmul.mubr.f32.gmra.mrb[0].mxu0 %v4614
      %v4754 = vpop.f32.mrb[0].mxu0
      %v4755 = vadd.f32 0.0, %v4754
      %v4756 = vpop.f32.mrb[0].mxu0
      %4757 = vmatprep.mubr.f32.mxu0 0.0
      %4758 = vmatmul.mubr.f32.gmra.mrb[0].mxu0 %v4616
      %v4759 = vpop.f32.mrb[0].mxu0
      %v4760 = vadd.f32 0.0, %v4759
      %v4761 = vpop.f32.mrb[0].mxu0
      %4762 = vdwg.mxu0
      %v4763 = vadd.f32 %v4590, %v4685
      %v4764 = vadd.f32 %v4591, %v4690
      %v4765 = vadd.f32 %v4592, %v4695
      %v4766 = vadd.f32 %v4593, %v4700
      %v4767 = vadd.f32 %v4594, %v4705
      %v4768 = vadd.f32 %v4595, %v4710
      %v4769 = vadd.f32 %v4596, %v4715
      %v4770 = vadd.f32 %v4597, %v4720
      %v4771 = vadd.f32 %v4598, %v4725
      %v4772 = vadd.f32 %v4599, %v4730
      %v4773 = vadd.f32 %v4600, %v4735
      %v4774 = vadd.f32 %v4601, %v4740
      %v4775 = vadd.f32 %v4602, %v4745
      %v4776 = vadd.f32 %v4603, %v4750
      %v4777 = vadd.f32 %v4604, %v4755
      %v4778 = vadd.f32 %v4605, %v4760
      %v4779 = vrot.slane %v3263, 2
      %v4780 = vrot.slane %v3264, 2
      %v4781 = vsel %vm1102, %v4779, %v4780
      %v4782 = vrot.slane %v3265, 2
      %v4783 = vsel %vm1102, %v4780, %v4782
      %s4784 = scalar_lea.vmem %s4, 64
      %v4785 = vld [vmem:[%s4784] sm:$0xff]
      %v4786 = vsel %vm3333, %v4781, 0
      %v4788 = vsel %vm3333, %v4783, 0
      %4790 = vmatprep.subr.mxu0 0.0
      %4791 = vmatpush1.msra.mxu0 %v4785
      %4792 = vmatprep.subr.mxu0 0.0
      %4793 = vmatpush1.msra.mxu0 0.0
      %4794 = vmatprep.subr.mxu0 0.0
      %4795 = vmatpush1.msra.mxu0 0.0
      %4796 = vmatprep.subr.mxu0 0.0
      %4797 = vmatpush1.msra.mxu0 0.0
      %4798 = vmatprep.subr.mxu0 0.0
      %4799 = vmatpush1.msra.mxu0 0.0
      %4800 = vmatprep.subr.mxu0 0.0
      %4801 = vmatpush1.msra.mxu0 0.0
      %4802 = vmatprep.subr.mxu0 0.0
      %4803 = vmatpush1.msra.mxu0 0.0
      %4804 = vmatprep.subr.mxu0 0.0
      %4805 = vmatpush1.msra.mxu0 0.0
      %4806 = vmatprep.subr.mxu0 0.0
      %4807 = vmatpush1.msra.mxu0 0.0
      %4808 = vmatprep.subr.mxu0 0.0
      %4809 = vmatpush1.msra.mxu0 0.0
      %4810 = vmatprep.subr.mxu0 0.0
      %4811 = vmatpush1.msra.mxu0 0.0
      %4812 = vmatprep.subr.mxu0 0.0
      %4813 = vmatpush1.msra.mxu0 0.0
      %4814 = vmatprep.subr.mxu0 0.0
      %4815 = vmatpush1.msra.mxu0 0.0
      %4816 = vmatprep.subr.mxu0 0.0
      %4817 = vmatpush1.msra.mxu0 0.0
      %4818 = vmatprep.subr.mxu0 0.0
      %4819 = vmatpush1.msra.mxu0 0.0
      %4820 = vmatprep.subr.mxu0 0.0
      %4821 = vmatpush1.msra.mxu0 0.0
      %4822 = vmatprep.subr.mxu0 0.0
      %4823 = vmatpush1.msra.mxu0 0.0
      %4824 = vmatprep.subr.mxu0 0.0
      %4825 = vmatpush1.msra.mxu0 0.0
      %4826 = vmatprep.subr.mxu0 0.0
      %4827 = vmatpush1.msra.mxu0 0.0
      %4828 = vmatprep.subr.mxu0 0.0
      %4829 = vmatpush1.msra.mxu0 0.0
      %4830 = vmatprep.subr.mxu0 0.0
      %4831 = vmatpush1.msra.mxu0 0.0
      %4832 = vmatprep.subr.mxu0 0.0
      %4833 = vmatpush1.msra.mxu0 0.0
      %4834 = vmatprep.subr.mxu0 0.0
      %4835 = vmatpush1.msra.mxu0 0.0
      %4836 = vmatprep.subr.mxu0 0.0
      %4837 = vmatpush1.msra.mxu0 0.0
      %4838 = vmatprep.subr.mxu0 0.0
      %4839 = vmatpush1.msra.mxu0 0.0
      %4840 = vmatprep.subr.mxu0 0.0
      %4841 = vmatpush1.msra.mxu0 0.0
      %4842 = vmatprep.subr.mxu0 0.0
      %4843 = vmatpush1.msra.mxu0 0.0
      %4844 = vmatprep.subr.mxu0 0.0
      %4845 = vmatpush1.msra.mxu0 0.0
      %4846 = vmatprep.subr.mxu0 0.0
      %4847 = vmatpush1.msra.mxu0 0.0
      %4848 = vmatprep.subr.mxu0 0.0
      %4849 = vmatpush1.msra.mxu0 0.0
      %4850 = vmatprep.subr.mxu0 0.0
      %4851 = vmatpush1.msra.mxu0 0.0
      %4852 = vmatprep.subr.mxu0 0.0
      %4853 = vmatpush1.msra.mxu0 0.0
      %4854 = vmatprep.mubr.f32.mxu0 0.0
      %4855 = vmatmul.mubr.f32.gmra.mrb[0].mxu0 %v3738
      %v4856 = vpop.f32.mrb[0].mxu0
      %v4857 = vadd.f32 0.0, %v4856
      %v4858 = vpop.f32.mrb[0].mxu0
      %4859 = vmatprep.mubr.f32.mxu0 0.0
      %4860 = vmatmul.mubr.f32.gmra.mrb[0].mxu0 %v3740
      %v4861 = vpop.f32.mrb[0].mxu0
      %v4862 = vadd.f32 0.0, %v4861
      %v4863 = vpop.f32.mrb[0].mxu0
      %4864 = vmatprep.mubr.f32.mxu0 0.0
      %4865 = vmatmul.mubr.f32.gmra.mrb[0].mxu0 %v3742
      %v4866 = vpop.f32.mrb[0].mxu0
      %v4867 = vadd.f32 0.0, %v4866
      %v4868 = vpop.f32.mrb[0].mxu0
      %4869 = vmatprep.mubr.f32.mxu0 0.0
      %4870 = vmatmul.mubr.f32.gmra.mrb[0].mxu0 %v3744
      %v4871 = vpop.f32.mrb[0].mxu0
      %v4872 = vadd.f32 0.0, %v4871
      %v4873 = vpop.f32.mrb[0].mxu0
      %4874 = vmatprep.mubr.f32.mxu0 0.0
      %4875 = vmatmul.mubr.f32.gmra.mrb[0].mxu0 %v3746
      %v4876 = vpop.f32.mrb[0].mxu0
      %v4877 = vadd.f32 0.0, %v4876
      %v4878 = vpop.f32.mrb[0].mxu0
      %4879 = vmatprep.mubr.f32.mxu0 0.0
      %4880 = vmatmul.mubr.f32.gmra.mrb[0].mxu0 %v3748
      %v4881 = vpop.f32.mrb[0].mxu0
      %v4882 = vadd.f32 0.0, %v4881
      %v4883 = vpop.f32.mrb[0].mxu0
      %4884 = vmatprep.mubr.f32.mxu0 0.0
      %4885 = vmatmul.mubr.f32.gmra.mrb[0].mxu0 %v3750
      %v4886 = vpop.f32.mrb[0].mxu0
      %v4887 = vadd.f32 0.0, %v4886
      %v4888 = vpop.f32.mrb[0].mxu0
      %4889 = vmatprep.mubr.f32.mxu0 0.0
      %4890 = vmatmul.mubr.f32.gmra.mrb[0].mxu0 %v3752
      %v4891 = vpop.f32.mrb[0].mxu0
      %v4892 = vadd.f32 0.0, %v4891
      %v4893 = vpop.f32.mrb[0].mxu0
      %4894 = vmatprep.mubr.f32.mxu0 0.0
      %4895 = vmatmul.mubr.f32.gmra.mrb[0].mxu0 %v3754
      %v4896 = vpop.f32.mrb[0].mxu0
      %v4897 = vadd.f32 0.0, %v4896
      %v4898 = vpop.f32.mrb[0].mxu0
      %4899 = vmatprep.mubr.f32.mxu0 0.0
      %4900 = vmatmul.mubr.f32.gmra.mrb[0].mxu0 %v3756
      %v4901 = vpop.f32.mrb[0].mxu0
      %v4902 = vadd.f32 0.0, %v4901
      %v4903 = vpop.f32.mrb[0].mxu0
      %4904 = vmatprep.mubr.f32.mxu0 0.0
      %4905 = vmatmul.mubr.f32.gmra.mrb[0].mxu0 %v3758
      %v4906 = vpop.f32.mrb[0].mxu0
      %v4907 = vadd.f32 0.0, %v4906
      %v4908 = vpop.f32.mrb[0].mxu0
      %4909 = vmatprep.mubr.f32.mxu0 0.0
      %4910 = vmatmul.mubr.f32.gmra.mrb[0].mxu0 %v3760
      %v4911 = vpop.f32.mrb[0].mxu0
      %v4912 = vadd.f32 0.0, %v4911
      %v4913 = vpop.f32.mrb[0].mxu0
      %4914 = vmatprep.mubr.f32.mxu0 0.0
      %4915 = vmatmul.mubr.f32.gmra.mrb[0].mxu0 %v4272
      %v4916 = vpop.f32.mrb[0].mxu0
      %v4917 = vadd.f32 0.0, %v4916
      %v4918 = vpop.f32.mrb[0].mxu0
      %4919 = vmatprep.mubr.f32.mxu0 0.0
      %4920 = vmatmul.mubr.f32.gmra.mrb[0].mxu0 %v4274
      %v4921 = vpop.f32.mrb[0].mxu0
      %v4922 = vadd.f32 0.0, %v4921
      %v4923 = vpop.f32.mrb[0].mxu0
      %4924 = vmatprep.mubr.f32.mxu0 0.0
      %4925 = vmatmul.mubr.f32.gmra.mrb[0].mxu0 %v4786
      %v4926 = vpop.f32.mrb[0].mxu0
      %v4927 = vadd.f32 0.0, %v4926
      %v4928 = vpop.f32.mrb[0].mxu0
      %4929 = vmatprep.mubr.f32.mxu0 0.0
      %4930 = vmatmul.mubr.f32.gmra.mrb[0].mxu0 %v4788
      %v4931 = vpop.f32.mrb[0].mxu0
      %v4932 = vadd.f32 0.0, %v4931
      %v4933 = vpop.f32.mrb[0].mxu0
      %4934 = vdwg.mxu0
      %v4935 = vadd.f32 %v4763, %v4857
      %v4936 = vadd.f32 %v4764, %v4862
      %v4937 = vadd.f32 %v4765, %v4867
      %v4938 = vadd.f32 %v4766, %v4872
      %v4939 = vadd.f32 %v4767, %v4877
      %v4940 = vadd.f32 %v4768, %v4882
      %v4941 = vadd.f32 %v4769, %v4887
      %v4942 = vadd.f32 %v4770, %v4892
      %v4943 = vadd.f32 %v4771, %v4897
      %v4944 = vadd.f32 %v4772, %v4902
      %v4945 = vadd.f32 %v4773, %v4907
      %v4946 = vadd.f32 %v4774, %v4912
      %v4947 = vadd.f32 %v4775, %v4917
      %v4948 = vadd.f32 %v4776, %v4922
      %v4949 = vadd.f32 %v4777, %v4927
      %v4950 = vadd.f32 %v4778, %v4932
      %v4951 = vld [vmem:[%s5] sm:$0x1]
      %v4953 = vlaneseq
      %v4954 = vshrl.u32 %v4953, 7
      %v4955 = vsub.s32 0, %v4954
      %v4956 = vrot.slane %v4951, %v4955
      %v4958 = vadd.f32 %v4935, %v4956
      %v4959 = vadd.f32 %v4936, %v4956
      %v4960 = vadd.f32 %v4937, %v4956
      %v4961 = vadd.f32 %v4938, %v4956
      %v4962 = vadd.f32 %v4939, %v4956
      %v4963 = vadd.f32 %v4940, %v4956
      %v4964 = vadd.f32 %v4941, %v4956
      %v4965 = vadd.f32 %v4942, %v4956
      %v4966 = vadd.f32 %v4943, %v4956
      %v4967 = vadd.f32 %v4944, %v4956
      %v4968 = vadd.f32 %v4945, %v4956
      %v4969 = vadd.f32 %v4946, %v4956
      %v4970 = vadd.f32 %v4947, %v4956
      %v4971 = vadd.f32 %v4948, %v4956
      %v4972 = vadd.f32 %v4949, %v4956
      %v4973 = vadd.f32 %v4950, %v4956
      %v4974 = vld [vmem:[%s370] sm:$0xff]
      %v4975 = vld [vmem:[%s370 + $0x8] sm:$0xff]
      %v4976 = vld [vmem:[%s370 + $0x10] sm:$0xff]
      %v4977 = vld [vmem:[%s370 + $0x18] sm:$0xff]
      %v4978 = vld [vmem:[%s370 + $0x20] sm:$0xff]
      %v4979 = vld [vmem:[%s370 + $0x28] sm:$0xff]
      %v4980 = vld [vmem:[%s370 + $0x30] sm:$0xff]
      %v4981 = vld [vmem:[%s370 + $0x38] sm:$0xff]
      %v4982 = vld [vmem:[%s370 + $0x40] sm:$0xff]
      %v4983 = vld [vmem:[%s370 + $0x48] sm:$0xff]
      %v4984 = vld [vmem:[%s370 + $0x50] sm:$0xff]
      %v4985 = vld [vmem:[%s370 + $0x58] sm:$0xff]
      %v4986 = vld [vmem:[%s370 + $0x60] sm:$0xff]
      %v4987 = vld [vmem:[%s370 + $0x68] sm:$0xff]
      %v4988 = vld [vmem:[%s370 + $0x70] sm:$0xff]
      %v4989 = vld [vmem:[%s370 + $0x78] sm:$0xff]
      %v4990 = vld [vmem:[%s6] sm:$0xf]
      %v4991 = vld [vmem:[%s7] sm:$0x1]
      %v4993 = vlaneseq
      %v4994 = vshrl.u32 %v4993, 7
      %v4995 = vsub.s32 0, %v4994
      %v4996 = vrot.slane %v4991, %v4995
      %v4999 = vsel %vm544, %v4974, 0
      %v5002 = vsel %vm544, %v4975, 0
      %v5005 = vsel %vm544, %v4976, 0
      %v5008 = vsel %vm544, %v4977, 0
      %v5011 = vsel %vm544, %v4978, 0
      %v5014 = vsel %vm544, %v4979, 0
      %v5017 = vsel %vm544, %v4980, 0
      %v5020 = vsel %vm544, %v4981, 0
      %v5023 = vsel %vm544, %v4982, 0
      %v5026 = vsel %vm544, %v4983, 0
      %v5029 = vsel %vm544, %v4984, 0
      %v5032 = vsel %vm544, %v4985, 0
      %v5035 = vsel %vm544, %v4986, 0
      %v5038 = vsel %vm544, %v4987, 0
      %v5041 = vsel %vm544, %v4988, 0
      %v5044 = vsel %vm544, %v4989, 0
      %v5047 = vsel %vm605, %v4990, 0
      %5049 = vmatprep.subr.mxu0 0.0
      %5050 = vmatpush1.msra.mxu0 %v5047
      %5051 = vmatprep.subr.mxu0 0.0
      %5052 = vmatpush1.msra.mxu0 0.0
      %5053 = vmatprep.subr.mxu0 0.0
      %5054 = vmatpush1.msra.mxu0 0.0
      %5055 = vmatprep.subr.mxu0 0.0
      %5056 = vmatpush1.msra.mxu0 0.0
      %5057 = vmatprep.subr.mxu0 0.0
      %5058 = vmatpush1.msra.mxu0 0.0
      %5059 = vmatprep.subr.mxu0 0.0
      %5060 = vmatpush1.msra.mxu0 0.0
      %5061 = vmatprep.subr.mxu0 0.0
      %5062 = vmatpush1.msra.mxu0 0.0
      %5063 = vmatprep.subr.mxu0 0.0
      %5064 = vmatpush1.msra.mxu0 0.0
      %5065 = vmatprep.subr.mxu0 0.0
      %5066 = vmatpush1.msra.mxu0 0.0
      %5067 = vmatprep.subr.mxu0 0.0
      %5068 = vmatpush1.msra.mxu0 0.0
      %5069 = vmatprep.subr.mxu0 0.0
      %5070 = vmatpush1.msra.mxu0 0.0
      %5071 = vmatprep.subr.mxu0 0.0
      %5072 = vmatpush1.msra.mxu0 0.0
      %5073 = vmatprep.subr.mxu0 0.0
      %5074 = vmatpush1.msra.mxu0 0.0
      %5075 = vmatprep.subr.mxu0 0.0
      %5076 = vmatpush1.msra.mxu0 0.0
      %5077 = vmatprep.subr.mxu0 0.0
      %5078 = vmatpush1.msra.mxu0 0.0
      %5079 = vmatprep.subr.mxu0 0.0
      %5080 = vmatpush1.msra.mxu0 0.0
      %5081 = vmatprep.subr.mxu0 0.0
      %5082 = vmatpush1.msra.mxu0 0.0
      %5083 = vmatprep.subr.mxu0 0.0
      %5084 = vmatpush1.msra.mxu0 0.0
      %5085 = vmatprep.subr.mxu0 0.0
      %5086 = vmatpush1.msra.mxu0 0.0
      %5087 = vmatprep.subr.mxu0 0.0
      %5088 = vmatpush1.msra.mxu0 0.0
      %5089 = vmatprep.subr.mxu0 0.0
      %5090 = vmatpush1.msra.mxu0 0.0
      %5091 = vmatprep.subr.mxu0 0.0
      %5092 = vmatpush1.msra.mxu0 0.0
      %5093 = vmatprep.subr.mxu0 0.0
      %5094 = vmatpush1.msra.mxu0 0.0
      %5095 = vmatprep.subr.mxu0 0.0
      %5096 = vmatpush1.msra.mxu0 0.0
      %5097 = vmatprep.subr.mxu0 0.0
      %5098 = vmatpush1.msra.mxu0 0.0
      %5099 = vmatprep.subr.mxu0 0.0
      %5100 = vmatpush1.msra.mxu0 0.0
      %5101 = vmatprep.subr.mxu0 0.0
      %5102 = vmatpush1.msra.mxu0 0.0
      %5103 = vmatprep.subr.mxu0 0.0
      %5104 = vmatpush1.msra.mxu0 0.0
      %5105 = vmatprep.subr.mxu0 0.0
      %5106 = vmatpush1.msra.mxu0 0.0
      %5107 = vmatprep.subr.mxu0 0.0
      %5108 = vmatpush1.msra.mxu0 0.0
      %5109 = vmatprep.subr.mxu0 0.0
      %5110 = vmatpush1.msra.mxu0 0.0
      %5111 = vmatprep.subr.mxu0 0.0
      %5112 = vmatpush1.msra.mxu0 0.0
      %5113 = vmatprep.mubr.f32.mxu0 0.0
      %5114 = vmatmul.mubr.f32.gmra.mrb[0].mxu0 %v4999
      %v5115 = vpop.f32.mrb[0].mxu0
      %v5116 = vadd.f32 %v4996, %v5115
      %v5117 = vpop.f32.mrb[0].mxu0
      %5118 = vmatprep.mubr.f32.mxu0 0.0
      %5119 = vmatmul.mubr.f32.gmra.mrb[0].mxu0 %v5002
      %v5120 = vpop.f32.mrb[0].mxu0
      %v5121 = vadd.f32 %v4996, %v5120
      %v5122 = vpop.f32.mrb[0].mxu0
      %5123 = vmatprep.mubr.f32.mxu0 0.0
      %5124 = vmatmul.mubr.f32.gmra.mrb[0].mxu0 %v5005
      %v5125 = vpop.f32.mrb[0].mxu0
      %v5126 = vadd.f32 %v4996, %v5125
      %v5127 = vpop.f32.mrb[0].mxu0
      %5128 = vmatprep.mubr.f32.mxu0 0.0
      %5129 = vmatmul.mubr.f32.gmra.mrb[0].mxu0 %v5008
      %v5130 = vpop.f32.mrb[0].mxu0
      %v5131 = vadd.f32 %v4996, %v5130
      %v5132 = vpop.f32.mrb[0].mxu0
      %5133 = vmatprep.mubr.f32.mxu0 0.0
      %5134 = vmatmul.mubr.f32.gmra.mrb[0].mxu0 %v5011
      %v5135 = vpop.f32.mrb[0].mxu0
      %v5136 = vadd.f32 %v4996, %v5135
      %v5137 = vpop.f32.mrb[0].mxu0
      %5138 = vmatprep.mubr.f32.mxu0 0.0
      %5139 = vmatmul.mubr.f32.gmra.mrb[0].mxu0 %v5014
      %v5140 = vpop.f32.mrb[0].mxu0
      %v5141 = vadd.f32 %v4996, %v5140
      %v5142 = vpop.f32.mrb[0].mxu0
      %5143 = vmatprep.mubr.f32.mxu0 0.0
      %5144 = vmatmul.mubr.f32.gmra.mrb[0].mxu0 %v5017
      %v5145 = vpop.f32.mrb[0].mxu0
      %v5146 = vadd.f32 %v4996, %v5145
      %v5147 = vpop.f32.mrb[0].mxu0
      %5148 = vmatprep.mubr.f32.mxu0 0.0
      %5149 = vmatmul.mubr.f32.gmra.mrb[0].mxu0 %v5020
      %v5150 = vpop.f32.mrb[0].mxu0
      %v5151 = vadd.f32 %v4996, %v5150
      %v5152 = vpop.f32.mrb[0].mxu0
      %5153 = vmatprep.mubr.f32.mxu0 0.0
      %5154 = vmatmul.mubr.f32.gmra.mrb[0].mxu0 %v5023
      %v5155 = vpop.f32.mrb[0].mxu0
      %v5156 = vadd.f32 %v4996, %v5155
      %v5157 = vpop.f32.mrb[0].mxu0
      %5158 = vmatprep.mubr.f32.mxu0 0.0
      %5159 = vmatmul.mubr.f32.gmra.mrb[0].mxu0 %v5026
      %v5160 = vpop.f32.mrb[0].mxu0
      %v5161 = vadd.f32 %v4996, %v5160
      %v5162 = vpop.f32.mrb[0].mxu0
      %5163 = vmatprep.mubr.f32.mxu0 0.0
      %5164 = vmatmul.mubr.f32.gmra.mrb[0].mxu0 %v5029
      %v5165 = vpop.f32.mrb[0].mxu0
      %v5166 = vadd.f32 %v4996, %v5165
      %v5167 = vpop.f32.mrb[0].mxu0
      %5168 = vmatprep.mubr.f32.mxu0 0.0
      %5169 = vmatmul.mubr.f32.gmra.mrb[0].mxu0 %v5032
      %v5170 = vpop.f32.mrb[0].mxu0
      %v5171 = vadd.f32 %v4996, %v5170
      %v5172 = vpop.f32.mrb[0].mxu0
      %5173 = vmatprep.mubr.f32.mxu0 0.0
      %5174 = vmatmul.mubr.f32.gmra.mrb[0].mxu0 %v5035
      %v5175 = vpop.f32.mrb[0].mxu0
      %v5176 = vadd.f32 %v4996, %v5175
      %v5177 = vpop.f32.mrb[0].mxu0
      %5178 = vmatprep.mubr.f32.mxu0 0.0
      %5179 = vmatmul.mubr.f32.gmra.mrb[0].mxu0 %v5038
      %v5180 = vpop.f32.mrb[0].mxu0
      %v5181 = vadd.f32 %v4996, %v5180
      %v5182 = vpop.f32.mrb[0].mxu0
      %5183 = vmatprep.mubr.f32.mxu0 0.0
      %5184 = vmatmul.mubr.f32.gmra.mrb[0].mxu0 %v5041
      %v5185 = vpop.f32.mrb[0].mxu0
      %v5186 = vadd.f32 %v4996, %v5185
      %v5187 = vpop.f32.mrb[0].mxu0
      %5188 = vmatprep.mubr.f32.mxu0 0.0
      %5189 = vmatmul.mubr.f32.gmra.mrb[0].mxu0 %v5044
      %v5190 = vpop.f32.mrb[0].mxu0
      %v5191 = vadd.f32 %v4996, %v5190
      %v5192 = vpop.f32.mrb[0].mxu0
      %5193 = vdwg.mxu0
      %v5194 = vadd.f32 %v4958, %v5116
      %v5195 = vadd.f32 %v4959, %v5121
      %v5196 = vadd.f32 %v4960, %v5126
      %v5197 = vadd.f32 %v4961, %v5131
      %v5198 = vadd.f32 %v4962, %v5136
      %v5199 = vadd.f32 %v4963, %v5141
      %v5200 = vadd.f32 %v4964, %v5146
      %v5201 = vadd.f32 %v4965, %v5151
      %v5202 = vadd.f32 %v4966, %v5156
      %v5203 = vadd.f32 %v4967, %v5161
      %v5204 = vadd.f32 %v4968, %v5166
      %v5205 = vadd.f32 %v4969, %v5171
      %v5206 = vadd.f32 %v4970, %v5176
      %v5207 = vadd.f32 %v4971, %v5181
      %v5208 = vadd.f32 %v4972, %v5186
      %v5209 = vadd.f32 %v4973, %v5191
      %v5210 = vmax.f32 %v5194, 0.0
      %v5211 = vmax.f32 %v5195, 0.0
      %v5212 = vmax.f32 %v5196, 0.0
      %v5213 = vmax.f32 %v5197, 0.0
      %v5214 = vmax.f32 %v5198, 0.0
      %v5215 = vmax.f32 %v5199, 0.0
      %v5216 = vmax.f32 %v5200, 0.0
      %v5217 = vmax.f32 %v5201, 0.0
      %v5218 = vmax.f32 %v5202, 0.0
      %v5219 = vmax.f32 %v5203, 0.0
      %v5220 = vmax.f32 %v5204, 0.0
      %v5221 = vmax.f32 %v5205, 0.0
      %v5222 = vmax.f32 %v5206, 0.0
      %v5223 = vmax.f32 %v5207, 0.0
      %v5224 = vmax.f32 %v5208, 0.0
      %v5225 = vmax.f32 %v5209, 0.0
      %5226 = vst.msk [vmem:[%s380] sm:$0xff] %vm3333, %v5210
      %5227 = vst.msk [vmem:[%s380 + $0x8] sm:$0xff] %vm3333, %v5211
      %5228 = vst.msk [vmem:[%s380 + $0x10] sm:$0xff] %vm3333, %v5212
      %5229 = vst.msk [vmem:[%s380 + $0x18] sm:$0xff] %vm3333, %v5213
      %5230 = vst.msk [vmem:[%s380 + $0x20] sm:$0xff] %vm3333, %v5214
      %5231 = vst.msk [vmem:[%s380 + $0x28] sm:$0xff] %vm3333, %v5215
      %5232 = vst.msk [vmem:[%s380 + $0x30] sm:$0xff] %vm3333, %v5216
      %5233 = vst.msk [vmem:[%s380 + $0x38] sm:$0xff] %vm3333, %v5217
      %5234 = vst.msk [vmem:[%s380 + $0x40] sm:$0xff] %vm3333, %v5218
      %5235 = vst.msk [vmem:[%s380 + $0x48] sm:$0xff] %vm3333, %v5219
      %5236 = vst.msk [vmem:[%s380 + $0x50] sm:$0xff] %vm3333, %v5220
      %5237 = vst.msk [vmem:[%s380 + $0x58] sm:$0xff] %vm3333, %v5221
      %5238 = vst.msk [vmem:[%s380 + $0x60] sm:$0xff] %vm3333, %v5222
      %5239 = vst.msk [vmem:[%s380 + $0x68] sm:$0xff] %vm3333, %v5223
      %5240 = vst.msk [vmem:[%s380 + $0x70] sm:$0xff] %vm3333, %v5224
      %5241 = vst.msk [vmem:[%s380 + $0x78] sm:$0xff] %vm3333, %v5225
      %p5242 = scmp.lt.s32.totalorder %s23, 1
      %s5243 = scalar_select %p5242, %s23, 1
      %p5244 = scmp.lt.s32.totalorder %s24, 1
      %s5245 = scalar_select %p5244, %s24, 1
      %s5246 = smul.addr %s5245, 16
      %s5247 = smul.addr %s5243, 32
      %s5248 = sadd.s32 %s5246, %s5247
      %s5249 = smul.addr %s5248, 8
      %s5250 = scalar_lea.vmem %s8, %s5249
      // Predicated region
      $region53: #{tpu_custom_call.1} parent=51 // pred_check
        %p5251 = pneg %p233
      $region54: #{tpu_custom_call.1} parent=51 // pred_check_branch
        %5253 = sbr.rel (%p5251) target = $region56
      $region55: #{tpu_custom_call.1} parent=51 // pred_region
        _
      $region56: #{tpu_custom_call.1} parent=51 // pred_fallthru
        _
    $region52: #{tpu_custom_call.1} parent=5 // pred_fallthru
      _
    %p5254 = scmp.le.s32.totalorder 2, %s14
    // Predicated region
    $region57: #{tpu_custom_call.1} parent=5 // pred_check
      %p5255 = pneg %p5254
    $region58: #{tpu_custom_call.1} parent=5 // pred_check_branch
      %5257 = sbr.rel (%p5255) target = $region60
    $region59: #{tpu_custom_call.1} parent=5 // pred_region
      %s5258 = ssub.s32 %s14, 2
      // Predicated region
      $region61: #{tpu_custom_call.1} parent=59 // pred_check
        %p5259 = pneg %p239
      $region62: #{tpu_custom_call.1} parent=59 // pred_check_branch
        %5261 = sbr.rel (%p5259) target = $region64
      $region63: #{tpu_custom_call.1} parent=59 // pred_region
        %p5262 = scmp.lt.s32.totalorder %s25, 1
        %s5263 = scalar_select %p5262, %s25, 1
        %p5264 = scmp.lt.s32.totalorder %s26, 1
        %s5265 = scalar_select %p5264, %s26, 1
        %s5266 = smul.addr %s5265, 16
        %s5267 = smul.addr %s5263, 32
        %s5268 = sadd.s32 %s5266, %s5267
        %s5269 = smul.addr %s5268, 8
        %s5270 = scalar_lea.vmem %s8, %s5269
      $region64: #{tpu_custom_call.1} parent=59 // pred_fallthru
        _
    $region60: #{tpu_custom_call.1} parent=5 // pred_fallthru
      _
  $region6: #{tpu_custom_call.1} parent=0 // loop_footer
    %s18 = sadd.s32 1, %s14
  $region7: #{tpu_custom_call.1} parent=0 // loop_footer_branch
    %13 = sbr.rel target = $region3
  $region8: #{tpu_custom_call.1} parent=0 // loop_exit
    _

</llo_original>
